<compile_context>
chip_gen: v7x
topology: tpu7x:2x2x1
jax: 0.10.0
libtpu: 0.0.40
codegen_flags: <defaults>
</compile_context>

<pallas_src>
import jax
import jax.numpy as jnp
from jax.experimental import pallas as pl
from jax.experimental.pallas import tpu as pltpu

# ---- KAN spline (FastKAN-style RBF) constants, baked at trace time ----
G = 4
GRID_MIN, GRID_MAX = -2.0, 2.0
_CENTERS = [GRID_MIN + i * (GRID_MAX - GRID_MIN) / (G - 1) for i in range(G)]
_INV_H = (G - 1) / (GRID_MAX - GRID_MIN)
_CENTERS_SCALED = [c * _INV_H for c in _CENTERS]


# ---------------------------- fused Pallas kernel ----------------------------

def _make_down_block_kernel(Hp, Wp):
    PW = Wp + 2                 # padded image width
    Mo = Hp * PW                # conv base rows evaluated (2 junk cols/row, dropped later)
    SpE = (Hp + 3) * PW         # (Hp+2)*PW padded rows + PW rows of slack for tap slices
    offsets = [dy * PW + dx for dy in range(3) for dx in range(3)]

    def kan_conv_relu(v, a0_ref, a_ref, w_ref, b_ref):
        # v: (SpE, Cx) zero-padded, spatially flattened image (f32)
        cx = v.shape[1]
        # KAN features once per pixel: [SiLU base, G Gaussian RBFs]
        sig = 1.0 / (1.0 + jnp.exp(-v))
        a0_ref[:, 0:cx] = v * sig
        t = v * _INV_H                                   # hoisted out of the G loop
        for g in range(G):
            a0_ref[:, (g + 1) * cx:(g + 2) * cx] = jnp.exp(-(t - _CENTERS_SCALED[g]) ** 2)
        # in-VMEM im2col: 9 constant-offset row slices -> one wide feature matrix
        wf = (G + 1) * cx
        for k, off in enumerate(offsets):
            a_ref[:, k * wf:(k + 1) * wf] = a0_ref[off:off + Mo, :]
        # single deep-K matmul (bf16 operands, f32 accumulation) + bias + ReLU
        acc = jnp.dot(a_ref[...].astype(jnp.bfloat16), w_ref[...],
                      preferred_element_type=jnp.float32)
        return jnp.maximum(acc + b_ref[...], 0.0)

    def kernel(xw_ref, w1_ref, b1_ref, w2_ref, b2_ref, o_ref,
               a01_ref, a1_ref, h1p_ref, a02_ref, a2_ref):
        # fused 2x2 maxpool over the 4 stacked window positions of the zero-padded input
        p0 = jnp.max(xw_ref[0], axis=0)                  # (SpE, Cin)

        h1 = kan_conv_relu(p0, a01_ref, a1_ref, w1_ref, b1_ref)          # (Mo, Cmid)

        # re-embed valid h1 rows into a zero-padded flattened frame for conv2
        row = jax.lax.broadcasted_iota(jnp.int32, (Mo, 1), 0)
        h1 = jnp.where((row % PW) < Wp, h1, 0.0)
        h1p_ref[...] = jnp.zeros_like(h1p_ref)
        h1p_ref[PW + 1:PW + 1 + Mo, :] = h1

        y = kan_conv_relu(h1p_ref[...], a02_ref, a2_ref, w2_ref, b2_ref)  # (Mo, Cout)
        res = p0[PW + 1:PW + 1 + Mo, :]                  # pooled residual (Cout == Cin)
        o_ref[0] = (y + res).astype(o_ref.dtype)

    return kernel, Mo, SpE


def _stack_kan_weights(wb, ws):
    """Stack base + spline weights to (9*(G+1)*Cin, Cout), matching the in-kernel feature
    column order [tap-major, (SiLU, phi_0..phi_{G-1}), Cin-minor]; cast to bf16."""
    K, co = wb.shape
    ci = K // 9
    wb4 = wb.reshape(9, 1, ci, co)
    ws4 = ws.reshape(G, 9, ci, co).transpose(1, 0, 2, 3)
    w = jnp.concatenate([wb4, ws4], axis=1).reshape(9 * (G + 1) * ci, co)
    return w.astype(jnp.bfloat16)


def down_block_forward(x_nchw, params):
    """DownBlock forward.  x_nchw: (N, C, H, W) like PyTorch; returns (N, C, H/2, W/2)."""
    x = jnp.transpose(x_nchw, (0, 2, 3, 1)).astype(jnp.float32)       # -> NHWC
    N, H, W, C = x.shape
    if H % 2 or W % 2:
        raise ValueError("MaxPool2d(2) path requires even H and W")
    Hp, Wp = H // 2, W // 2

    w1s = _stack_kan_weights(params["wb1"], params["ws1"])
    w2s = _stack_kan_weights(params["wb2"], params["ws2"])
    Cmid, Cout = int(w1s.shape[1]), int(w2s.shape[1])
    if Cout != C:
        raise ValueError("residual add requires out_channels == in_channels")

    kernel, Mo, SpE = _make_down_block_kernel(Hp, Wp)
    PW = Wp + 2
    Sp = (Hp + 2) * PW

    # Layout prep (pure data movement, one pass over the input):
    #   pad by the pool window so the 2x2 max directly produces the conv zero-padding ring,
    #   stack the 4 pool-window positions, flatten padded spatial, add slack rows.
    xp = jnp.pad(x, ((0, 0), (2, 2), (2, 2), (0, 0)))
    xw = jnp.stack([xp[:, dy::2, dx::2, :] for dy in (0, 1) for dx in (0, 1)], axis=1)
    xw = xw.reshape(N, 4, Sp, C)
    xw = jnp.pad(xw, ((0, 0), (0, 0), (0, SpE - Sp), (0, 0)))

    out = pl.pallas_call(
        kernel,
        out_shape=jax.ShapeDtypeStruct((N, Mo, Cout), jnp.float32),
        grid_spec=pltpu.PrefetchScalarGridSpec(
            num_scalar_prefetch=0,
            grid=(N,),
            in_specs=[
                pl.BlockSpec((1, 4, SpE, C), lambda n: (n, 0, 0, 0)),
                pl.BlockSpec(w1s.shape, lambda n: (0, 0)),
                pl.BlockSpec(params["b1"].shape, lambda n: (0, 0)),
                pl.BlockSpec(w2s.shape, lambda n: (0, 0)),
                pl.BlockSpec(params["b2"].shape, lambda n: (0, 0)),
            ],
            out_specs=pl.BlockSpec((1, Mo, Cout), lambda n: (n, 0, 0)),
            scratch_shapes=[
                pltpu.VMEM((SpE, (G + 1) * C), jnp.float32),        # conv1 per-pixel features
                pltpu.VMEM((Mo, 9 * (G + 1) * C), jnp.float32),     # conv1 im2col features
                pltpu.VMEM((SpE, Cmid), jnp.float32),               # padded h1 frame
                pltpu.VMEM((SpE, (G + 1) * Cmid), jnp.float32),     # conv2 per-pixel features
                pltpu.VMEM((Mo, 9 * (G + 1) * Cmid), jnp.float32),  # conv2 im2col features
            ]),
        compiler_params=pltpu.CompilerParams(dimension_semantics=("parallel",)),
    )(xw, w1s, params["b1"], w2s, params["b2"])

    out = out.reshape(N, Hp, PW, Cout)[:, :, :Wp, :]                  # drop junk columns
    return jnp.transpose(out, (0, 3, 1, 2))                           # -> NCHW


def init_params(key, cin, cmid, cout):
    k1, k2, k3, k4, k5, k6 = jax.random.split(key, 6)
    K1, K2 = 9 * cin, 9 * cmid
    s1, s2 = 1.0 / (K1 ** 0.5), 1.0 / (K2 ** 0.5)
    return dict(
        wb1=jax.random.normal(k1, (K1, cmid), jnp.float32) * s1,
        ws1=jax.random.normal(k2, (G, K1, cmid), jnp.float32) * (s1 / G),
        b1=jax.random.normal(k3, (1, cmid), jnp.float32) * 0.01,
        wb2=jax.random.normal(k4, (K2, cout), jnp.float32) * s2,
        ws2=jax.random.normal(k5, (G, K2, cout), jnp.float32) * (s2 / G),
        b2=jax.random.normal(k6, (1, cout), jnp.float32) * 0.01,
    )


def _reference(x_nchw, params):
    """Pure-XLA reference mirroring the module semantics (bf16 matmul operands, f32 acc)."""
    x = jnp.transpose(x_nchw, (0, 2, 3, 1)).astype(jnp.float32)
    N, H, W, C = x.shape
    pooled = jnp.max(x.reshape(N, H // 2, 2, W // 2, 2, C), axis=(2, 4))

    def kan_conv_relu(a, wb, ws, b):
        n, h, w, c = a.shape
        ap = jnp.pad(a, ((0, 0), (1, 1), (1, 1), (0, 0)))
        cols = [ap[:, dy:dy + h, dx:dx + w, :] for dy in range(3) for dx in range(3)]
        P = jnp.concatenate(cols, axis=-1).reshape(n * h * w, 9 * c)
        sig = 1.0 / (1.0 + jnp.exp(-P))
        acc = jnp.dot((P * sig).astype(jnp.bfloat16), wb.astype(jnp.bfloat16),
                      preferred_element_type=jnp.float32)
        t = P * _INV_H
        for g in range(G):
            phi = jnp.exp(-(t - _CENTERS_SCALED[g]) ** 2)
            acc = acc + jnp.dot(phi.astype(jnp.bfloat16), ws[g].astype(jnp.bfloat16),
                                preferred_element_type=jnp.float32)
        return jnp.maximum(acc + b, 0.0).reshape(n, h, w, -1)

    h1 = kan_conv_relu(pooled, params["wb1"], params["ws1"], params["b1"])
    h2 = kan_conv_relu(h1, params["wb2"], params["ws2"], params["b2"])
    return jnp.transpose(h2 + pooled, (0, 3, 1, 2))


if __name__ == "__main__":
    key = jax.random.PRNGKey(0)
    kx, kp = jax.random.split(key)

    # DownBlock(in_channels=4, mid_channels=8, out_channels=4, BN=False)
    N, C_in, H, W = 2, 4, 16, 16
    C_mid, C_out = 8, 4                  # out == in so the residual add is shape-valid
    x = jax.random.normal(kx, (N, C_in, H, W), jnp.float32)
    params = init_params(kp, C_in, C_mid, C_out)

    y = jax.jit(down_block_forward)(x, params)
    y = jax.block_until_ready(y)
    assert y.shape == (N, C_out, H // 2, W // 2)

    y_ref = _reference(x, params)
    assert bool(jnp.allclose(y, y_ref, rtol=2e-2, atol=2e-2))
    print("KERNEL_OK")
</pallas_src>

<mosaic_0001>
module attributes {stable_mosaic.version = 11 : i64} {
  func.func @kernel(%arg0: i32, %arg1: memref<1x4x110x4xf32, #tpu.memory_space<vmem>>, %arg2: memref<180x8xbf16, #tpu.memory_space<vmem>>, %arg3: memref<1x8xf32, #tpu.memory_space<vmem>>, %arg4: memref<360x4xbf16, #tpu.memory_space<vmem>>, %arg5: memref<1x4xf32, #tpu.memory_space<vmem>>, %arg6: memref<1x80x4xf32, #tpu.memory_space<vmem>>, %arg7: memref<110x20xf32, #tpu.memory_space<vmem>>, %arg8: memref<80x180xf32, #tpu.memory_space<vmem>>, %arg9: memref<110x8xf32, #tpu.memory_space<vmem>>, %arg10: memref<110x40xf32, #tpu.memory_space<vmem>>, %arg11: memref<80x360xf32, #tpu.memory_space<vmem>>) attributes {dimension_semantics = [#tpu.dimension_semantics<parallel>], iteration_bounds = array<i64: 2>, scalar_prefetch = 0 : i64, scratch_operands = 5 : i64, tpu.core_type = #tpu.core_type<tc>, window_params = [{transform_indices = @transform_0, window_bounds = array<i64: 1, 4, 110, 4>}, {pipeline_mode = #tpu.pipeline_mode<synchronous>, transform_indices = @transform_1, window_bounds = array<i64: 180, 8>}, {pipeline_mode = #tpu.pipeline_mode<synchronous>, transform_indices = @transform_2, window_bounds = array<i64: 1, 8>}, {pipeline_mode = #tpu.pipeline_mode<synchronous>, transform_indices = @transform_3, window_bounds = array<i64: 360, 4>}, {pipeline_mode = #tpu.pipeline_mode<synchronous>, transform_indices = @transform_4, window_bounds = array<i64: 1, 4>}, {transform_indices = @transform_5, window_bounds = array<i64: 1, 80, 4>}]} {
    %c0 = arith.constant 0 : index
    %c0_0 = arith.constant 0 : index
    %c0_1 = arith.constant 0 : index
    %c0_2 = arith.constant 0 : index
    %0 = vector.load %arg1[%c0, %c0_0, %c0_1, %c0_2] : memref<1x4x110x4xf32, #tpu.memory_space<vmem>>, vector<1x4x110x4xf32>
    %1 = vector.shape_cast %0 : vector<1x4x110x4xf32> to vector<4x110x4xf32>
    %cst = arith.constant dense<0xFF800000> : vector<110x4xf32>
    %2 = vector.multi_reduction <maximumf>, %1, %cst [0] : vector<4x110x4xf32> to vector<110x4xf32>
    %cst_3 = arith.constant 0.000000e+00 : f32
    %3 = vector.broadcast %cst_3 : f32 to vector<110x4xf32>
    %4 = arith.subf %3, %2 : vector<110x4xf32>
    %5 = math.exp %4 : vector<110x4xf32>
    %cst_4 = arith.constant 1.000000e+00 : f32
    %6 = vector.broadcast %cst_4 : f32 to vector<110x4xf32>
    %7 = arith.addf %6, %5 : vector<110x4xf32>
    %cst_5 = arith.constant 1.000000e+00 : f32
    %8 = vector.broadcast %cst_5 : f32 to vector<110x4xf32>
    %9 = arith.divf %8, %7 : vector<110x4xf32>
    %10 = arith.mulf %2, %9 : vector<110x4xf32>
    %c0_6 = arith.constant 0 : index
    %c0_7 = arith.constant 0 : index
    %11 = vector.load %arg7[%c0_6, %c0_7] : memref<110x20xf32, #tpu.memory_space<vmem>>, vector<110x4xf32>
    tpu.vector_store %arg7[%c0_6, %c0_7], %10 {strides = array<i32>} : memref<110x20xf32, #tpu.memory_space<vmem>>, vector<110x4xf32>,
    %cst_8 = arith.constant 7.500000e-01 : f32
    %12 = vector.broadcast %cst_8 : f32 to vector<110x4xf32>
    %13 = arith.mulf %2, %12 : vector<110x4xf32>
    %cst_9 = arith.constant -1.500000e+00 : f32
    %14 = vector.broadcast %cst_9 : f32 to vector<110x4xf32>
    %15 = arith.subf %13, %14 : vector<110x4xf32>
    %16 = arith.mulf %15, %15 : vector<110x4xf32>
    %cst_10 = arith.constant 0.000000e+00 : f32
    %17 = vector.broadcast %cst_10 : f32 to vector<110x4xf32>
    %18 = arith.subf %17, %16 : vector<110x4xf32>
    %19 = math.exp %18 : vector<110x4xf32>
    %c0_11 = arith.constant 0 : index
    %c4 = arith.constant 4 : index
    %20 = vector.load %arg7[%c0_11, %c4] : memref<110x20xf32, #tpu.memory_space<vmem>>, vector<110x4xf32>
    tpu.vector_store %arg7[%c0_11, %c4], %19 {strides = array<i32>} : memref<110x20xf32, #tpu.memory_space<vmem>>, vector<110x4xf32>,
    %cst_12 = arith.constant -5.000000e-01 : f32
    %21 = vector.broadcast %cst_12 : f32 to vector<110x4xf32>
    %22 = arith.subf %13, %21 : vector<110x4xf32>
    %23 = arith.mulf %22, %22 : vector<110x4xf32>
    %cst_13 = arith.constant 0.000000e+00 : f32
    %24 = vector.broadcast %cst_13 : f32 to vector<110x4xf32>
    %25 = arith.subf %24, %23 : vector<110x4xf32>
    %26 = math.exp %25 : vector<110x4xf32>
    %c0_14 = arith.constant 0 : index
    %c8 = arith.constant 8 : index
    %27 = vector.load %arg7[%c0_14, %c8] : memref<110x20xf32, #tpu.memory_space<vmem>>, vector<110x4xf32>
    tpu.vector_store %arg7[%c0_14, %c8], %26 {strides = array<i32>} : memref<110x20xf32, #tpu.memory_space<vmem>>, vector<110x4xf32>,
    %cst_15 = arith.constant 5.000000e-01 : f32
    %28 = vector.broadcast %cst_15 : f32 to vector<110x4xf32>
    %29 = arith.subf %13, %28 : vector<110x4xf32>
    %30 = arith.mulf %29, %29 : vector<110x4xf32>
    %cst_16 = arith.constant 0.000000e+00 : f32
    %31 = vector.broadcast %cst_16 : f32 to vector<110x4xf32>
    %32 = arith.subf %31, %30 : vector<110x4xf32>
    %33 = math.exp %32 : vector<110x4xf32>
    %c0_17 = arith.constant 0 : index
    %c12 = arith.constant 12 : index
    %34 = vector.load %arg7[%c0_17, %c12] : memref<110x20xf32, #tpu.memory_space<vmem>>, vector<110x4xf32>
    tpu.vector_store %arg7[%c0_17, %c12], %33 {strides = array<i32>} : memref<110x20xf32, #tpu.memory_space<vmem>>, vector<110x4xf32>,
    %cst_18 = arith.constant 1.500000e+00 : f32
    %35 = vector.broadcast %cst_18 : f32 to vector<110x4xf32>
    %36 = arith.subf %13, %35 : vector<110x4xf32>
    %37 = arith.mulf %36, %36 : vector<110x4xf32>
    %cst_19 = arith.constant 0.000000e+00 : f32
    %38 = vector.broadcast %cst_19 : f32 to vector<110x4xf32>
    %39 = arith.subf %38, %37 : vector<110x4xf32>
    %40 = math.exp %39 : vector<110x4xf32>
    %c0_20 = arith.constant 0 : index
    %c16 = arith.constant 16 : index
    %41 = vector.load %arg7[%c0_20, %c16] : memref<110x20xf32, #tpu.memory_space<vmem>>, vector<110x4xf32>
    tpu.vector_store %arg7[%c0_20, %c16], %40 {strides = array<i32>} : memref<110x20xf32, #tpu.memory_space<vmem>>, vector<110x4xf32>,
    %c0_21 = arith.constant 0 : index
    %c0_22 = arith.constant 0 : index
    %42 = vector.load %arg7[%c0_21, %c0_22] : memref<110x20xf32, #tpu.memory_space<vmem>>, vector<80x20xf32>
    %c0_23 = arith.constant 0 : index
    %c0_24 = arith.constant 0 : index
    %43 = vector.load %arg8[%c0_23, %c0_24] : memref<80x180xf32, #tpu.memory_space<vmem>>, vector<80x20xf32>
    tpu.vector_store %arg8[%c0_23, %c0_24], %42 {strides = array<i32>} : memref<80x180xf32, #tpu.memory_space<vmem>>, vector<80x20xf32>,
    %c1 = arith.constant 1 : index
    %c0_25 = arith.constant 0 : index
    %44 = vector.load %arg7[%c1, %c0_25] : memref<110x20xf32, #tpu.memory_space<vmem>>, vector<80x20xf32>
    %c0_26 = arith.constant 0 : index
    %c20 = arith.constant 20 : index
    %45 = vector.load %arg8[%c0_26, %c20] : memref<80x180xf32, #tpu.memory_space<vmem>>, vector<80x20xf32>
    tpu.vector_store %arg8[%c0_26, %c20], %44 {strides = array<i32>} : memref<80x180xf32, #tpu.memory_space<vmem>>, vector<80x20xf32>,
    %c2 = arith.constant 2 : index
    %c0_27 = arith.constant 0 : index
    %46 = vector.load %arg7[%c2, %c0_27] : memref<110x20xf32, #tpu.memory_space<vmem>>, vector<80x20xf32>
    %c0_28 = arith.constant 0 : index
    %c40 = arith.constant 40 : index
    %47 = vector.load %arg8[%c0_28, %c40] : memref<80x180xf32, #tpu.memory_space<vmem>>, vector<80x20xf32>
    tpu.vector_store %arg8[%c0_28, %c40], %46 {strides = array<i32>} : memref<80x180xf32, #tpu.memory_space<vmem>>, vector<80x20xf32>,
    %c10 = arith.constant 10 : index
    %c0_29 = arith.constant 0 : index
    %48 = vector.load %arg7[%c10, %c0_29] : memref<110x20xf32, #tpu.memory_space<vmem>>, vector<80x20xf32>
    %c0_30 = arith.constant 0 : index
    %c60 = arith.constant 60 : index
    %49 = vector.load %arg8[%c0_30, %c60] : memref<80x180xf32, #tpu.memory_space<vmem>>, vector<80x20xf32>
    tpu.vector_store %arg8[%c0_30, %c60], %48 {strides = array<i32>} : memref<80x180xf32, #tpu.memory_space<vmem>>, vector<80x20xf32>,
    %c11 = arith.constant 11 : index
    %c0_31 = arith.constant 0 : index
    %50 = vector.load %arg7[%c11, %c0_31] : memref<110x20xf32, #tpu.memory_space<vmem>>, vector<80x20xf32>
    %c0_32 = arith.constant 0 : index
    %c80 = arith.constant 80 : index
    %51 = vector.load %arg8[%c0_32, %c80] : memref<80x180xf32, #tpu.memory_space<vmem>>, vector<80x20xf32>
    tpu.vector_store %arg8[%c0_32, %c80], %50 {strides = array<i32>} : memref<80x180xf32, #tpu.memory_space<vmem>>, vector<80x20xf32>,
    %c12_33 = arith.constant 12 : index
    %c0_34 = arith.constant 0 : index
    %52 = vector.load %arg7[%c12_33, %c0_34] : memref<110x20xf32, #tpu.memory_space<vmem>>, vector<80x20xf32>
    %c0_35 = arith.constant 0 : index
    %c100 = arith.constant 100 : index
    %53 = vector.load %arg8[%c0_35, %c100] : memref<80x180xf32, #tpu.memory_space<vmem>>, vector<80x20xf32>
    tpu.vector_store %arg8[%c0_35, %c100], %52 {strides = array<i32>} : memref<80x180xf32, #tpu.memory_space<vmem>>, vector<80x20xf32>,
    %c20_36 = arith.constant 20 : index
    %c0_37 = arith.constant 0 : index
    %54 = vector.load %arg7[%c20_36, %c0_37] : memref<110x20xf32, #tpu.memory_space<vmem>>, vector<80x20xf32>
    %c0_38 = arith.constant 0 : index
    %c120 = arith.constant 120 : index
    %55 = vector.load %arg8[%c0_38, %c120] : memref<80x180xf32, #tpu.memory_space<vmem>>, vector<80x20xf32>
    tpu.vector_store %arg8[%c0_38, %c120], %54 {strides = array<i32>} : memref<80x180xf32, #tpu.memory_space<vmem>>, vector<80x20xf32>,
    %c21 = arith.constant 21 : index
    %c0_39 = arith.constant 0 : index
    %56 = vector.load %arg7[%c21, %c0_39] : memref<110x20xf32, #tpu.memory_space<vmem>>, vector<80x20xf32>
    %c0_40 = arith.constant 0 : index
    %c140 = arith.constant 140 : index
    %57 = vector.load %arg8[%c0_40, %c140] : memref<80x180xf32, #tpu.memory_space<vmem>>, vector<80x20xf32>
    tpu.vector_store %arg8[%c0_40, %c140], %56 {strides = array<i32>} : memref<80x180xf32, #tpu.memory_space<vmem>>, vector<80x20xf32>,
    %c22 = arith.constant 22 : index
    %c0_41 = arith.constant 0 : index
    %58 = vector.load %arg7[%c22, %c0_41] : memref<110x20xf32, #tpu.memory_space<vmem>>, vector<80x20xf32>
    %c0_42 = arith.constant 0 : index
    %c160 = arith.constant 160 : index
    %59 = vector.load %arg8[%c0_42, %c160] : memref<80x180xf32, #tpu.memory_space<vmem>>, vector<80x20xf32>
    tpu.vector_store %arg8[%c0_42, %c160], %58 {strides = array<i32>} : memref<80x180xf32, #tpu.memory_space<vmem>>, vector<80x20xf32>,
    %c0_43 = arith.constant 0 : index
    %c0_44 = arith.constant 0 : index
    %60 = vector.load %arg8[%c0_43, %c0_44] : memref<80x180xf32, #tpu.memory_space<vmem>>, vector<80x180xf32>
    %61 = arith.truncf %60 : vector<80x180xf32> to vector<80x180xbf16>
    %c0_45 = arith.constant 0 : index
    %c0_46 = arith.constant 0 : index
    %62 = vector.load %arg2[%c0_45, %c0_46] : memref<180x8xbf16, #tpu.memory_space<vmem>>, vector<180x8xbf16>
    %cst_47 = arith.constant dense<0.000000e+00> : vector<80x8xf32>
    %63 = tpu.matmul %61, %62, %cst_47 {dimension_numbers = #tpu.dot_dimension_numbers<[1], [0], [0], [1], [0, 0, 1, 1], [], []>} : vector<80x180xbf16>, vector<180x8xbf16>, vector<80x8xf32> -> vector<80x8xf32>
    %c0_48 = arith.constant 0 : index
    %c0_49 = arith.constant 0 : index
    %64 = vector.load %arg3[%c0_48, %c0_49] : memref<1x8xf32, #tpu.memory_space<vmem>>, vector<1x8xf32>
    %65 = vector.broadcast %64 : vector<1x8xf32> to vector<80x8xf32>
    %66 = arith.addf %63, %65 : vector<80x8xf32>
    %cst_50 = arith.constant 0.000000e+00 : f32
    %67 = vector.broadcast %cst_50 : f32 to vector<80x8xf32>
    %68 = arith.maximumf %66, %67 : vector<80x8xf32>
    %69 = tpu.iota {dimensions = array<i32: 0>} : vector<80x1xi32>
    %c10_i32 = arith.constant 10 : i32
    %c0_i32 = arith.constant 0 : i32
    %70 = arith.cmpi eq, %c10_i32, %c0_i32 : i32
    %c1_i32 = arith.constant 1 : i32
    %71 = arith.select %70, %c1_i32, %c10_i32 : i32
    %72 = vector.broadcast %71 : i32 to vector<80x1xi32>
    %73 = arith.remsi %69, %72 : vector<80x1xi32>
    %c0_i32_51 = arith.constant 0 : i32
    %74 = vector.broadcast %c0_i32_51 : i32 to vector<80x1xi32>
    %75 = arith.cmpi ne, %73, %74 : vector<80x1xi32>
    %c0_i32_52 = arith.constant 0 : i32
    %76 = vector.broadcast %c0_i32_52 : i32 to vector<80x1xi32>
    %77 = arith.cmpi slt, %73, %76 : vector<80x1xi32>
    %c0_i32_53 = arith.constant 0 : i32
    %78 = arith.cmpi slt, %71, %c0_i32_53 : i32
    %79 = vector.broadcast %78 : i1 to vector<80x1xi1>
    %80 = vector.broadcast %79 : vector<80x1xi1> to vector<80x1xi1>
    %81 = arith.xori %77, %80 : vector<80x1xi1>
    %82 = arith.andi %81, %75 : vector<80x1xi1>
    %83 = vector.broadcast %71 : i32 to vector<80x1xi32>
    %84 = arith.addi %73, %83 : vector<80x1xi32>
    %85 = arith.select %82, %84, %73 : vector<80x1xi1>, vector<80x1xi32>
    %c8_i32 = arith.constant 8 : i32
    %86 = vector.broadcast %c8_i32 : i32 to vector<80x1xi32>
    %87 = arith.cmpi slt, %85, %86 : vector<80x1xi32>
    %cst_54 = arith.constant 0.000000e+00 : f32
    %88 = vector.shape_cast %87 : vector<80x1xi1> to vector<80x1xi1>
    %89 = vector.broadcast %88 : vector<80x1xi1> to vector<80x8xi1>
    %90 = vector.broadcast %cst_54 : f32 to vector<80x8xf32>
    %91 = arith.select %89, %68, %90 : vector<80x8xi1>, vector<80x8xf32>
    %cst_55 = arith.constant 0.000000e+00 : f32
    %92 = vector.broadcast %cst_55 : f32 to vector<110x8xf32>
    %c0_56 = arith.constant 0 : index
    %c0_57 = arith.constant 0 : index
    %93 = vector.load %arg9[%c0_56, %c0_57] : memref<110x8xf32, #tpu.memory_space<vmem>>, vector<110x8xf32>
    tpu.vector_store %arg9[%c0_56, %c0_57], %92 {strides = array<i32>} : memref<110x8xf32, #tpu.memory_space<vmem>>, vector<110x8xf32>,
    %c11_58 = arith.constant 11 : index
    %c0_59 = arith.constant 0 : index
    %94 = vector.load %arg9[%c11_58, %c0_59] : memref<110x8xf32, #tpu.memory_space<vmem>>, vector<80x8xf32>
    tpu.vector_store %arg9[%c11_58, %c0_59], %91 {strides = array<i32>} : memref<110x8xf32, #tpu.memory_space<vmem>>, vector<80x8xf32>,
    %c0_60 = arith.constant 0 : index
    %c0_61 = arith.constant 0 : index
    %95 = vector.load %arg9[%c0_60, %c0_61] : memref<110x8xf32, #tpu.memory_space<vmem>>, vector<110x8xf32>
    %cst_62 = arith.constant 0.000000e+00 : f32
    %96 = vector.broadcast %cst_62 : f32 to vector<110x8xf32>
    %97 = arith.subf %96, %95 : vector<110x8xf32>
    %98 = math.exp %97 : vector<110x8xf32>
    %cst_63 = arith.constant 1.000000e+00 : f32
    %99 = vector.broadcast %cst_63 : f32 to vector<110x8xf32>
    %100 = arith.addf %99, %98 : vector<110x8xf32>
    %cst_64 = arith.constant 1.000000e+00 : f32
    %101 = vector.broadcast %cst_64 : f32 to vector<110x8xf32>
    %102 = arith.divf %101, %100 : vector<110x8xf32>
    %103 = arith.mulf %95, %102 : vector<110x8xf32>
    %c0_65 = arith.constant 0 : index
    %c0_66 = arith.constant 0 : index
    %104 = vector.load %arg10[%c0_65, %c0_66] : memref<110x40xf32, #tpu.memory_space<vmem>>, vector<110x8xf32>
    tpu.vector_store %arg10[%c0_65, %c0_66], %103 {strides = array<i32>} : memref<110x40xf32, #tpu.memory_space<vmem>>, vector<110x8xf32>,
    %cst_67 = arith.constant 7.500000e-01 : f32
    %105 = vector.broadcast %cst_67 : f32 to vector<110x8xf32>
    %106 = arith.mulf %95, %105 : vector<110x8xf32>
    %cst_68 = arith.constant -1.500000e+00 : f32
    %107 = vector.broadcast %cst_68 : f32 to vector<110x8xf32>
    %108 = arith.subf %106, %107 : vector<110x8xf32>
    %109 = arith.mulf %108, %108 : vector<110x8xf32>
    %cst_69 = arith.constant 0.000000e+00 : f32
    %110 = vector.broadcast %cst_69 : f32 to vector<110x8xf32>
    %111 = arith.subf %110, %109 : vector<110x8xf32>
    %112 = math.exp %111 : vector<110x8xf32>
    %c0_70 = arith.constant 0 : index
    %c8_71 = arith.constant 8 : index
    %113 = vector.load %arg10[%c0_70, %c8_71] : memref<110x40xf32, #tpu.memory_space<vmem>>, vector<110x8xf32>
    tpu.vector_store %arg10[%c0_70, %c8_71], %112 {strides = array<i32>} : memref<110x40xf32, #tpu.memory_space<vmem>>, vector<110x8xf32>,
    %cst_72 = arith.constant -5.000000e-01 : f32
    %114 = vector.broadcast %cst_72 : f32 to vector<110x8xf32>
    %115 = arith.subf %106, %114 : vector<110x8xf32>
    %116 = arith.mulf %115, %115 : vector<110x8xf32>
    %cst_73 = arith.constant 0.000000e+00 : f32
    %117 = vector.broadcast %cst_73 : f32 to vector<110x8xf32>
    %118 = arith.subf %117, %116 : vector<110x8xf32>
    %119 = math.exp %118 : vector<110x8xf32>
    %c0_74 = arith.constant 0 : index
    %c16_75 = arith.constant 16 : index
    %120 = vector.load %arg10[%c0_74, %c16_75] : memref<110x40xf32, #tpu.memory_space<vmem>>, vector<110x8xf32>
    tpu.vector_store %arg10[%c0_74, %c16_75], %119 {strides = array<i32>} : memref<110x40xf32, #tpu.memory_space<vmem>>, vector<110x8xf32>,
    %cst_76 = arith.constant 5.000000e-01 : f32
    %121 = vector.broadcast %cst_76 : f32 to vector<110x8xf32>
    %122 = arith.subf %106, %121 : vector<110x8xf32>
    %123 = arith.mulf %122, %122 : vector<110x8xf32>
    %cst_77 = arith.constant 0.000000e+00 : f32
    %124 = vector.broadcast %cst_77 : f32 to vector<110x8xf32>
    %125 = arith.subf %124, %123 : vector<110x8xf32>
    %126 = math.exp %125 : vector<110x8xf32>
    %c0_78 = arith.constant 0 : index
    %c24 = arith.constant 24 : index
    %127 = vector.load %arg10[%c0_78, %c24] : memref<110x40xf32, #tpu.memory_space<vmem>>, vector<110x8xf32>
    tpu.vector_store %arg10[%c0_78, %c24], %126 {strides = array<i32>} : memref<110x40xf32, #tpu.memory_space<vmem>>, vector<110x8xf32>,
    %cst_79 = arith.constant 1.500000e+00 : f32
    %128 = vector.broadcast %cst_79 : f32 to vector<110x8xf32>
    %129 = arith.subf %106, %128 : vector<110x8xf32>
    %130 = arith.mulf %129, %129 : vector<110x8xf32>
    %cst_80 = arith.constant 0.000000e+00 : f32
    %131 = vector.broadcast %cst_80 : f32 to vector<110x8xf32>
    %132 = arith.subf %131, %130 : vector<110x8xf32>
    %133 = math.exp %132 : vector<110x8xf32>
    %c0_81 = arith.constant 0 : index
    %c32 = arith.constant 32 : index
    %134 = vector.load %arg10[%c0_81, %c32] : memref<110x40xf32, #tpu.memory_space<vmem>>, vector<110x8xf32>
    tpu.vector_store %arg10[%c0_81, %c32], %133 {strides = array<i32>} : memref<110x40xf32, #tpu.memory_space<vmem>>, vector<110x8xf32>,
    %c0_82 = arith.constant 0 : index
    %c0_83 = arith.constant 0 : index
    %135 = vector.load %arg10[%c0_82, %c0_83] : memref<110x40xf32, #tpu.memory_space<vmem>>, vector<80x40xf32>
    %c0_84 = arith.constant 0 : index
    %c0_85 = arith.constant 0 : index
    %136 = vector.load %arg11[%c0_84, %c0_85] : memref<80x360xf32, #tpu.memory_space<vmem>>, vector<80x40xf32>
    tpu.vector_store %arg11[%c0_84, %c0_85], %135 {strides = array<i32>} : memref<80x360xf32, #tpu.memory_space<vmem>>, vector<80x40xf32>,
    %c1_86 = arith.constant 1 : index
    %c0_87 = arith.constant 0 : index
    %137 = vector.load %arg10[%c1_86, %c0_87] : memref<110x40xf32, #tpu.memory_space<vmem>>, vector<80x40xf32>
    %c0_88 = arith.constant 0 : index
    %c40_89 = arith.constant 40 : index
    %138 = vector.load %arg11[%c0_88, %c40_89] : memref<80x360xf32, #tpu.memory_space<vmem>>, vector<80x40xf32>
    tpu.vector_store %arg11[%c0_88, %c40_89], %137 {strides = array<i32>} : memref<80x360xf32, #tpu.memory_space<vmem>>, vector<80x40xf32>,
    %c2_90 = arith.constant 2 : index
    %c0_91 = arith.constant 0 : index
    %139 = vector.load %arg10[%c2_90, %c0_91] : memref<110x40xf32, #tpu.memory_space<vmem>>, vector<80x40xf32>
    %c0_92 = arith.constant 0 : index
    %c80_93 = arith.constant 80 : index
    %140 = vector.load %arg11[%c0_92, %c80_93] : memref<80x360xf32, #tpu.memory_space<vmem>>, vector<80x40xf32>
    tpu.vector_store %arg11[%c0_92, %c80_93], %139 {strides = array<i32>} : memref<80x360xf32, #tpu.memory_space<vmem>>, vector<80x40xf32>,
    %c10_94 = arith.constant 10 : index
    %c0_95 = arith.constant 0 : index
    %141 = vector.load %arg10[%c10_94, %c0_95] : memref<110x40xf32, #tpu.memory_space<vmem>>, vector<80x40xf32>
    %c0_96 = arith.constant 0 : index
    %c120_97 = arith.constant 120 : index
    %142 = vector.load %arg11[%c0_96, %c120_97] : memref<80x360xf32, #tpu.memory_space<vmem>>, vector<80x40xf32>
    tpu.vector_store %arg11[%c0_96, %c120_97], %141 {strides = array<i32>} : memref<80x360xf32, #tpu.memory_space<vmem>>, vector<80x40xf32>,
    %c11_98 = arith.constant 11 : index
    %c0_99 = arith.constant 0 : index
    %143 = vector.load %arg10[%c11_98, %c0_99] : memref<110x40xf32, #tpu.memory_space<vmem>>, vector<80x40xf32>
    %c0_100 = arith.constant 0 : index
    %c160_101 = arith.constant 160 : index
    %144 = vector.load %arg11[%c0_100, %c160_101] : memref<80x360xf32, #tpu.memory_space<vmem>>, vector<80x40xf32>
    tpu.vector_store %arg11[%c0_100, %c160_101], %143 {strides = array<i32>} : memref<80x360xf32, #tpu.memory_space<vmem>>, vector<80x40xf32>,
    %c12_102 = arith.constant 12 : index
    %c0_103 = arith.constant 0 : index
    %145 = vector.load %arg10[%c12_102, %c0_103] : memref<110x40xf32, #tpu.memory_space<vmem>>, vector<80x40xf32>
    %c0_104 = arith.constant 0 : index
    %c200 = arith.constant 200 : index
    %146 = vector.load %arg11[%c0_104, %c200] : memref<80x360xf32, #tpu.memory_space<vmem>>, vector<80x40xf32>
    tpu.vector_store %arg11[%c0_104, %c200], %145 {strides = array<i32>} : memref<80x360xf32, #tpu.memory_space<vmem>>, vector<80x40xf32>,
    %c20_105 = arith.constant 20 : index
    %c0_106 = arith.constant 0 : index
    %147 = vector.load %arg10[%c20_105, %c0_106] : memref<110x40xf32, #tpu.memory_space<vmem>>, vector<80x40xf32>
    %c0_107 = arith.constant 0 : index
    %c240 = arith.constant 240 : index
    %148 = vector.load %arg11[%c0_107, %c240] : memref<80x360xf32, #tpu.memory_space<vmem>>, vector<80x40xf32>
    tpu.vector_store %arg11[%c0_107, %c240], %147 {strides = array<i32>} : memref<80x360xf32, #tpu.memory_space<vmem>>, vector<80x40xf32>,
    %c21_108 = arith.constant 21 : index
    %c0_109 = arith.constant 0 : index
    %149 = vector.load %arg10[%c21_108, %c0_109] : memref<110x40xf32, #tpu.memory_space<vmem>>, vector<80x40xf32>
    %c0_110 = arith.constant 0 : index
    %c280 = arith.constant 280 : index
    %150 = vector.load %arg11[%c0_110, %c280] : memref<80x360xf32, #tpu.memory_space<vmem>>, vector<80x40xf32>
    tpu.vector_store %arg11[%c0_110, %c280], %149 {strides = array<i32>} : memref<80x360xf32, #tpu.memory_space<vmem>>, vector<80x40xf32>,
    %c22_111 = arith.constant 22 : index
    %c0_112 = arith.constant 0 : index
    %151 = vector.load %arg10[%c22_111, %c0_112] : memref<110x40xf32, #tpu.memory_space<vmem>>, vector<80x40xf32>
    %c0_113 = arith.constant 0 : index
    %c320 = arith.constant 320 : index
    %152 = vector.load %arg11[%c0_113, %c320] : memref<80x360xf32, #tpu.memory_space<vmem>>, vector<80x40xf32>
    tpu.vector_store %arg11[%c0_113, %c320], %151 {strides = array<i32>} : memref<80x360xf32, #tpu.memory_space<vmem>>, vector<80x40xf32>,
    %c0_114 = arith.constant 0 : index
    %c0_115 = arith.constant 0 : index
    %153 = vector.load %arg11[%c0_114, %c0_115] : memref<80x360xf32, #tpu.memory_space<vmem>>, vector<80x360xf32>
    %154 = arith.truncf %153 : vector<80x360xf32> to vector<80x360xbf16>
    %c0_116 = arith.constant 0 : index
    %c0_117 = arith.constant 0 : index
    %155 = vector.load %arg4[%c0_116, %c0_117] : memref<360x4xbf16, #tpu.memory_space<vmem>>, vector<360x4xbf16>
    %cst_118 = arith.constant dense<0.000000e+00> : vector<80x4xf32>
    %156 = tpu.matmul %154, %155, %cst_118 {dimension_numbers = #tpu.dot_dimension_numbers<[1], [0], [0], [1], [0, 0, 1, 1], [], []>} : vector<80x360xbf16>, vector<360x4xbf16>, vector<80x4xf32> -> vector<80x4xf32>
    %c0_119 = arith.constant 0 : index
    %c0_120 = arith.constant 0 : index
    %157 = vector.load %arg5[%c0_119, %c0_120] : memref<1x4xf32, #tpu.memory_space<vmem>>, vector<1x4xf32>
    %158 = vector.broadcast %157 : vector<1x4xf32> to vector<80x4xf32>
    %159 = arith.addf %156, %158 : vector<80x4xf32>
    %cst_121 = arith.constant 0.000000e+00 : f32
    %160 = vector.broadcast %cst_121 : f32 to vector<80x4xf32>
    %161 = arith.maximumf %159, %160 : vector<80x4xf32>
    %162 = vector.extract_strided_slice %2 {offsets = [11, 0], sizes = [80, 4], strides = [1, 1]} : vector<110x4xf32> to vector<80x4xf32>
    %163 = arith.addf %161, %162 : vector<80x4xf32>
    %c0_122 = arith.constant 0 : index
    %c0_123 = arith.constant 0 : index
    %c0_124 = arith.constant 0 : index
    %164 = vector.load %arg6[%c0_122, %c0_123, %c0_124] : memref<1x80x4xf32, #tpu.memory_space<vmem>>, vector<1x80x4xf32>
    %165 = vector.shape_cast %164 : vector<1x80x4xf32> to vector<80x4xf32>
    %166 = vector.shape_cast %163 : vector<80x4xf32> to vector<1x80x4xf32>
    tpu.vector_store %arg6[%c0_122, %c0_123, %c0_124], %166 {strides = array<i32>} : memref<1x80x4xf32, #tpu.memory_space<vmem>>, vector<1x80x4xf32>,
    return
  }
  func.func @transform_0(%arg0: i32) -> (i32, i32, i32, i32) {
    %c0_i32 = arith.constant 0 : i32
    %c0_i32_0 = arith.constant 0 : i32
    %c0_i32_1 = arith.constant 0 : i32
    %c0_i32_2 = arith.constant 0 : i32
    return %arg0, %c0_i32, %c0_i32_0, %c0_i32_1 : i32, i32, i32, i32
  }
  func.func @transform_1(%arg0: i32) -> (i32, i32) {
    %c0_i32 = arith.constant 0 : i32
    %c0_i32_0 = arith.constant 0 : i32
    %c0_i32_1 = arith.constant 0 : i32
    return %c0_i32, %c0_i32_0 : i32, i32
  }
  func.func @transform_2(%arg0: i32) -> (i32, i32) {
    %c0_i32 = arith.constant 0 : i32
    %c0_i32_0 = arith.constant 0 : i32
    %c0_i32_1 = arith.constant 0 : i32
    return %c0_i32, %c0_i32_0 : i32, i32
  }
  func.func @transform_3(%arg0: i32) -> (i32, i32) {
    %c0_i32 = arith.constant 0 : i32
    %c0_i32_0 = arith.constant 0 : i32
    %c0_i32_1 = arith.constant 0 : i32
    return %c0_i32, %c0_i32_0 : i32, i32
  }
  func.func @transform_4(%arg0: i32) -> (i32, i32) {
    %c0_i32 = arith.constant 0 : i32
    %c0_i32_0 = arith.constant 0 : i32
    %c0_i32_1 = arith.constant 0 : i32
    return %c0_i32, %c0_i32_0 : i32, i32
  }
  func.func @transform_5(%arg0: i32) -> (i32, i32, i32) {
    %c0_i32 = arith.constant 0 : i32
    %c0_i32_0 = arith.constant 0 : i32
    %c0_i32_1 = arith.constant 0 : i32
    return %arg0, %c0_i32, %c0_i32_0 : i32, i32, i32
  }
}

</mosaic_0001>

<llo_original>
// kernel: down_block_forward.1
$region0: #{down_block_forward.1}
  #allocation0 [shape = 'u32[]', space=smem, size = 0x4, offset = 0x4, fixed_abs, tag = 'smem constant byte address 0x4 - core index']
  #allocation1 [shape = 'u32[144,128]{1,0:T(1,128)}', space=vmem, size = 0x12000, scoped, tag = 'internal scratch']
  #allocation2 [shape = 'f32[110,20]{1,0:T(8,128)}', space=vmem, size = 0xe000, scoped, tag = 'scratch operand']
  #allocation3 [shape = 'f32[80,180]{1,0:T(8,128)}', space=vmem, size = 0x14000, scoped, tag = 'scratch operand']
  #allocation4 [shape = 'f32[110,8]{1,0:T(8,128)}', space=vmem, size = 0xe000, scoped, tag = 'scratch operand']
  #allocation5 [shape = 'f32[110,40]{1,0:T(8,128)}', space=vmem, size = 0xe000, scoped, tag = 'scratch operand']
  #allocation6 [shape = 'f32[80,360]{1,0:T(8,128)}', space=vmem, size = 0x1e000, scoped, tag = 'scratch operand']
  %s0 = inlined_call_operand.vmem [shape: f32[2,4,110,4], index: 0, kind: input, shape index: {}]
  %s1 = inlined_call_operand.vmem [shape: bf16[180,8], index: 1, kind: input, shape index: {}]
  %s2 = inlined_call_operand.vmem [shape: f32[1,8], index: 2, kind: input, shape index: {}]
  %s3 = inlined_call_operand.vmem [shape: bf16[360,4], index: 3, kind: input, shape index: {}]
  %s4 = inlined_call_operand.vmem [shape: f32[1,4], index: 4, kind: input, shape index: {}]
  %s5 = inlined_call_operand.vmem [shape: f32[2,80,4], index: 5, kind: output, shape index: {}]
  %s6 = sld [smem:[#allocation0]]
  $region53: #{down_block_forward.1} parent=0
    _
  %s8 = ssub.s32 1, %s6
  %s9 = scalar_select 0, %s8, %s6
  loop: start=0, step=1, limit=4
  $region2: #{down_block_forward.1} parent=0 // loop_pre_header
    _
  $region3: #{down_block_forward.1} parent=0 // loop_header
    %s11 = sphi 0, %s15
    %p12 = scmp.ge.s32.totalorder %s11, 4
    %s21 = sphi 0, %s23
    %s24 = sphi 0, %s21
    %s25 = sphi 0, %s24
    %s41 = sphi 0, %s25
    %s45 = sphi 0, %s45
    %s47 = sphi 0, %s45
    %s48 = sphi 0, %s47
    %s62 = sphi 0, %s48
    %s66 = sphi 0, %s66
    %s68 = sphi 0, %s66
    %s69 = sphi 0, %s68
    %s83 = sphi 0, %s69
    %s87 = sphi 0, %s87
    %s89 = sphi 0, %s87
    %s90 = sphi 0, %s89
    %s104 = sphi 0, %s90
    %s108 = sphi 0, %s108
    %s110 = sphi 0, %s108
    %s111 = sphi 0, %s110
    %s125 = sphi 0, %s111
    %s131 = sphi 0, %s133
    %s134 = sphi 0, %s131
    %s135 = sphi 0, %s134
    %s151 = sphi 0, %s135
  $region4: #{down_block_forward.1} parent=0 // loop_header_branch
    %14 = sbr.rel (%p12) target = $region8
  $region5: #{down_block_forward.1} parent=0 // loop_body
    %s16 = ssub.s32 %s11, 1
    %s17 = ssub.s32 %s11, 2
    %s18 = sadd.s32 %s11, 1
    %s19 = ssub.s32 %s11, %s18
    %p20 = scmp.eq.s32.totalorder %s19, 0
    %s22 = sadd.s32 %s21, 1
    %s23 = scalar_select %p20, %s21, %s22
    %p26 = pneg %p20
    %p27 = scmp.eq.s32.totalorder %s11, 1
    %p28 = por %p26, %p27
    %p29 = scmp.ne.s32.totalorder %s21, %s24
    %p30 = scmp.eq.s32.totalorder %s11, 0
    %p31 = por %p29, %p30
    %p32 = scmp.ne.s32.totalorder %s21, %s24
    %p33 = scmp.eq.s32.totalorder %s16, 1
    %p34 = por %p32, %p33
    %p35 = scmp.ne.s32.totalorder %s24, %s25
    %p36 = scmp.eq.s32.totalorder %s16, 0
    %p37 = por %p35, %p36
    %p38 = scmp.ne.s32.totalorder %s24, %s25
    %p39 = scmp.eq.s32.totalorder %s17, 1
    %p40 = por %p38, %p39
    %p42 = scmp.ne.s32.totalorder %s25, %s41
    %p43 = scmp.eq.s32.totalorder %s17, 0
    %p44 = por %p42, %p43
    %s46 = sadd.s32 %s45, 1
    %p49 = scmp.eq.s32.totalorder %s11, 1
    %p50 = scmp.ne.s32.totalorder %s45, %s47
    %p51 = scmp.eq.s32.totalorder %s11, 0
    %p52 = por %p50, %p51
    %p53 = scmp.ne.s32.totalorder %s45, %s47
    %p54 = scmp.eq.s32.totalorder %s16, 1
    %p55 = por %p53, %p54
    %p56 = scmp.ne.s32.totalorder %s47, %s48
    %p57 = scmp.eq.s32.totalorder %s16, 0
    %p58 = por %p56, %p57
    %p59 = scmp.ne.s32.totalorder %s47, %s48
    %p60 = scmp.eq.s32.totalorder %s17, 1
    %p61 = por %p59, %p60
    %p63 = scmp.ne.s32.totalorder %s48, %s62
    %p64 = scmp.eq.s32.totalorder %s17, 0
    %p65 = por %p63, %p64
    %s67 = sadd.s32 %s66, 1
    %p70 = scmp.eq.s32.totalorder %s11, 1
    %p71 = scmp.ne.s32.totalorder %s66, %s68
    %p72 = scmp.eq.s32.totalorder %s11, 0
    %p73 = por %p71, %p72
    %p74 = scmp.ne.s32.totalorder %s66, %s68
    %p75 = scmp.eq.s32.totalorder %s16, 1
    %p76 = por %p74, %p75
    %p77 = scmp.ne.s32.totalorder %s68, %s69
    %p78 = scmp.eq.s32.totalorder %s16, 0
    %p79 = por %p77, %p78
    %p80 = scmp.ne.s32.totalorder %s68, %s69
    %p81 = scmp.eq.s32.totalorder %s17, 1
    %p82 = por %p80, %p81
    %p84 = scmp.ne.s32.totalorder %s69, %s83
    %p85 = scmp.eq.s32.totalorder %s17, 0
    %p86 = por %p84, %p85
    %s88 = sadd.s32 %s87, 1
    %p91 = scmp.eq.s32.totalorder %s11, 1
    %p92 = scmp.ne.s32.totalorder %s87, %s89
    %p93 = scmp.eq.s32.totalorder %s11, 0
    %p94 = por %p92, %p93
    %p95 = scmp.ne.s32.totalorder %s87, %s89
    %p96 = scmp.eq.s32.totalorder %s16, 1
    %p97 = por %p95, %p96
    %p98 = scmp.ne.s32.totalorder %s89, %s90
    %p99 = scmp.eq.s32.totalorder %s16, 0
    %p100 = por %p98, %p99
    %p101 = scmp.ne.s32.totalorder %s89, %s90
    %p102 = scmp.eq.s32.totalorder %s17, 1
    %p103 = por %p101, %p102
    %p105 = scmp.ne.s32.totalorder %s90, %s104
    %p106 = scmp.eq.s32.totalorder %s17, 0
    %p107 = por %p105, %p106
    %s109 = sadd.s32 %s108, 1
    %p112 = scmp.eq.s32.totalorder %s11, 1
    %p113 = scmp.ne.s32.totalorder %s108, %s110
    %p114 = scmp.eq.s32.totalorder %s11, 0
    %p115 = por %p113, %p114
    %p116 = scmp.ne.s32.totalorder %s108, %s110
    %p117 = scmp.eq.s32.totalorder %s16, 1
    %p118 = por %p116, %p117
    %p119 = scmp.ne.s32.totalorder %s110, %s111
    %p120 = scmp.eq.s32.totalorder %s16, 0
    %p121 = por %p119, %p120
    %p122 = scmp.ne.s32.totalorder %s110, %s111
    %p123 = scmp.eq.s32.totalorder %s17, 1
    %p124 = por %p122, %p123
    %p126 = scmp.ne.s32.totalorder %s111, %s125
    %p127 = scmp.eq.s32.totalorder %s17, 0
    %p128 = por %p126, %p127
    %s129 = ssub.s32 %s11, %s18
    %p130 = scmp.eq.s32.totalorder %s129, 0
    %s132 = sadd.s32 %s131, 1
    %s133 = scalar_select %p130, %s131, %s132
    %p136 = pneg %p130
    %p137 = scmp.eq.s32.totalorder %s11, 1
    %p138 = por %p136, %p137
    %p139 = scmp.ne.s32.totalorder %s131, %s134
    %p140 = scmp.eq.s32.totalorder %s11, 0
    %p141 = por %p139, %p140
    %p142 = scmp.ne.s32.totalorder %s131, %s134
    %p143 = scmp.eq.s32.totalorder %s16, 1
    %p144 = por %p142, %p143
    %p145 = scmp.ne.s32.totalorder %s134, %s135
    %p146 = scmp.eq.s32.totalorder %s16, 0
    %p147 = por %p145, %p146
    %p148 = scmp.ne.s32.totalorder %s134, %s135
    %p149 = scmp.eq.s32.totalorder %s17, 1
    %p150 = por %p148, %p149
    %p152 = scmp.ne.s32.totalorder %s135, %s151
    %p153 = scmp.eq.s32.totalorder %s17, 0
    %p154 = por %p152, %p153
    %p155 = scmp.le.s32.totalorder 1, %s11
    %p156 = scmp.lt.s32.totalorder %s11, 3
    %p157 = pnand %p155, %p156
    %p158 = pneg %p157
    // Predicated region
    $region9: #{down_block_forward.1} parent=5 // pred_check
      _
    $region10: #{down_block_forward.1} parent=5 // pred_check_branch
      %160 = sbr.rel (%p157) target = $region12
    $region11: #{down_block_forward.1} parent=5 // pred_region
      %s161 = ssub.s32 %s11, 1
      // Predicated region
      $region13: #{down_block_forward.1} parent=11 // pred_check
        %p162 = pneg %p58
      $region14: #{down_block_forward.1} parent=11 // pred_check_branch
        %164 = sbr.rel (%p162) target = $region16
      $region15: #{down_block_forward.1} parent=11 // pred_region
        _
      $region16: #{down_block_forward.1} parent=11 // pred_fallthru
        _
      // Predicated region
      $region17: #{down_block_forward.1} parent=11 // pred_check
        %p165 = pneg %p79
      $region18: #{down_block_forward.1} parent=11 // pred_check_branch
        %167 = sbr.rel (%p165) target = $region20
      $region19: #{down_block_forward.1} parent=11 // pred_region
        _
      $region20: #{down_block_forward.1} parent=11 // pred_fallthru
        _
      // Predicated region
      $region21: #{down_block_forward.1} parent=11 // pred_check
        %p168 = pneg %p100
      $region22: #{down_block_forward.1} parent=11 // pred_check_branch
        %170 = sbr.rel (%p168) target = $region24
      $region23: #{down_block_forward.1} parent=11 // pred_region
        _
      $region24: #{down_block_forward.1} parent=11 // pred_fallthru
        _
      // Predicated region
      $region25: #{down_block_forward.1} parent=11 // pred_check
        %p171 = pneg %p121
      $region26: #{down_block_forward.1} parent=11 // pred_check_branch
        %173 = sbr.rel (%p171) target = $region28
      $region27: #{down_block_forward.1} parent=11 // pred_region
        _
      $region28: #{down_block_forward.1} parent=11 // pred_fallthru
        _
    $region12: #{down_block_forward.1} parent=5 // pred_fallthru
      _
    %p174 = scmp.lt.s32.totalorder %s11, 2
    // Predicated region
    $region29: #{down_block_forward.1} parent=5 // pred_check
      %p175 = pneg %p174
    $region30: #{down_block_forward.1} parent=5 // pred_check_branch
      %177 = sbr.rel (%p175) target = $region32
    $region31: #{down_block_forward.1} parent=5 // pred_region
      // Predicated region
      $region33: #{down_block_forward.1} parent=31 // pred_check
        %p178 = pneg %p31
      $region34: #{down_block_forward.1} parent=31 // pred_check_branch
        %180 = sbr.rel (%p178) target = $region36
      $region35: #{down_block_forward.1} parent=31 // pred_region
        %p181 = scmp.lt.s32.totalorder %s11, 1
        %s182 = scalar_select %p181, %s11, 1
        %s183 = smul.addr %s182, 56
        %s184 = smul.addr %s183, 8
        %s185 = scalar_lea.vmem %s0, %s184
      $region36: #{down_block_forward.1} parent=31 // pred_fallthru
        _
    $region32: #{down_block_forward.1} parent=5 // pred_fallthru
      _
    %p186 = scmp.le.s32.totalorder 1, %s11
    %p187 = scmp.lt.s32.totalorder %s11, 3
    %p188 = pnand %p186, %p187
    %p189 = pneg %p188
    // Predicated region
    $region37: #{down_block_forward.1} parent=5 // pred_check
      _
    $region38: #{down_block_forward.1} parent=5 // pred_check_branch
      %191 = sbr.rel (%p188) target = $region40
    $region39: #{down_block_forward.1} parent=5 // pred_region
      %s192 = ssub.s32 %s11, 1
      %p193 = scmp.lt.s32.totalorder %s16, 1
      %s194 = scalar_select %p193, %s16, 1
      %s195 = smul.addr %s194, 56
      %s196 = smul.addr %s195, 8
      %s197 = scalar_lea.vmem %s0, %s196
      %p198 = pneg %p37
      %p199 = pneg %p34
      %p200 = pneg %p58
      %p201 = pneg %p55
      %p202 = pneg %p79
      %p203 = pneg %p76
      %p204 = pneg %p100
      %p205 = pneg %p97
      %p206 = pneg %p121
      %p207 = pneg %p118
      %p208 = pneg %p147
      %p209 = pneg %p144
      %p210 = scmp.lt.s32.totalorder %s16, 1
      %s211 = scalar_select %p210, %s16, 1
      %s212 = smul.addr %s211, 10
      %s213 = smul.addr %s212, 8
      %s214 = scalar_lea.vmem %s5, %s213
      %p215 = scmp.lt.s32.totalorder %s16, 1
      %s216 = scalar_select %p215, %s16, 1
      %s217 = smul.addr %s216, 56
      %s218 = smul.addr %s217, 8
      %s219 = scalar_lea.vmem %s0, %s218
      %p220 = scmp.lt.s32.totalorder %s16, 1
      %s221 = scalar_select %p220, %s16, 1
      %s222 = smul.addr %s221, 10
      %s223 = smul.addr %s222, 8
      %s224 = scalar_lea.vmem %s5, %s223
      %v226 = vld [vmem:[%s219] sm:$0xff]
      %v227 = vld [vmem:[%s219 + $0x8] sm:$0xff]
      %v228 = vld [vmem:[%s219 + $0x10] sm:$0xff]
      %v229 = vld [vmem:[%s219 + $0x18] sm:$0xff]
      %v230 = vld [vmem:[%s219 + $0x20] sm:$0xff]
      %v231 = vld [vmem:[%s219 + $0x28] sm:$0xff]
      %v232 = vld [vmem:[%s219 + $0x30] sm:$0xff]
      %v233 = vld [vmem:[%s219 + $0x38] sm:$0xff]
      %v234 = vld [vmem:[%s219 + $0x40] sm:$0xff]
      %v235 = vld [vmem:[%s219 + $0x48] sm:$0xff]
      %v236 = vld [vmem:[%s219 + $0x50] sm:$0xff]
      %v237 = vld [vmem:[%s219 + $0x58] sm:$0xff]
      %v238 = vld [vmem:[%s219 + $0x60] sm:$0xff]
      %v239 = vld [vmem:[%s219 + $0x68] sm:$0x3f]
      %v240 = vld [vmem:[%s219 + $0x70] sm:$0xff]
      %v241 = vld [vmem:[%s219 + $0x78] sm:$0xff]
      %v242 = vld [vmem:[%s219 + $0x80] sm:$0xff]
      %v243 = vld [vmem:[%s219 + $0x88] sm:$0xff]
      %v244 = vld [vmem:[%s219 + $0x90] sm:$0xff]
      %v245 = vld [vmem:[%s219 + $0x98] sm:$0xff]
      %v246 = vld [vmem:[%s219 + $0xa0] sm:$0xff]
      %v247 = vld [vmem:[%s219 + $0xa8] sm:$0xff]
      %v248 = vld [vmem:[%s219 + $0xb0] sm:$0xff]
      %v249 = vld [vmem:[%s219 + $0xb8] sm:$0xff]
      %v250 = vld [vmem:[%s219 + $0xc0] sm:$0xff]
      %v251 = vld [vmem:[%s219 + $0xc8] sm:$0xff]
      %v252 = vld [vmem:[%s219 + $0xd0] sm:$0xff]
      %v253 = vld [vmem:[%s219 + $0xd8] sm:$0x3f]
      %v254 = vld [vmem:[%s219 + $0xe0] sm:$0xff]
      %v255 = vld [vmem:[%s219 + $0xe8] sm:$0xff]
      %v256 = vld [vmem:[%s219 + $0xf0] sm:$0xff]
      %v257 = vld [vmem:[%s219 + $0xf8] sm:$0xff]
      %v258 = vld [vmem:[%s219 + $0x100] sm:$0xff]
      %v259 = vld [vmem:[%s219 + $0x108] sm:$0xff]
      %v260 = vld [vmem:[%s219 + $0x110] sm:$0xff]
      %v261 = vld [vmem:[%s219 + $0x118] sm:$0xff]
      %v262 = vld [vmem:[%s219 + $0x120] sm:$0xff]
      %v263 = vld [vmem:[%s219 + $0x128] sm:$0xff]
      %v264 = vld [vmem:[%s219 + $0x130] sm:$0xff]
      %v265 = vld [vmem:[%s219 + $0x138] sm:$0xff]
      %v266 = vld [vmem:[%s219 + $0x140] sm:$0xff]
      %v267 = vld [vmem:[%s219 + $0x148] sm:$0x3f]
      %v268 = vld [vmem:[%s219 + $0x150] sm:$0xff]
      %v269 = vld [vmem:[%s219 + $0x158] sm:$0xff]
      %v270 = vld [vmem:[%s219 + $0x160] sm:$0xff]
      %v271 = vld [vmem:[%s219 + $0x168] sm:$0xff]
      %v272 = vld [vmem:[%s219 + $0x170] sm:$0xff]
      %v273 = vld [vmem:[%s219 + $0x178] sm:$0xff]
      %v274 = vld [vmem:[%s219 + $0x180] sm:$0xff]
      %v275 = vld [vmem:[%s219 + $0x188] sm:$0xff]
      %v276 = vld [vmem:[%s219 + $0x190] sm:$0xff]
      %v277 = vld [vmem:[%s219 + $0x198] sm:$0xff]
      %v278 = vld [vmem:[%s219 + $0x1a0] sm:$0xff]
      %v279 = vld [vmem:[%s219 + $0x1a8] sm:$0xff]
      %v280 = vld [vmem:[%s219 + $0x1b0] sm:$0xff]
      %v281 = vld [vmem:[%s219 + $0x1b8] sm:$0x3f]
      %vm282 = vcmask 31744
      %v283 = vsel %vm282, %v226, -inf
      %v284 = vsel %vm282, %v240, -inf
      %v285 = vmax.f32 %v283, %v284
      %v286 = vsel %vm282, %v254, -inf
      %v287 = vmax.f32 %v285, %v286
      %v288 = vsel %vm282, %v268, -inf
      %v289 = vmax.f32 %v287, %v288
      %v290 = vsel %vm282, %v227, -inf
      %v291 = vsel %vm282, %v241, -inf
      %v292 = vmax.f32 %v290, %v291
      %v293 = vsel %vm282, %v255, -inf
      %v294 = vmax.f32 %v292, %v293
      %v295 = vsel %vm282, %v269, -inf
      %v296 = vmax.f32 %v294, %v295
      %v297 = vsel %vm282, %v228, -inf
      %v298 = vsel %vm282, %v242, -inf
      %v299 = vmax.f32 %v297, %v298
      %v300 = vsel %vm282, %v256, -inf
      %v301 = vmax.f32 %v299, %v300
      %v302 = vsel %vm282, %v270, -inf
      %v303 = vmax.f32 %v301, %v302
      %v304 = vsel %vm282, %v229, -inf
      %v305 = vsel %vm282, %v243, -inf
      %v306 = vmax.f32 %v304, %v305
      %v307 = vsel %vm282, %v257, -inf
      %v308 = vmax.f32 %v306, %v307
      %v309 = vsel %vm282, %v271, -inf
      %v310 = vmax.f32 %v308, %v309
      %v311 = vsel %vm282, %v230, -inf
      %v312 = vsel %vm282, %v244, -inf
      %v313 = vmax.f32 %v311, %v312
      %v314 = vsel %vm282, %v258, -inf
      %v315 = vmax.f32 %v313, %v314
      %v316 = vsel %vm282, %v272, -inf
      %v317 = vmax.f32 %v315, %v316
      %v318 = vsel %vm282, %v231, -inf
      %v319 = vsel %vm282, %v245, -inf
      %v320 = vmax.f32 %v318, %v319
      %v321 = vsel %vm282, %v259, -inf
      %v322 = vmax.f32 %v320, %v321
      %v323 = vsel %vm282, %v273, -inf
      %v324 = vmax.f32 %v322, %v323
      %v325 = vsel %vm282, %v232, -inf
      %v326 = vsel %vm282, %v246, -inf
      %v327 = vmax.f32 %v325, %v326
      %v328 = vsel %vm282, %v260, -inf
      %v329 = vmax.f32 %v327, %v328
      %v330 = vsel %vm282, %v274, -inf
      %v331 = vmax.f32 %v329, %v330
      %v332 = vsel %vm282, %v233, -inf
      %v333 = vsel %vm282, %v247, -inf
      %v334 = vmax.f32 %v332, %v333
      %v335 = vsel %vm282, %v261, -inf
      %v336 = vmax.f32 %v334, %v335
      %v337 = vsel %vm282, %v275, -inf
      %v338 = vmax.f32 %v336, %v337
      %v339 = vsel %vm282, %v234, -inf
      %v340 = vsel %vm282, %v248, -inf
      %v341 = vmax.f32 %v339, %v340
      %v342 = vsel %vm282, %v262, -inf
      %v343 = vmax.f32 %v341, %v342
      %v344 = vsel %vm282, %v276, -inf
      %v345 = vmax.f32 %v343, %v344
      %v346 = vsel %vm282, %v235, -inf
      %v347 = vsel %vm282, %v249, -inf
      %v348 = vmax.f32 %v346, %v347
      %v349 = vsel %vm282, %v263, -inf
      %v350 = vmax.f32 %v348, %v349
      %v351 = vsel %vm282, %v277, -inf
      %v352 = vmax.f32 %v350, %v351
      %v353 = vsel %vm282, %v236, -inf
      %v354 = vsel %vm282, %v250, -inf
      %v355 = vmax.f32 %v353, %v354
      %v356 = vsel %vm282, %v264, -inf
      %v357 = vmax.f32 %v355, %v356
      %v358 = vsel %vm282, %v278, -inf
      %v359 = vmax.f32 %v357, %v358
      %v360 = vsel %vm282, %v237, -inf
      %v361 = vsel %vm282, %v251, -inf
      %v362 = vmax.f32 %v360, %v361
      %v363 = vsel %vm282, %v265, -inf
      %v364 = vmax.f32 %v362, %v363
      %v365 = vsel %vm282, %v279, -inf
      %v366 = vmax.f32 %v364, %v365
      %v367 = vsel %vm282, %v238, -inf
      %v368 = vsel %vm282, %v252, -inf
      %v369 = vmax.f32 %v367, %v368
      %v370 = vsel %vm282, %v266, -inf
      %v371 = vmax.f32 %v369, %v370
      %v372 = vsel %vm282, %v280, -inf
      %v373 = vmax.f32 %v371, %v372
      %vm374 = vcmask 29696
      %v375 = vsel %vm374, %v239, -inf
      %v376 = vsel %vm374, %v253, -inf
      %v377 = vmax.f32 %v375, %v376
      %v378 = vsel %vm374, %v267, -inf
      %v379 = vmax.f32 %v377, %v378
      %v380 = vsel %vm374, %v281, -inf
      %v381 = vmax.f32 %v379, %v380
      %v382 = vsub.f32 0.0, %v289
      %v383 = vsub.f32 0.0, %v296
      %v384 = vsub.f32 0.0, %v303
      %v385 = vsub.f32 0.0, %v310
      %v386 = vsub.f32 0.0, %v317
      %v387 = vsub.f32 0.0, %v324
      %v388 = vsub.f32 0.0, %v331
      %v389 = vsub.f32 0.0, %v338
      %v390 = vsub.f32 0.0, %v345
      %v391 = vsub.f32 0.0, %v352
      %v392 = vsub.f32 0.0, %v359
      %v393 = vsub.f32 0.0, %v366
      %v394 = vsub.f32 0.0, %v373
      %v395 = vsub.f32 0.0, %v381
      %v396 = vmul.f32 %v382, 1.442695
      %v397 = vpow.pop %v396
      %v398 = vmul.f32 %v383, 1.442695
      %v399 = vpow.pop %v398
      %v400 = vmul.f32 %v384, 1.442695
      %v401 = vpow.pop %v400
      %v402 = vmul.f32 %v385, 1.442695
      %v403 = vpow.pop %v402
      %v404 = vmul.f32 %v386, 1.442695
      %v405 = vpow.pop %v404
      %v406 = vmul.f32 %v387, 1.442695
      %v407 = vpow.pop %v406
      %v408 = vmul.f32 %v388, 1.442695
      %v409 = vpow.pop %v408
      %v410 = vmul.f32 %v389, 1.442695
      %v411 = vpow.pop %v410
      %v412 = vmul.f32 %v390, 1.442695
      %v413 = vpow.pop %v412
      %v414 = vmul.f32 %v391, 1.442695
      %v415 = vpow.pop %v414
      %v416 = vmul.f32 %v392, 1.442695
      %v417 = vpow.pop %v416
      %v418 = vmul.f32 %v393, 1.442695
      %v419 = vpow.pop %v418
      %v420 = vmul.f32 %v394, 1.442695
      %v421 = vpow.pop %v420
      %v422 = vmul.f32 %v395, 1.442695
      %v423 = vpow.pop %v422
      %v424 = vadd.f32 %v397, 1.0
      %v425 = vadd.f32 %v399, 1.0
      %v426 = vadd.f32 %v401, 1.0
      %v427 = vadd.f32 %v403, 1.0
      %v428 = vadd.f32 %v405, 1.0
      %v429 = vadd.f32 %v407, 1.0
      %v430 = vadd.f32 %v409, 1.0
      %v431 = vadd.f32 %v411, 1.0
      %v432 = vadd.f32 %v413, 1.0
      %v433 = vadd.f32 %v415, 1.0
      %v434 = vadd.f32 %v417, 1.0
      %v435 = vadd.f32 %v419, 1.0
      %v436 = vadd.f32 %v421, 1.0
      %v437 = vadd.f32 %v423, 1.0
      %v438 = vrcp.pop %v424
      %v439 = vmul.f32 1.0, %v438
      %v440 = vrcp.pop %v425
      %v441 = vmul.f32 1.0, %v440
      %v442 = vrcp.pop %v426
      %v443 = vmul.f32 1.0, %v442
      %v444 = vrcp.pop %v427
      %v445 = vmul.f32 1.0, %v444
      %v446 = vrcp.pop %v428
      %v447 = vmul.f32 1.0, %v446
      %v448 = vrcp.pop %v429
      %v449 = vmul.f32 1.0, %v448
      %v450 = vrcp.pop %v430
      %v451 = vmul.f32 1.0, %v450
      %v452 = vrcp.pop %v431
      %v453 = vmul.f32 1.0, %v452
      %v454 = vrcp.pop %v432
      %v455 = vmul.f32 1.0, %v454
      %v456 = vrcp.pop %v433
      %v457 = vmul.f32 1.0, %v456
      %v458 = vrcp.pop %v434
      %v459 = vmul.f32 1.0, %v458
      %v460 = vrcp.pop %v435
      %v461 = vmul.f32 1.0, %v460
      %v462 = vrcp.pop %v436
      %v463 = vmul.f32 1.0, %v462
      %v464 = vrcp.pop %v437
      %v465 = vmul.f32 1.0, %v464
      %v466 = vmul.f32 %v289, %v439
      %v467 = vmul.f32 %v296, %v441
      %v468 = vmul.f32 %v303, %v443
      %v469 = vmul.f32 %v310, %v445
      %v470 = vmul.f32 %v317, %v447
      %v471 = vmul.f32 %v324, %v449
      %v472 = vmul.f32 %v331, %v451
      %v473 = vmul.f32 %v338, %v453
      %v474 = vmul.f32 %v345, %v455
      %v475 = vmul.f32 %v352, %v457
      %v476 = vmul.f32 %v359, %v459
      %v477 = vmul.f32 %v366, %v461
      %v478 = vmul.f32 %v373, %v463
      %v479 = vmul.f32 %v381, %v465
      %480 = vst.msk [vmem:[#allocation2] sm:$0xff] %vm282, %v466
      %481 = vst.msk [vmem:[#allocation2 + $0x8] sm:$0xff] %vm282, %v467
      %482 = vst.msk [vmem:[#allocation2 + $0x10] sm:$0xff] %vm282, %v468
      %483 = vst.msk [vmem:[#allocation2 + $0x18] sm:$0xff] %vm282, %v469
      %484 = vst.msk [vmem:[#allocation2 + $0x20] sm:$0xff] %vm282, %v470
      %485 = vst.msk [vmem:[#allocation2 + $0x28] sm:$0xff] %vm282, %v471
      %486 = vst.msk [vmem:[#allocation2 + $0x30] sm:$0xff] %vm282, %v472
      %487 = vst.msk [vmem:[#allocation2 + $0x38] sm:$0xff] %vm282, %v473
      %488 = vst.msk [vmem:[#allocation2 + $0x40] sm:$0xff] %vm282, %v474
      %489 = vst.msk [vmem:[#allocation2 + $0x48] sm:$0xff] %vm282, %v475
      %490 = vst.msk [vmem:[#allocation2 + $0x50] sm:$0xff] %vm282, %v476
      %491 = vst.msk [vmem:[#allocation2 + $0x58] sm:$0xff] %vm282, %v477
      %492 = vst.msk [vmem:[#allocation2 + $0x60] sm:$0xff] %vm282, %v478
      %493 = vst.msk [vmem:[#allocation2 + $0x68] sm:$0x3f] %vm374, %v479
      %v494 = vmul.f32 %v289, 0.75
      %v495 = vmul.f32 %v296, 0.75
      %v496 = vmul.f32 %v303, 0.75
      %v497 = vmul.f32 %v310, 0.75
      %v498 = vmul.f32 %v317, 0.75
      %v499 = vmul.f32 %v324, 0.75
      %v500 = vmul.f32 %v331, 0.75
      %v501 = vmul.f32 %v338, 0.75
      %v502 = vmul.f32 %v345, 0.75
      %v503 = vmul.f32 %v352, 0.75
      %v504 = vmul.f32 %v359, 0.75
      %v505 = vmul.f32 %v366, 0.75
      %v506 = vmul.f32 %v373, 0.75
      %v507 = vmul.f32 %v381, 0.75
      %v508 = vsub.f32 %v494, -1.5
      %v509 = vsub.f32 %v495, -1.5
      %v510 = vsub.f32 %v496, -1.5
      %v511 = vsub.f32 %v497, -1.5
      %v512 = vsub.f32 %v498, -1.5
      %v513 = vsub.f32 %v499, -1.5
      %v514 = vsub.f32 %v500, -1.5
      %v515 = vsub.f32 %v501, -1.5
      %v516 = vsub.f32 %v502, -1.5
      %v517 = vsub.f32 %v503, -1.5
      %v518 = vsub.f32 %v504, -1.5
      %v519 = vsub.f32 %v505, -1.5
      %v520 = vsub.f32 %v506, -1.5
      %v521 = vsub.f32 %v507, -1.5
      %v522 = vmul.f32 %v508, %v508
      %v523 = vmul.f32 %v509, %v509
      %v524 = vmul.f32 %v510, %v510
      %v525 = vmul.f32 %v511, %v511
      %v526 = vmul.f32 %v512, %v512
      %v527 = vmul.f32 %v513, %v513
      %v528 = vmul.f32 %v514, %v514
      %v529 = vmul.f32 %v515, %v515
      %v530 = vmul.f32 %v516, %v516
      %v531 = vmul.f32 %v517, %v517
      %v532 = vmul.f32 %v518, %v518
      %v533 = vmul.f32 %v519, %v519
      %v534 = vmul.f32 %v520, %v520
      %v535 = vmul.f32 %v521, %v521
      %v536 = vsub.f32 0.0, %v522
      %v537 = vsub.f32 0.0, %v523
      %v538 = vsub.f32 0.0, %v524
      %v539 = vsub.f32 0.0, %v525
      %v540 = vsub.f32 0.0, %v526
      %v541 = vsub.f32 0.0, %v527
      %v542 = vsub.f32 0.0, %v528
      %v543 = vsub.f32 0.0, %v529
      %v544 = vsub.f32 0.0, %v530
      %v545 = vsub.f32 0.0, %v531
      %v546 = vsub.f32 0.0, %v532
      %v547 = vsub.f32 0.0, %v533
      %v548 = vsub.f32 0.0, %v534
      %v549 = vsub.f32 0.0, %v535
      %v550 = vmul.f32 %v536, 1.442695
      %v551 = vpow.pop %v550
      %v552 = vmul.f32 %v537, 1.442695
      %v553 = vpow.pop %v552
      %v554 = vmul.f32 %v538, 1.442695
      %v555 = vpow.pop %v554
      %v556 = vmul.f32 %v539, 1.442695
      %v557 = vpow.pop %v556
      %v558 = vmul.f32 %v540, 1.442695
      %v559 = vpow.pop %v558
      %v560 = vmul.f32 %v541, 1.442695
      %v561 = vpow.pop %v560
      %v562 = vmul.f32 %v542, 1.442695
      %v563 = vpow.pop %v562
      %v564 = vmul.f32 %v543, 1.442695
      %v565 = vpow.pop %v564
      %v566 = vmul.f32 %v544, 1.442695
      %v567 = vpow.pop %v566
      %v568 = vmul.f32 %v545, 1.442695
      %v569 = vpow.pop %v568
      %v570 = vmul.f32 %v546, 1.442695
      %v571 = vpow.pop %v570
      %v572 = vmul.f32 %v547, 1.442695
      %v573 = vpow.pop %v572
      %v574 = vmul.f32 %v548, 1.442695
      %v575 = vpow.pop %v574
      %v576 = vmul.f32 %v549, 1.442695
      %v577 = vpow.pop %v576
      %592 = vrot.lane.b32.xlu0 %v551, 4
      %v593 = vpop.permute.xlu0 %592
      %594 = vrot.lane.b32.xlu0 %v553, 4
      %v595 = vpop.permute.xlu0 %594
      %596 = vrot.lane.b32.xlu0 %v555, 4
      %v597 = vpop.permute.xlu0 %596
      %598 = vrot.lane.b32.xlu0 %v557, 4
      %v599 = vpop.permute.xlu0 %598
      %600 = vrot.lane.b32.xlu0 %v559, 4
      %v601 = vpop.permute.xlu0 %600
      %602 = vrot.lane.b32.xlu0 %v561, 4
      %v603 = vpop.permute.xlu0 %602
      %604 = vrot.lane.b32.xlu0 %v563, 4
      %v605 = vpop.permute.xlu0 %604
      %606 = vrot.lane.b32.xlu0 %v565, 4
      %v607 = vpop.permute.xlu0 %606
      %608 = vrot.lane.b32.xlu0 %v567, 4
      %v609 = vpop.permute.xlu0 %608
      %610 = vrot.lane.b32.xlu0 %v569, 4
      %v611 = vpop.permute.xlu0 %610
      %612 = vrot.lane.b32.xlu0 %v571, 4
      %v613 = vpop.permute.xlu0 %612
      %614 = vrot.lane.b32.xlu0 %v573, 4
      %v615 = vpop.permute.xlu0 %614
      %616 = vrot.lane.b32.xlu0 %v575, 4
      %v617 = vpop.permute.xlu0 %616
      %618 = vrot.lane.b32.xlu0 %v577, 4
      %v619 = vpop.permute.xlu0 %618
      %vm634 = vcmask 64544
      %635 = vst.msk [vmem:[#allocation2] sm:$0xff] %vm634, %v593
      %636 = vst.msk [vmem:[#allocation2 + $0x8] sm:$0xff] %vm634, %v595
      %637 = vst.msk [vmem:[#allocation2 + $0x10] sm:$0xff] %vm634, %v597
      %638 = vst.msk [vmem:[#allocation2 + $0x18] sm:$0xff] %vm634, %v599
      %639 = vst.msk [vmem:[#allocation2 + $0x20] sm:$0xff] %vm634, %v601
      %640 = vst.msk [vmem:[#allocation2 + $0x28] sm:$0xff] %vm634, %v603
      %641 = vst.msk [vmem:[#allocation2 + $0x30] sm:$0xff] %vm634, %v605
      %642 = vst.msk [vmem:[#allocation2 + $0x38] sm:$0xff] %vm634, %v607
      %643 = vst.msk [vmem:[#allocation2 + $0x40] sm:$0xff] %vm634, %v609
      %644 = vst.msk [vmem:[#allocation2 + $0x48] sm:$0xff] %vm634, %v611
      %645 = vst.msk [vmem:[#allocation2 + $0x50] sm:$0xff] %vm634, %v613
      %646 = vst.msk [vmem:[#allocation2 + $0x58] sm:$0xff] %vm634, %v615
      %647 = vst.msk [vmem:[#allocation2 + $0x60] sm:$0xff] %vm634, %v617
      %vm648 = vcmask 62496
      %649 = vst.msk [vmem:[#allocation2 + $0x68] sm:$0x3f] %vm648, %v619
      %v650 = vsub.f32 %v494, -0.5
      %v651 = vsub.f32 %v495, -0.5
      %v652 = vsub.f32 %v496, -0.5
      %v653 = vsub.f32 %v497, -0.5
      %v654 = vsub.f32 %v498, -0.5
      %v655 = vsub.f32 %v499, -0.5
      %v656 = vsub.f32 %v500, -0.5
      %v657 = vsub.f32 %v501, -0.5
      %v658 = vsub.f32 %v502, -0.5
      %v659 = vsub.f32 %v503, -0.5
      %v660 = vsub.f32 %v504, -0.5
      %v661 = vsub.f32 %v505, -0.5
      %v662 = vsub.f32 %v506, -0.5
      %v663 = vsub.f32 %v507, -0.5
      %v664 = vmul.f32 %v650, %v650
      %v665 = vmul.f32 %v651, %v651
      %v666 = vmul.f32 %v652, %v652
      %v667 = vmul.f32 %v653, %v653
      %v668 = vmul.f32 %v654, %v654
      %v669 = vmul.f32 %v655, %v655
      %v670 = vmul.f32 %v656, %v656
      %v671 = vmul.f32 %v657, %v657
      %v672 = vmul.f32 %v658, %v658
      %v673 = vmul.f32 %v659, %v659
      %v674 = vmul.f32 %v660, %v660
      %v675 = vmul.f32 %v661, %v661
      %v676 = vmul.f32 %v662, %v662
      %v677 = vmul.f32 %v663, %v663
      %v678 = vsub.f32 0.0, %v664
      %v679 = vsub.f32 0.0, %v665
      %v680 = vsub.f32 0.0, %v666
      %v681 = vsub.f32 0.0, %v667
      %v682 = vsub.f32 0.0, %v668
      %v683 = vsub.f32 0.0, %v669
      %v684 = vsub.f32 0.0, %v670
      %v685 = vsub.f32 0.0, %v671
      %v686 = vsub.f32 0.0, %v672
      %v687 = vsub.f32 0.0, %v673
      %v688 = vsub.f32 0.0, %v674
      %v689 = vsub.f32 0.0, %v675
      %v690 = vsub.f32 0.0, %v676
      %v691 = vsub.f32 0.0, %v677
      %v692 = vmul.f32 %v678, 1.442695
      %v693 = vpow.pop %v692
      %v694 = vmul.f32 %v679, 1.442695
      %v695 = vpow.pop %v694
      %v696 = vmul.f32 %v680, 1.442695
      %v697 = vpow.pop %v696
      %v698 = vmul.f32 %v681, 1.442695
      %v699 = vpow.pop %v698
      %v700 = vmul.f32 %v682, 1.442695
      %v701 = vpow.pop %v700
      %v702 = vmul.f32 %v683, 1.442695
      %v703 = vpow.pop %v702
      %v704 = vmul.f32 %v684, 1.442695
      %v705 = vpow.pop %v704
      %v706 = vmul.f32 %v685, 1.442695
      %v707 = vpow.pop %v706
      %v708 = vmul.f32 %v686, 1.442695
      %v709 = vpow.pop %v708
      %v710 = vmul.f32 %v687, 1.442695
      %v711 = vpow.pop %v710
      %v712 = vmul.f32 %v688, 1.442695
      %v713 = vpow.pop %v712
      %v714 = vmul.f32 %v689, 1.442695
      %v715 = vpow.pop %v714
      %v716 = vmul.f32 %v690, 1.442695
      %v717 = vpow.pop %v716
      %v718 = vmul.f32 %v691, 1.442695
      %v719 = vpow.pop %v718
      %734 = vrot.lane.b32.xlu0 %v693, 8
      %v735 = vpop.permute.xlu0 %734
      %736 = vrot.lane.b32.xlu0 %v695, 8
      %v737 = vpop.permute.xlu0 %736
      %738 = vrot.lane.b32.xlu0 %v697, 8
      %v739 = vpop.permute.xlu0 %738
      %740 = vrot.lane.b32.xlu0 %v699, 8
      %v741 = vpop.permute.xlu0 %740
      %742 = vrot.lane.b32.xlu0 %v701, 8
      %v743 = vpop.permute.xlu0 %742
      %744 = vrot.lane.b32.xlu0 %v703, 8
      %v745 = vpop.permute.xlu0 %744
      %746 = vrot.lane.b32.xlu0 %v705, 8
      %v747 = vpop.permute.xlu0 %746
      %748 = vrot.lane.b32.xlu0 %v707, 8
      %v749 = vpop.permute.xlu0 %748
      %750 = vrot.lane.b32.xlu0 %v709, 8
      %v751 = vpop.permute.xlu0 %750
      %752 = vrot.lane.b32.xlu0 %v711, 8
      %v753 = vpop.permute.xlu0 %752
      %754 = vrot.lane.b32.xlu0 %v713, 8
      %v755 = vpop.permute.xlu0 %754
      %756 = vrot.lane.b32.xlu0 %v715, 8
      %v757 = vpop.permute.xlu0 %756
      %758 = vrot.lane.b32.xlu0 %v717, 8
      %v759 = vpop.permute.xlu0 %758
      %760 = vrot.lane.b32.xlu0 %v719, 8
      %v761 = vpop.permute.xlu0 %760
      %vm776 = vcmask 97344
      %777 = vst.msk [vmem:[#allocation2] sm:$0xff] %vm776, %v735
      %778 = vst.msk [vmem:[#allocation2 + $0x8] sm:$0xff] %vm776, %v737
      %779 = vst.msk [vmem:[#allocation2 + $0x10] sm:$0xff] %vm776, %v739
      %780 = vst.msk [vmem:[#allocation2 + $0x18] sm:$0xff] %vm776, %v741
      %781 = vst.msk [vmem:[#allocation2 + $0x20] sm:$0xff] %vm776, %v743
      %782 = vst.msk [vmem:[#allocation2 + $0x28] sm:$0xff] %vm776, %v745
      %783 = vst.msk [vmem:[#allocation2 + $0x30] sm:$0xff] %vm776, %v747
      %784 = vst.msk [vmem:[#allocation2 + $0x38] sm:$0xff] %vm776, %v749
      %785 = vst.msk [vmem:[#allocation2 + $0x40] sm:$0xff] %vm776, %v751
      %786 = vst.msk [vmem:[#allocation2 + $0x48] sm:$0xff] %vm776, %v753
      %787 = vst.msk [vmem:[#allocation2 + $0x50] sm:$0xff] %vm776, %v755
      %788 = vst.msk [vmem:[#allocation2 + $0x58] sm:$0xff] %vm776, %v757
      %789 = vst.msk [vmem:[#allocation2 + $0x60] sm:$0xff] %vm776, %v759
      %vm790 = vcmask 95296
      %791 = vst.msk [vmem:[#allocation2 + $0x68] sm:$0x3f] %vm790, %v761
      %v792 = vsub.f32 %v494, 0.5
      %v793 = vsub.f32 %v495, 0.5
      %v794 = vsub.f32 %v496, 0.5
      %v795 = vsub.f32 %v497, 0.5
      %v796 = vsub.f32 %v498, 0.5
      %v797 = vsub.f32 %v499, 0.5
      %v798 = vsub.f32 %v500, 0.5
      %v799 = vsub.f32 %v501, 0.5
      %v800 = vsub.f32 %v502, 0.5
      %v801 = vsub.f32 %v503, 0.5
      %v802 = vsub.f32 %v504, 0.5
      %v803 = vsub.f32 %v505, 0.5
      %v804 = vsub.f32 %v506, 0.5
      %v805 = vsub.f32 %v507, 0.5
      %v806 = vmul.f32 %v792, %v792
      %v807 = vmul.f32 %v793, %v793
      %v808 = vmul.f32 %v794, %v794
      %v809 = vmul.f32 %v795, %v795
      %v810 = vmul.f32 %v796, %v796
      %v811 = vmul.f32 %v797, %v797
      %v812 = vmul.f32 %v798, %v798
      %v813 = vmul.f32 %v799, %v799
      %v814 = vmul.f32 %v800, %v800
      %v815 = vmul.f32 %v801, %v801
      %v816 = vmul.f32 %v802, %v802
      %v817 = vmul.f32 %v803, %v803
      %v818 = vmul.f32 %v804, %v804
      %v819 = vmul.f32 %v805, %v805
      %v820 = vsub.f32 0.0, %v806
      %v821 = vsub.f32 0.0, %v807
      %v822 = vsub.f32 0.0, %v808
      %v823 = vsub.f32 0.0, %v809
      %v824 = vsub.f32 0.0, %v810
      %v825 = vsub.f32 0.0, %v811
      %v826 = vsub.f32 0.0, %v812
      %v827 = vsub.f32 0.0, %v813
      %v828 = vsub.f32 0.0, %v814
      %v829 = vsub.f32 0.0, %v815
      %v830 = vsub.f32 0.0, %v816
      %v831 = vsub.f32 0.0, %v817
      %v832 = vsub.f32 0.0, %v818
      %v833 = vsub.f32 0.0, %v819
      %v834 = vmul.f32 %v820, 1.442695
      %v835 = vpow.pop %v834
      %v836 = vmul.f32 %v821, 1.442695
      %v837 = vpow.pop %v836
      %v838 = vmul.f32 %v822, 1.442695
      %v839 = vpow.pop %v838
      %v840 = vmul.f32 %v823, 1.442695
      %v841 = vpow.pop %v840
      %v842 = vmul.f32 %v824, 1.442695
      %v843 = vpow.pop %v842
      %v844 = vmul.f32 %v825, 1.442695
      %v845 = vpow.pop %v844
      %v846 = vmul.f32 %v826, 1.442695
      %v847 = vpow.pop %v846
      %v848 = vmul.f32 %v827, 1.442695
      %v849 = vpow.pop %v848
      %v850 = vmul.f32 %v828, 1.442695
      %v851 = vpow.pop %v850
      %v852 = vmul.f32 %v829, 1.442695
      %v853 = vpow.pop %v852
      %v854 = vmul.f32 %v830, 1.442695
      %v855 = vpow.pop %v854
      %v856 = vmul.f32 %v831, 1.442695
      %v857 = vpow.pop %v856
      %v858 = vmul.f32 %v832, 1.442695
      %v859 = vpow.pop %v858
      %v860 = vmul.f32 %v833, 1.442695
      %v861 = vpow.pop %v860
      %876 = vrot.lane.b32.xlu0 %v835, 12
      %v877 = vpop.permute.xlu0 %876
      %878 = vrot.lane.b32.xlu0 %v837, 12
      %v879 = vpop.permute.xlu0 %878
      %880 = vrot.lane.b32.xlu0 %v839, 12
      %v881 = vpop.permute.xlu0 %880
      %882 = vrot.lane.b32.xlu0 %v841, 12
      %v883 = vpop.permute.xlu0 %882
      %884 = vrot.lane.b32.xlu0 %v843, 12
      %v885 = vpop.permute.xlu0 %884
      %886 = vrot.lane.b32.xlu0 %v845, 12
      %v887 = vpop.permute.xlu0 %886
      %888 = vrot.lane.b32.xlu0 %v847, 12
      %v889 = vpop.permute.xlu0 %888
      %890 = vrot.lane.b32.xlu0 %v849, 12
      %v891 = vpop.permute.xlu0 %890
      %892 = vrot.lane.b32.xlu0 %v851, 12
      %v893 = vpop.permute.xlu0 %892
      %894 = vrot.lane.b32.xlu0 %v853, 12
      %v895 = vpop.permute.xlu0 %894
      %896 = vrot.lane.b32.xlu0 %v855, 12
      %v897 = vpop.permute.xlu0 %896
      %898 = vrot.lane.b32.xlu0 %v857, 12
      %v899 = vpop.permute.xlu0 %898
      %900 = vrot.lane.b32.xlu0 %v859, 12
      %v901 = vpop.permute.xlu0 %900
      %902 = vrot.lane.b32.xlu0 %v861, 12
      %v903 = vpop.permute.xlu0 %902
      %vm918 = vcmask 130144
      %919 = vst.msk [vmem:[#allocation2] sm:$0xff] %vm918, %v877
      %920 = vst.msk [vmem:[#allocation2 + $0x8] sm:$0xff] %vm918, %v879
      %921 = vst.msk [vmem:[#allocation2 + $0x10] sm:$0xff] %vm918, %v881
      %922 = vst.msk [vmem:[#allocation2 + $0x18] sm:$0xff] %vm918, %v883
      %923 = vst.msk [vmem:[#allocation2 + $0x20] sm:$0xff] %vm918, %v885
      %924 = vst.msk [vmem:[#allocation2 + $0x28] sm:$0xff] %vm918, %v887
      %925 = vst.msk [vmem:[#allocation2 + $0x30] sm:$0xff] %vm918, %v889
      %926 = vst.msk [vmem:[#allocation2 + $0x38] sm:$0xff] %vm918, %v891
      %927 = vst.msk [vmem:[#allocation2 + $0x40] sm:$0xff] %vm918, %v893
      %928 = vst.msk [vmem:[#allocation2 + $0x48] sm:$0xff] %vm918, %v895
      %929 = vst.msk [vmem:[#allocation2 + $0x50] sm:$0xff] %vm918, %v897
      %930 = vst.msk [vmem:[#allocation2 + $0x58] sm:$0xff] %vm918, %v899
      %931 = vst.msk [vmem:[#allocation2 + $0x60] sm:$0xff] %vm918, %v901
      %vm932 = vcmask 128096
      %933 = vst.msk [vmem:[#allocation2 + $0x68] sm:$0x3f] %vm932, %v903
      %v934 = vsub.f32 %v494, 1.5
      %v935 = vsub.f32 %v495, 1.5
      %v936 = vsub.f32 %v496, 1.5
      %v937 = vsub.f32 %v497, 1.5
      %v938 = vsub.f32 %v498, 1.5
      %v939 = vsub.f32 %v499, 1.5
      %v940 = vsub.f32 %v500, 1.5
      %v941 = vsub.f32 %v501, 1.5
      %v942 = vsub.f32 %v502, 1.5
      %v943 = vsub.f32 %v503, 1.5
      %v944 = vsub.f32 %v504, 1.5
      %v945 = vsub.f32 %v505, 1.5
      %v946 = vsub.f32 %v506, 1.5
      %v947 = vsub.f32 %v507, 1.5
      %v948 = vmul.f32 %v934, %v934
      %v949 = vmul.f32 %v935, %v935
      %v950 = vmul.f32 %v936, %v936
      %v951 = vmul.f32 %v937, %v937
      %v952 = vmul.f32 %v938, %v938
      %v953 = vmul.f32 %v939, %v939
      %v954 = vmul.f32 %v940, %v940
      %v955 = vmul.f32 %v941, %v941
      %v956 = vmul.f32 %v942, %v942
      %v957 = vmul.f32 %v943, %v943
      %v958 = vmul.f32 %v944, %v944
      %v959 = vmul.f32 %v945, %v945
      %v960 = vmul.f32 %v946, %v946
      %v961 = vmul.f32 %v947, %v947
      %v962 = vsub.f32 0.0, %v948
      %v963 = vsub.f32 0.0, %v949
      %v964 = vsub.f32 0.0, %v950
      %v965 = vsub.f32 0.0, %v951
      %v966 = vsub.f32 0.0, %v952
      %v967 = vsub.f32 0.0, %v953
      %v968 = vsub.f32 0.0, %v954
      %v969 = vsub.f32 0.0, %v955
      %v970 = vsub.f32 0.0, %v956
      %v971 = vsub.f32 0.0, %v957
      %v972 = vsub.f32 0.0, %v958
      %v973 = vsub.f32 0.0, %v959
      %v974 = vsub.f32 0.0, %v960
      %v975 = vsub.f32 0.0, %v961
      %v976 = vmul.f32 %v962, 1.442695
      %v977 = vpow.pop %v976
      %v978 = vmul.f32 %v963, 1.442695
      %v979 = vpow.pop %v978
      %v980 = vmul.f32 %v964, 1.442695
      %v981 = vpow.pop %v980
      %v982 = vmul.f32 %v965, 1.442695
      %v983 = vpow.pop %v982
      %v984 = vmul.f32 %v966, 1.442695
      %v985 = vpow.pop %v984
      %v986 = vmul.f32 %v967, 1.442695
      %v987 = vpow.pop %v986
      %v988 = vmul.f32 %v968, 1.442695
      %v989 = vpow.pop %v988
      %v990 = vmul.f32 %v969, 1.442695
      %v991 = vpow.pop %v990
      %v992 = vmul.f32 %v970, 1.442695
      %v993 = vpow.pop %v992
      %v994 = vmul.f32 %v971, 1.442695
      %v995 = vpow.pop %v994
      %v996 = vmul.f32 %v972, 1.442695
      %v997 = vpow.pop %v996
      %v998 = vmul.f32 %v973, 1.442695
      %v999 = vpow.pop %v998
      %v1000 = vmul.f32 %v974, 1.442695
      %v1001 = vpow.pop %v1000
      %v1002 = vmul.f32 %v975, 1.442695
      %v1003 = vpow.pop %v1002
      %1018 = vrot.lane.b32.xlu0 %v977, 16
      %v1019 = vpop.permute.xlu0 %1018
      %1020 = vrot.lane.b32.xlu0 %v979, 16
      %v1021 = vpop.permute.xlu0 %1020
      %1022 = vrot.lane.b32.xlu0 %v981, 16
      %v1023 = vpop.permute.xlu0 %1022
      %1024 = vrot.lane.b32.xlu0 %v983, 16
      %v1025 = vpop.permute.xlu0 %1024
      %1026 = vrot.lane.b32.xlu0 %v985, 16
      %v1027 = vpop.permute.xlu0 %1026
      %1028 = vrot.lane.b32.xlu0 %v987, 16
      %v1029 = vpop.permute.xlu0 %1028
      %1030 = vrot.lane.b32.xlu0 %v989, 16
      %v1031 = vpop.permute.xlu0 %1030
      %1032 = vrot.lane.b32.xlu0 %v991, 16
      %v1033 = vpop.permute.xlu0 %1032
      %1034 = vrot.lane.b32.xlu0 %v993, 16
      %v1035 = vpop.permute.xlu0 %1034
      %1036 = vrot.lane.b32.xlu0 %v995, 16
      %v1037 = vpop.permute.xlu0 %1036
      %1038 = vrot.lane.b32.xlu0 %v997, 16
      %v1039 = vpop.permute.xlu0 %1038
      %1040 = vrot.lane.b32.xlu0 %v999, 16
      %v1041 = vpop.permute.xlu0 %1040
      %1042 = vrot.lane.b32.xlu0 %v1001, 16
      %v1043 = vpop.permute.xlu0 %1042
      %1044 = vrot.lane.b32.xlu0 %v1003, 16
      %v1045 = vpop.permute.xlu0 %1044
      %vm1060 = vcmask 162944
      %1061 = vst.msk [vmem:[#allocation2] sm:$0xff] %vm1060, %v1019
      %1062 = vst.msk [vmem:[#allocation2 + $0x8] sm:$0xff] %vm1060, %v1021
      %1063 = vst.msk [vmem:[#allocation2 + $0x10] sm:$0xff] %vm1060, %v1023
      %1064 = vst.msk [vmem:[#allocation2 + $0x18] sm:$0xff] %vm1060, %v1025
      %1065 = vst.msk [vmem:[#allocation2 + $0x20] sm:$0xff] %vm1060, %v1027
      %1066 = vst.msk [vmem:[#allocation2 + $0x28] sm:$0xff] %vm1060, %v1029
      %1067 = vst.msk [vmem:[#allocation2 + $0x30] sm:$0xff] %vm1060, %v1031
      %1068 = vst.msk [vmem:[#allocation2 + $0x38] sm:$0xff] %vm1060, %v1033
      %1069 = vst.msk [vmem:[#allocation2 + $0x40] sm:$0xff] %vm1060, %v1035
      %1070 = vst.msk [vmem:[#allocation2 + $0x48] sm:$0xff] %vm1060, %v1037
      %1071 = vst.msk [vmem:[#allocation2 + $0x50] sm:$0xff] %vm1060, %v1039
      %1072 = vst.msk [vmem:[#allocation2 + $0x58] sm:$0xff] %vm1060, %v1041
      %1073 = vst.msk [vmem:[#allocation2 + $0x60] sm:$0xff] %vm1060, %v1043
      %vm1074 = vcmask 160896
      %1075 = vst.msk [vmem:[#allocation2 + $0x68] sm:$0x3f] %vm1074, %v1045
      %v1076 = vld [vmem:[#allocation2] sm:$0xff]
      %v1077 = vld [vmem:[#allocation2 + $0x8] sm:$0xff]
      %v1078 = vld [vmem:[#allocation2 + $0x10] sm:$0xff]
      %v1079 = vld [vmem:[#allocation2 + $0x18] sm:$0xff]
      %v1080 = vld [vmem:[#allocation2 + $0x20] sm:$0xff]
      %v1081 = vld [vmem:[#allocation2 + $0x28] sm:$0xff]
      %v1082 = vld [vmem:[#allocation2 + $0x30] sm:$0xff]
      %v1083 = vld [vmem:[#allocation2 + $0x38] sm:$0xff]
      %v1084 = vld [vmem:[#allocation2 + $0x40] sm:$0xff]
      %v1085 = vld [vmem:[#allocation2 + $0x48] sm:$0xff]
      %vm1086 = vcmask 162816
      %1087 = vst.msk [vmem:[#allocation3] sm:$0xff] %vm1086, %v1076
      %1088 = vst.msk [vmem:[#allocation3 + $0x10] sm:$0xff] %vm1086, %v1077
      %1089 = vst.msk [vmem:[#allocation3 + $0x20] sm:$0xff] %vm1086, %v1078
      %1090 = vst.msk [vmem:[#allocation3 + $0x30] sm:$0xff] %vm1086, %v1079
      %1091 = vst.msk [vmem:[#allocation3 + $0x40] sm:$0xff] %vm1086, %v1080
      %1092 = vst.msk [vmem:[#allocation3 + $0x50] sm:$0xff] %vm1086, %v1081
      %1093 = vst.msk [vmem:[#allocation3 + $0x60] sm:$0xff] %vm1086, %v1082
      %1094 = vst.msk [vmem:[#allocation3 + $0x70] sm:$0xff] %vm1086, %v1083
      %1095 = vst.msk [vmem:[#allocation3 + $0x80] sm:$0xff] %vm1086, %v1084
      %1096 = vst.msk [vmem:[#allocation3 + $0x90] sm:$0xff] %vm1086, %v1085
      %v1097 = vld [vmem:[#allocation2 + $0x1] sm:$0xff]
      %v1098 = vld [vmem:[#allocation2 + $0x9] sm:$0xff]
      %v1099 = vld [vmem:[#allocation2 + $0x11] sm:$0xff]
      %v1100 = vld [vmem:[#allocation2 + $0x19] sm:$0xff]
      %v1101 = vld [vmem:[#allocation2 + $0x21] sm:$0xff]
      %v1102 = vld [vmem:[#allocation2 + $0x29] sm:$0xff]
      %v1103 = vld [vmem:[#allocation2 + $0x31] sm:$0xff]
      %v1104 = vld [vmem:[#allocation2 + $0x39] sm:$0xff]
      %v1105 = vld [vmem:[#allocation2 + $0x41] sm:$0xff]
      %v1106 = vld [vmem:[#allocation2 + $0x49] sm:$0xff]
      %1117 = vrot.lane.b32.xlu0 %v1097, 20
      %v1118 = vpop.permute.xlu0 %1117
      %1119 = vrot.lane.b32.xlu0 %v1098, 20
      %v1120 = vpop.permute.xlu0 %1119
      %1121 = vrot.lane.b32.xlu0 %v1099, 20
      %v1122 = vpop.permute.xlu0 %1121
      %1123 = vrot.lane.b32.xlu0 %v1100, 20
      %v1124 = vpop.permute.xlu0 %1123
      %1125 = vrot.lane.b32.xlu0 %v1101, 20
      %v1126 = vpop.permute.xlu0 %1125
      %1127 = vrot.lane.b32.xlu0 %v1102, 20
      %v1128 = vpop.permute.xlu0 %1127
      %1129 = vrot.lane.b32.xlu0 %v1103, 20
      %v1130 = vpop.permute.xlu0 %1129
      %1131 = vrot.lane.b32.xlu0 %v1104, 20
      %v1132 = vpop.permute.xlu0 %1131
      %1133 = vrot.lane.b32.xlu0 %v1105, 20
      %v1134 = vpop.permute.xlu0 %1133
      %1135 = vrot.lane.b32.xlu0 %v1106, 20
      %v1136 = vpop.permute.xlu0 %1135
      %vm1147 = vcmask 326816
      %1148 = vst.msk [vmem:[#allocation3] sm:$0xff] %vm1147, %v1118
      %1149 = vst.msk [vmem:[#allocation3 + $0x10] sm:$0xff] %vm1147, %v1120
      %1150 = vst.msk [vmem:[#allocation3 + $0x20] sm:$0xff] %vm1147, %v1122
      %1151 = vst.msk [vmem:[#allocation3 + $0x30] sm:$0xff] %vm1147, %v1124
      %1152 = vst.msk [vmem:[#allocation3 + $0x40] sm:$0xff] %vm1147, %v1126
      %1153 = vst.msk [vmem:[#allocation3 + $0x50] sm:$0xff] %vm1147, %v1128
      %1154 = vst.msk [vmem:[#allocation3 + $0x60] sm:$0xff] %vm1147, %v1130
      %1155 = vst.msk [vmem:[#allocation3 + $0x70] sm:$0xff] %vm1147, %v1132
      %1156 = vst.msk [vmem:[#allocation3 + $0x80] sm:$0xff] %vm1147, %v1134
      %1157 = vst.msk [vmem:[#allocation3 + $0x90] sm:$0xff] %vm1147, %v1136
      %v1158 = vld [vmem:[#allocation2 + $0x2] sm:$0xff]
      %v1159 = vld [vmem:[#allocation2 + $0xa] sm:$0xff]
      %v1160 = vld [vmem:[#allocation2 + $0x12] sm:$0xff]
      %v1161 = vld [vmem:[#allocation2 + $0x1a] sm:$0xff]
      %v1162 = vld [vmem:[#allocation2 + $0x22] sm:$0xff]
      %v1163 = vld [vmem:[#allocation2 + $0x2a] sm:$0xff]
      %v1164 = vld [vmem:[#allocation2 + $0x32] sm:$0xff]
      %v1165 = vld [vmem:[#allocation2 + $0x3a] sm:$0xff]
      %v1166 = vld [vmem:[#allocation2 + $0x42] sm:$0xff]
      %v1167 = vld [vmem:[#allocation2 + $0x4a] sm:$0xff]
      %1178 = vrot.lane.b32.xlu0 %v1158, 40
      %v1179 = vpop.permute.xlu0 %1178
      %1180 = vrot.lane.b32.xlu0 %v1159, 40
      %v1181 = vpop.permute.xlu0 %1180
      %1182 = vrot.lane.b32.xlu0 %v1160, 40
      %v1183 = vpop.permute.xlu0 %1182
      %1184 = vrot.lane.b32.xlu0 %v1161, 40
      %v1185 = vpop.permute.xlu0 %1184
      %1186 = vrot.lane.b32.xlu0 %v1162, 40
      %v1187 = vpop.permute.xlu0 %1186
      %1188 = vrot.lane.b32.xlu0 %v1163, 40
      %v1189 = vpop.permute.xlu0 %1188
      %1190 = vrot.lane.b32.xlu0 %v1164, 40
      %v1191 = vpop.permute.xlu0 %1190
      %1192 = vrot.lane.b32.xlu0 %v1165, 40
      %v1193 = vpop.permute.xlu0 %1192
      %1194 = vrot.lane.b32.xlu0 %v1166, 40
      %v1195 = vpop.permute.xlu0 %1194
      %1196 = vrot.lane.b32.xlu0 %v1167, 40
      %v1197 = vpop.permute.xlu0 %1196
      %vm1208 = vcmask 490816
      %1209 = vst.msk [vmem:[#allocation3] sm:$0xff] %vm1208, %v1179
      %1210 = vst.msk [vmem:[#allocation3 + $0x10] sm:$0xff] %vm1208, %v1181
      %1211 = vst.msk [vmem:[#allocation3 + $0x20] sm:$0xff] %vm1208, %v1183
      %1212 = vst.msk [vmem:[#allocation3 + $0x30] sm:$0xff] %vm1208, %v1185
      %1213 = vst.msk [vmem:[#allocation3 + $0x40] sm:$0xff] %vm1208, %v1187
      %1214 = vst.msk [vmem:[#allocation3 + $0x50] sm:$0xff] %vm1208, %v1189
      %1215 = vst.msk [vmem:[#allocation3 + $0x60] sm:$0xff] %vm1208, %v1191
      %1216 = vst.msk [vmem:[#allocation3 + $0x70] sm:$0xff] %vm1208, %v1193
      %1217 = vst.msk [vmem:[#allocation3 + $0x80] sm:$0xff] %vm1208, %v1195
      %1218 = vst.msk [vmem:[#allocation3 + $0x90] sm:$0xff] %vm1208, %v1197
      %v1219 = vld [vmem:[#allocation2 + $0xa] sm:$0xff]
      %v1220 = vld [vmem:[#allocation2 + $0x12] sm:$0xff]
      %v1221 = vld [vmem:[#allocation2 + $0x1a] sm:$0xff]
      %v1222 = vld [vmem:[#allocation2 + $0x22] sm:$0xff]
      %v1223 = vld [vmem:[#allocation2 + $0x2a] sm:$0xff]
      %v1224 = vld [vmem:[#allocation2 + $0x32] sm:$0xff]
      %v1225 = vld [vmem:[#allocation2 + $0x3a] sm:$0xff]
      %v1226 = vld [vmem:[#allocation2 + $0x42] sm:$0xff]
      %v1227 = vld [vmem:[#allocation2 + $0x4a] sm:$0xff]
      %v1228 = vld [vmem:[#allocation2 + $0x52] sm:$0xff]
      %1239 = vrot.lane.b32.xlu0 %v1219, 60
      %v1240 = vpop.permute.xlu0 %1239
      %1241 = vrot.lane.b32.xlu0 %v1220, 60
      %v1242 = vpop.permute.xlu0 %1241
      %1243 = vrot.lane.b32.xlu0 %v1221, 60
      %v1244 = vpop.permute.xlu0 %1243
      %1245 = vrot.lane.b32.xlu0 %v1222, 60
      %v1246 = vpop.permute.xlu0 %1245
      %1247 = vrot.lane.b32.xlu0 %v1223, 60
      %v1248 = vpop.permute.xlu0 %1247
      %1249 = vrot.lane.b32.xlu0 %v1224, 60
      %v1250 = vpop.permute.xlu0 %1249
      %1251 = vrot.lane.b32.xlu0 %v1225, 60
      %v1252 = vpop.permute.xlu0 %1251
      %1253 = vrot.lane.b32.xlu0 %v1226, 60
      %v1254 = vpop.permute.xlu0 %1253
      %1255 = vrot.lane.b32.xlu0 %v1227, 60
      %v1256 = vpop.permute.xlu0 %1255
      %1257 = vrot.lane.b32.xlu0 %v1228, 60
      %v1258 = vpop.permute.xlu0 %1257
      %vm1269 = vcmask 654816
      %1270 = vst.msk [vmem:[#allocation3] sm:$0xff] %vm1269, %v1240
      %1271 = vst.msk [vmem:[#allocation3 + $0x10] sm:$0xff] %vm1269, %v1242
      %1272 = vst.msk [vmem:[#allocation3 + $0x20] sm:$0xff] %vm1269, %v1244
      %1273 = vst.msk [vmem:[#allocation3 + $0x30] sm:$0xff] %vm1269, %v1246
      %1274 = vst.msk [vmem:[#allocation3 + $0x40] sm:$0xff] %vm1269, %v1248
      %1275 = vst.msk [vmem:[#allocation3 + $0x50] sm:$0xff] %vm1269, %v1250
      %1276 = vst.msk [vmem:[#allocation3 + $0x60] sm:$0xff] %vm1269, %v1252
      %1277 = vst.msk [vmem:[#allocation3 + $0x70] sm:$0xff] %vm1269, %v1254
      %1278 = vst.msk [vmem:[#allocation3 + $0x80] sm:$0xff] %vm1269, %v1256
      %1279 = vst.msk [vmem:[#allocation3 + $0x90] sm:$0xff] %vm1269, %v1258
      %v1280 = vld [vmem:[#allocation2 + $0xb] sm:$0xff]
      %v1281 = vld [vmem:[#allocation2 + $0x13] sm:$0xff]
      %v1282 = vld [vmem:[#allocation2 + $0x1b] sm:$0xff]
      %v1283 = vld [vmem:[#allocation2 + $0x23] sm:$0xff]
      %v1284 = vld [vmem:[#allocation2 + $0x2b] sm:$0xff]
      %v1285 = vld [vmem:[#allocation2 + $0x33] sm:$0xff]
      %v1286 = vld [vmem:[#allocation2 + $0x3b] sm:$0xff]
      %v1287 = vld [vmem:[#allocation2 + $0x43] sm:$0xff]
      %v1288 = vld [vmem:[#allocation2 + $0x4b] sm:$0xff]
      %v1289 = vld [vmem:[#allocation2 + $0x53] sm:$0xff]
      %1300 = vrot.lane.b32.xlu0 %v1280, 80
      %v1301 = vpop.permute.xlu0 %1300
      %1302 = vrot.lane.b32.xlu0 %v1281, 80
      %v1303 = vpop.permute.xlu0 %1302
      %1304 = vrot.lane.b32.xlu0 %v1282, 80
      %v1305 = vpop.permute.xlu0 %1304
      %1306 = vrot.lane.b32.xlu0 %v1283, 80
      %v1307 = vpop.permute.xlu0 %1306
      %1308 = vrot.lane.b32.xlu0 %v1284, 80
      %v1309 = vpop.permute.xlu0 %1308
      %1310 = vrot.lane.b32.xlu0 %v1285, 80
      %v1311 = vpop.permute.xlu0 %1310
      %1312 = vrot.lane.b32.xlu0 %v1286, 80
      %v1313 = vpop.permute.xlu0 %1312
      %1314 = vrot.lane.b32.xlu0 %v1287, 80
      %v1315 = vpop.permute.xlu0 %1314
      %1316 = vrot.lane.b32.xlu0 %v1288, 80
      %v1317 = vpop.permute.xlu0 %1316
      %1318 = vrot.lane.b32.xlu0 %v1289, 80
      %v1319 = vpop.permute.xlu0 %1318
      %vm1330 = vcmask 818816
      %1331 = vst.msk [vmem:[#allocation3] sm:$0xff] %vm1330, %v1301
      %1332 = vst.msk [vmem:[#allocation3 + $0x10] sm:$0xff] %vm1330, %v1303
      %1333 = vst.msk [vmem:[#allocation3 + $0x20] sm:$0xff] %vm1330, %v1305
      %1334 = vst.msk [vmem:[#allocation3 + $0x30] sm:$0xff] %vm1330, %v1307
      %1335 = vst.msk [vmem:[#allocation3 + $0x40] sm:$0xff] %vm1330, %v1309
      %1336 = vst.msk [vmem:[#allocation3 + $0x50] sm:$0xff] %vm1330, %v1311
      %1337 = vst.msk [vmem:[#allocation3 + $0x60] sm:$0xff] %vm1330, %v1313
      %1338 = vst.msk [vmem:[#allocation3 + $0x70] sm:$0xff] %vm1330, %v1315
      %1339 = vst.msk [vmem:[#allocation3 + $0x80] sm:$0xff] %vm1330, %v1317
      %1340 = vst.msk [vmem:[#allocation3 + $0x90] sm:$0xff] %vm1330, %v1319
      %v1341 = vld [vmem:[#allocation2 + $0xc] sm:$0xff]
      %v1342 = vld [vmem:[#allocation2 + $0x14] sm:$0xff]
      %v1343 = vld [vmem:[#allocation2 + $0x1c] sm:$0xff]
      %v1344 = vld [vmem:[#allocation2 + $0x24] sm:$0xff]
      %v1345 = vld [vmem:[#allocation2 + $0x2c] sm:$0xff]
      %v1346 = vld [vmem:[#allocation2 + $0x34] sm:$0xff]
      %v1347 = vld [vmem:[#allocation2 + $0x3c] sm:$0xff]
      %v1348 = vld [vmem:[#allocation2 + $0x44] sm:$0xff]
      %v1349 = vld [vmem:[#allocation2 + $0x4c] sm:$0xff]
      %v1350 = vld [vmem:[#allocation2 + $0x54] sm:$0xff]
      %1361 = vrot.lane.b32.xlu0 %v1341, 100
      %v1362 = vpop.permute.xlu0 %1361
      %1363 = vrot.lane.b32.xlu0 %v1342, 100
      %v1364 = vpop.permute.xlu0 %1363
      %1365 = vrot.lane.b32.xlu0 %v1343, 100
      %v1366 = vpop.permute.xlu0 %1365
      %1367 = vrot.lane.b32.xlu0 %v1344, 100
      %v1368 = vpop.permute.xlu0 %1367
      %1369 = vrot.lane.b32.xlu0 %v1345, 100
      %v1370 = vpop.permute.xlu0 %1369
      %1371 = vrot.lane.b32.xlu0 %v1346, 100
      %v1372 = vpop.permute.xlu0 %1371
      %1373 = vrot.lane.b32.xlu0 %v1347, 100
      %v1374 = vpop.permute.xlu0 %1373
      %1375 = vrot.lane.b32.xlu0 %v1348, 100
      %v1376 = vpop.permute.xlu0 %1375
      %1377 = vrot.lane.b32.xlu0 %v1349, 100
      %v1378 = vpop.permute.xlu0 %1377
      %1379 = vrot.lane.b32.xlu0 %v1350, 100
      %v1380 = vpop.permute.xlu0 %1379
      %vm1391 = vcmask 982816
      %1392 = vst.msk [vmem:[#allocation3] sm:$0xff] %vm1391, %v1362
      %1393 = vst.msk [vmem:[#allocation3 + $0x10] sm:$0xff] %vm1391, %v1364
      %1394 = vst.msk [vmem:[#allocation3 + $0x20] sm:$0xff] %vm1391, %v1366
      %1395 = vst.msk [vmem:[#allocation3 + $0x30] sm:$0xff] %vm1391, %v1368
      %1396 = vst.msk [vmem:[#allocation3 + $0x40] sm:$0xff] %vm1391, %v1370
      %1397 = vst.msk [vmem:[#allocation3 + $0x50] sm:$0xff] %vm1391, %v1372
      %1398 = vst.msk [vmem:[#allocation3 + $0x60] sm:$0xff] %vm1391, %v1374
      %1399 = vst.msk [vmem:[#allocation3 + $0x70] sm:$0xff] %vm1391, %v1376
      %1400 = vst.msk [vmem:[#allocation3 + $0x80] sm:$0xff] %vm1391, %v1378
      %1401 = vst.msk [vmem:[#allocation3 + $0x90] sm:$0xff] %vm1391, %v1380
      %v1402 = vld [vmem:[#allocation2 + $0x14] sm:$0xff]
      %v1403 = vld [vmem:[#allocation2 + $0x1c] sm:$0xff]
      %v1404 = vld [vmem:[#allocation2 + $0x24] sm:$0xff]
      %v1405 = vld [vmem:[#allocation2 + $0x2c] sm:$0xff]
      %v1406 = vld [vmem:[#allocation2 + $0x34] sm:$0xff]
      %v1407 = vld [vmem:[#allocation2 + $0x3c] sm:$0xff]
      %v1408 = vld [vmem:[#allocation2 + $0x44] sm:$0xff]
      %v1409 = vld [vmem:[#allocation2 + $0x4c] sm:$0xff]
      %v1410 = vld [vmem:[#allocation2 + $0x54] sm:$0xff]
      %v1411 = vld [vmem:[#allocation2 + $0x5c] sm:$0xff]
      %1422 = vrot.lane.b32.xlu0 %v1402, 120
      %v1423 = vpop.permute.xlu0 %1422
      %1424 = vrot.lane.b32.xlu0 %v1403, 120
      %v1425 = vpop.permute.xlu0 %1424
      %1426 = vrot.lane.b32.xlu0 %v1404, 120
      %v1427 = vpop.permute.xlu0 %1426
      %1428 = vrot.lane.b32.xlu0 %v1405, 120
      %v1429 = vpop.permute.xlu0 %1428
      %1430 = vrot.lane.b32.xlu0 %v1406, 120
      %v1431 = vpop.permute.xlu0 %1430
      %1432 = vrot.lane.b32.xlu0 %v1407, 120
      %v1433 = vpop.permute.xlu0 %1432
      %1434 = vrot.lane.b32.xlu0 %v1408, 120
      %v1435 = vpop.permute.xlu0 %1434
      %1436 = vrot.lane.b32.xlu0 %v1409, 120
      %v1437 = vpop.permute.xlu0 %1436
      %1438 = vrot.lane.b32.xlu0 %v1410, 120
      %v1439 = vpop.permute.xlu0 %1438
      %1440 = vrot.lane.b32.xlu0 %v1411, 120
      %v1441 = vpop.permute.xlu0 %1440
      %vm1452 = vcmask 1048512
      %1453 = vst.msk [vmem:[#allocation3] sm:$0xff] %vm1452, %v1423
      %vm1454 = vcmask 97280
      %1455 = vst.msk [vmem:[#allocation3 + $0x8] sm:$0xff] %vm1454, %v1423
      %1456 = vst.msk [vmem:[#allocation3 + $0x10] sm:$0xff] %vm1452, %v1425
      %1457 = vst.msk [vmem:[#allocation3 + $0x18] sm:$0xff] %vm1454, %v1425
      %1458 = vst.msk [vmem:[#allocation3 + $0x20] sm:$0xff] %vm1452, %v1427
      %1459 = vst.msk [vmem:[#allocation3 + $0x28] sm:$0xff] %vm1454, %v1427
      %1460 = vst.msk [vmem:[#allocation3 + $0x30] sm:$0xff] %vm1452, %v1429
      %1461 = vst.msk [vmem:[#allocation3 + $0x38] sm:$0xff] %vm1454, %v1429
      %1462 = vst.msk [vmem:[#allocation3 + $0x40] sm:$0xff] %vm1452, %v1431
      %1463 = vst.msk [vmem:[#allocation3 + $0x48] sm:$0xff] %vm1454, %v1431
      %1464 = vst.msk [vmem:[#allocation3 + $0x50] sm:$0xff] %vm1452, %v1433
      %1465 = vst.msk [vmem:[#allocation3 + $0x58] sm:$0xff] %vm1454, %v1433
      %1466 = vst.msk [vmem:[#allocation3 + $0x60] sm:$0xff] %vm1452, %v1435
      %1467 = vst.msk [vmem:[#allocation3 + $0x68] sm:$0xff] %vm1454, %v1435
      %1468 = vst.msk [vmem:[#allocation3 + $0x70] sm:$0xff] %vm1452, %v1437
      %1469 = vst.msk [vmem:[#allocation3 + $0x78] sm:$0xff] %vm1454, %v1437
      %1470 = vst.msk [vmem:[#allocation3 + $0x80] sm:$0xff] %vm1452, %v1439
      %1471 = vst.msk [vmem:[#allocation3 + $0x88] sm:$0xff] %vm1454, %v1439
      %1472 = vst.msk [vmem:[#allocation3 + $0x90] sm:$0xff] %vm1452, %v1441
      %1473 = vst.msk [vmem:[#allocation3 + $0x98] sm:$0xff] %vm1454, %v1441
      %v1474 = vld [vmem:[#allocation2 + $0x15] sm:$0xff]
      %v1475 = vld [vmem:[#allocation2 + $0x1d] sm:$0xff]
      %v1476 = vld [vmem:[#allocation2 + $0x25] sm:$0xff]
      %v1477 = vld [vmem:[#allocation2 + $0x2d] sm:$0xff]
      %v1478 = vld [vmem:[#allocation2 + $0x35] sm:$0xff]
      %v1479 = vld [vmem:[#allocation2 + $0x3d] sm:$0xff]
      %v1480 = vld [vmem:[#allocation2 + $0x45] sm:$0xff]
      %v1481 = vld [vmem:[#allocation2 + $0x4d] sm:$0xff]
      %v1482 = vld [vmem:[#allocation2 + $0x55] sm:$0xff]
      %v1483 = vld [vmem:[#allocation2 + $0x5d] sm:$0xff]
      %1494 = vrot.lane.b32.xlu0 %v1474, 12
      %v1495 = vpop.permute.xlu0 %1494
      %1496 = vrot.lane.b32.xlu0 %v1475, 12
      %v1497 = vpop.permute.xlu0 %1496
      %1498 = vrot.lane.b32.xlu0 %v1476, 12
      %v1499 = vpop.permute.xlu0 %1498
      %1500 = vrot.lane.b32.xlu0 %v1477, 12
      %v1501 = vpop.permute.xlu0 %1500
      %1502 = vrot.lane.b32.xlu0 %v1478, 12
      %v1503 = vpop.permute.xlu0 %1502
      %1504 = vrot.lane.b32.xlu0 %v1479, 12
      %v1505 = vpop.permute.xlu0 %1504
      %1506 = vrot.lane.b32.xlu0 %v1480, 12
      %v1507 = vpop.permute.xlu0 %1506
      %1508 = vrot.lane.b32.xlu0 %v1481, 12
      %v1509 = vpop.permute.xlu0 %1508
      %1510 = vrot.lane.b32.xlu0 %v1482, 12
      %v1511 = vpop.permute.xlu0 %1510
      %1512 = vrot.lane.b32.xlu0 %v1483, 12
      %v1513 = vpop.permute.xlu0 %1512
      %vm1524 = vcmask 261216
      %1525 = vst.msk [vmem:[#allocation3 + $0x8] sm:$0xff] %vm1524, %v1495
      %1526 = vst.msk [vmem:[#allocation3 + $0x18] sm:$0xff] %vm1524, %v1497
      %1527 = vst.msk [vmem:[#allocation3 + $0x28] sm:$0xff] %vm1524, %v1499
      %1528 = vst.msk [vmem:[#allocation3 + $0x38] sm:$0xff] %vm1524, %v1501
      %1529 = vst.msk [vmem:[#allocation3 + $0x48] sm:$0xff] %vm1524, %v1503
      %1530 = vst.msk [vmem:[#allocation3 + $0x58] sm:$0xff] %vm1524, %v1505
      %1531 = vst.msk [vmem:[#allocation3 + $0x68] sm:$0xff] %vm1524, %v1507
      %1532 = vst.msk [vmem:[#allocation3 + $0x78] sm:$0xff] %vm1524, %v1509
      %1533 = vst.msk [vmem:[#allocation3 + $0x88] sm:$0xff] %vm1524, %v1511
      %1534 = vst.msk [vmem:[#allocation3 + $0x98] sm:$0xff] %vm1524, %v1513
      %v1535 = vld [vmem:[#allocation2 + $0x16] sm:$0xff]
      %v1536 = vld [vmem:[#allocation2 + $0x1e] sm:$0xff]
      %v1537 = vld [vmem:[#allocation2 + $0x26] sm:$0xff]
      %v1538 = vld [vmem:[#allocation2 + $0x2e] sm:$0xff]
      %v1539 = vld [vmem:[#allocation2 + $0x36] sm:$0xff]
      %v1540 = vld [vmem:[#allocation2 + $0x3e] sm:$0xff]
      %v1541 = vld [vmem:[#allocation2 + $0x46] sm:$0xff]
      %v1542 = vld [vmem:[#allocation2 + $0x4e] sm:$0xff]
      %v1543 = vld [vmem:[#allocation2 + $0x56] sm:$0xff]
      %v1544 = vld [vmem:[#allocation2 + $0x5e] sm:$0xff]
      %1555 = vrot.lane.b32.xlu0 %v1535, 32
      %v1556 = vpop.permute.xlu0 %1555
      %1557 = vrot.lane.b32.xlu0 %v1536, 32
      %v1558 = vpop.permute.xlu0 %1557
      %1559 = vrot.lane.b32.xlu0 %v1537, 32
      %v1560 = vpop.permute.xlu0 %1559
      %1561 = vrot.lane.b32.xlu0 %v1538, 32
      %v1562 = vpop.permute.xlu0 %1561
      %1563 = vrot.lane.b32.xlu0 %v1539, 32
      %v1564 = vpop.permute.xlu0 %1563
      %1565 = vrot.lane.b32.xlu0 %v1540, 32
      %v1566 = vpop.permute.xlu0 %1565
      %1567 = vrot.lane.b32.xlu0 %v1541, 32
      %v1568 = vpop.permute.xlu0 %1567
      %1569 = vrot.lane.b32.xlu0 %v1542, 32
      %v1570 = vpop.permute.xlu0 %1569
      %1571 = vrot.lane.b32.xlu0 %v1543, 32
      %v1572 = vpop.permute.xlu0 %1571
      %1573 = vrot.lane.b32.xlu0 %v1544, 32
      %v1574 = vpop.permute.xlu0 %1573
      %vm1585 = vcmask 425216
      %1586 = vst.msk [vmem:[#allocation3 + $0x8] sm:$0xff] %vm1585, %v1556
      %1587 = vst.msk [vmem:[#allocation3 + $0x18] sm:$0xff] %vm1585, %v1558
      %1588 = vst.msk [vmem:[#allocation3 + $0x28] sm:$0xff] %vm1585, %v1560
      %1589 = vst.msk [vmem:[#allocation3 + $0x38] sm:$0xff] %vm1585, %v1562
      %1590 = vst.msk [vmem:[#allocation3 + $0x48] sm:$0xff] %vm1585, %v1564
      %1591 = vst.msk [vmem:[#allocation3 + $0x58] sm:$0xff] %vm1585, %v1566
      %1592 = vst.msk [vmem:[#allocation3 + $0x68] sm:$0xff] %vm1585, %v1568
      %1593 = vst.msk [vmem:[#allocation3 + $0x78] sm:$0xff] %vm1585, %v1570
      %1594 = vst.msk [vmem:[#allocation3 + $0x88] sm:$0xff] %vm1585, %v1572
      %1595 = vst.msk [vmem:[#allocation3 + $0x98] sm:$0xff] %vm1585, %v1574
      %v1596 = vld [vmem:[#allocation3] sm:$0xff]
      %v1597 = vld [vmem:[#allocation3 + $0x8] sm:$0xff]
      %v1598 = vld [vmem:[#allocation3 + $0x10] sm:$0xff]
      %v1599 = vld [vmem:[#allocation3 + $0x18] sm:$0xff]
      %v1600 = vld [vmem:[#allocation3 + $0x20] sm:$0xff]
      %v1601 = vld [vmem:[#allocation3 + $0x28] sm:$0xff]
      %v1602 = vld [vmem:[#allocation3 + $0x30] sm:$0xff]
      %v1603 = vld [vmem:[#allocation3 + $0x38] sm:$0xff]
      %v1604 = vld [vmem:[#allocation3 + $0x40] sm:$0xff]
      %v1605 = vld [vmem:[#allocation3 + $0x48] sm:$0xff]
      %v1606 = vld [vmem:[#allocation3 + $0x50] sm:$0xff]
      %v1607 = vld [vmem:[#allocation3 + $0x58] sm:$0xff]
      %v1608 = vld [vmem:[#allocation3 + $0x60] sm:$0xff]
      %v1609 = vld [vmem:[#allocation3 + $0x68] sm:$0xff]
      %v1610 = vld [vmem:[#allocation3 + $0x70] sm:$0xff]
      %v1611 = vld [vmem:[#allocation3 + $0x78] sm:$0xff]
      %v1612 = vld [vmem:[#allocation3 + $0x80] sm:$0xff]
      %v1613 = vld [vmem:[#allocation3 + $0x88] sm:$0xff]
      %v1614 = vld [vmem:[#allocation3 + $0x90] sm:$0xff]
      %v1615 = vld [vmem:[#allocation3 + $0x98] sm:$0xff]
      %v1616 = vpack.c.bf16 %v1598, %v1596
      %v1617 = vpack.c.bf16 %v1599, %v1597
      %v1618 = vpack.c.bf16 %v1602, %v1600
      %v1619 = vpack.c.bf16 %v1603, %v1601
      %v1620 = vpack.c.bf16 %v1606, %v1604
      %v1621 = vpack.c.bf16 %v1607, %v1605
      %v1622 = vpack.c.bf16 %v1610, %v1608
      %v1623 = vpack.c.bf16 %v1611, %v1609
      %v1624 = vpack.c.bf16 %v1614, %v1612
      %v1625 = vpack.c.bf16 %v1615, %v1613
      %v1626 = vld [vmem:[%s1] sm:$0xf]
      %v1627 = vld [vmem:[%s1 + $0x4] sm:$0xf]
      %v1628 = vld [vmem:[%s1 + $0x8] sm:$0xf]
      %v1629 = vld [vmem:[%s1 + $0xc] sm:$0xf]
      %v1630 = vld [vmem:[%s1 + $0x10] sm:$0xf]
      %v1631 = vld [vmem:[%s1 + $0x14] sm:$0xf]
      %v1632 = vld [vmem:[%s1 + $0x18] sm:$0xf]
      %v1633 = vld [vmem:[%s1 + $0x1c] sm:$0xf]
      %v1634 = vld [vmem:[%s1 + $0x20] sm:$0xf]
      %v1635 = vld [vmem:[%s1 + $0x24] sm:$0xf]
      %v1636 = vld [vmem:[%s1 + $0x28] sm:$0xf]
      %v1637 = vld [vmem:[%s1 + $0x2c] sm:$0xf]
      %v1638 = vld [vmem:[%s1 + $0x30] sm:$0xf]
      %v1639 = vld [vmem:[%s1 + $0x34] sm:$0xf]
      %v1640 = vld [vmem:[%s1 + $0x38] sm:$0xf]
      %v1641 = vld [vmem:[%s1 + $0x3c] sm:$0xf]
      %v1642 = vld [vmem:[%s1 + $0x40] sm:$0xf]
      %v1643 = vld [vmem:[%s1 + $0x44] sm:$0xf]
      %v1644 = vld [vmem:[%s1 + $0x48] sm:$0xf]
      %v1645 = vld [vmem:[%s1 + $0x4c] sm:$0xf]
      %v1646 = vld [vmem:[%s1 + $0x50] sm:$0xf]
      %v1647 = vld [vmem:[%s1 + $0x54] sm:$0xf]
      %v1648 = vld [vmem:[%s1 + $0x58] sm:$0x3]
      %v1649 = vld [vmem:[%s2] sm:$0x1]
      %v1651 = vlaneseq
      %v1652 = vshrl.u32 %v1651, 7
      %v1653 = vsub.s32 0, %v1652
      %v1654 = vrot.slane %v1649, %v1653
      %v1679 = vunpack.c.l.b16 %v1626
      %v1680 = vunpack.c.l.b16 %v1627
      %v1681 = vunpack.c.l.b16 %v1628
      %v1682 = vunpack.c.l.b16 %v1629
      %v1683 = vunpack.c.l.b16 %v1630
      %v1684 = vunpack.c.l.b16 %v1631
      %v1685 = vunpack.c.l.b16 %v1632
      %v1686 = vunpack.c.l.b16 %v1633
      %v1687 = vunpack.c.l.b16 %v1634
      %v1688 = vunpack.c.l.b16 %v1635
      %v1689 = vunpack.c.l.b16 %v1636
      %v1690 = vunpack.c.l.b16 %v1637
      %v1691 = vunpack.c.l.b16 %v1638
      %v1692 = vunpack.c.l.b16 %v1639
      %v1693 = vunpack.c.l.b16 %v1640
      %v1694 = vunpack.c.l.b16 %v1641
      %v1695 = vunpack.c.l.b16 %v1642
      %v1696 = vunpack.c.l.b16 %v1643
      %v1697 = vunpack.c.l.b16 %v1644
      %v1698 = vunpack.c.l.b16 %v1645
      %v1699 = vunpack.c.l.b16 %v1646
      %v1700 = vunpack.c.l.b16 %v1647
      %v1701 = vunpack.c.l.b16 %v1648
      %v1702 = vpack.c.b16 %v1680, %v1679
      %v1703 = vpack.c.b16 %v1682, %v1681
      %v1704 = vpack.c.b16 %v1684, %v1683
      %v1705 = vpack.c.b16 %v1686, %v1685
      %v1706 = vpack.c.b16 %v1688, %v1687
      %v1707 = vpack.c.b16 %v1690, %v1689
      %v1708 = vpack.c.b16 %v1692, %v1691
      %v1709 = vpack.c.b16 %v1694, %v1693
      %v1710 = vpack.c.b16 %v1696, %v1695
      %v1711 = vpack.c.b16 %v1698, %v1697
      %v1712 = vpack.c.b16 %v1700, %v1699
      %v1713 = vpack.c.b16 %v1701, %v1701
      %vm1725 = vcmask 424960
      %v1727 = vsel %vm1725, %v1617, 0
      %v1730 = vsel %vm1725, %v1619, 0
      %v1733 = vsel %vm1725, %v1621, 0
      %v1736 = vsel %vm1725, %v1623, 0
      %v1739 = vsel %vm1725, %v1625, 0
      %vm1741 = vcmask 1041408
      %v1743 = vsel %vm1741, %v1713, 0
      %1745 = vmatprep.subr.bf16.mxu0 0
      %1746 = vmatpush1.bf16.msra.mxu0 %v1702
      %1747 = vmatprep.subr.bf16.mxu0 0
      %1748 = vmatpush1.bf16.msra.mxu0 %v1703
      %1749 = vmatprep.subr.bf16.mxu0 0
      %1750 = vmatpush1.bf16.msra.mxu0 %v1704
      %1751 = vmatprep.subr.bf16.mxu0 0
      %1752 = vmatpush1.bf16.msra.mxu0 %v1705
      %1753 = vmatprep.subr.bf16.mxu0 0
      %1754 = vmatpush1.bf16.msra.mxu0 %v1706
      %1755 = vmatprep.subr.bf16.mxu0 0
      %1756 = vmatpush1.bf16.msra.mxu0 %v1707
      %1757 = vmatprep.subr.bf16.mxu0 0
      %1758 = vmatpush1.bf16.msra.mxu0 %v1708
      %1759 = vmatprep.subr.bf16.mxu0 0
      %1760 = vmatpush1.bf16.msra.mxu0 %v1709
      %1761 = vmatprep.subr.bf16.mxu0 0
      %1762 = vmatpush1.bf16.msra.mxu0 %v1710
      %1763 = vmatprep.subr.bf16.mxu0 0
      %1764 = vmatpush1.bf16.msra.mxu0 %v1711
      %1765 = vmatprep.subr.bf16.mxu0 0
      %1766 = vmatpush1.bf16.msra.mxu0 %v1712
      %1767 = vmatprep.subr.bf16.mxu0 0
      %1768 = vmatpush1.bf16.msra.mxu0 %v1743
      %1769 = vmatprep.subr.bf16.mxu0 0
      %1770 = vmatpush1.bf16.msra.mxu0 0
      %1771 = vmatprep.subr.bf16.mxu0 0
      %1772 = vmatpush1.bf16.msra.mxu0 0
      %1773 = vmatprep.subr.bf16.mxu0 0
      %1774 = vmatpush1.bf16.msra.mxu0 0
      %1775 = vmatprep.subr.bf16.mxu0 0
      %1776 = vmatpush1.bf16.msra.mxu0 0
      %1777 = vmatprep.mubr.bf16.mxu0 %v1727
      %1778 = vmatmul.mubr.bf16.gmra.mrb[0].mxu0 %v1616
      %v1779 = vpop.f32.mrb[0].mxu0
      %v1780 = vadd.f32 %v1654, %v1779
      %v1781 = vpop.f32.mrb[0].mxu0
      %v1782 = vpop.f32.mrb[0].mxu0
      %v1783 = vadd.f32 %v1654, %v1782
      %v1784 = vpop.f32.mrb[0].mxu0
      %1785 = vmatprep.mubr.bf16.mxu0 %v1730
      %1786 = vmatmul.mubr.bf16.gmra.mrb[0].mxu0 %v1618
      %v1787 = vpop.f32.mrb[0].mxu0
      %v1788 = vadd.f32 %v1654, %v1787
      %v1789 = vpop.f32.mrb[0].mxu0
      %v1790 = vpop.f32.mrb[0].mxu0
      %v1791 = vadd.f32 %v1654, %v1790
      %v1792 = vpop.f32.mrb[0].mxu0
      %1793 = vmatprep.mubr.bf16.mxu0 %v1733
      %1794 = vmatmul.mubr.bf16.gmra.mrb[0].mxu0 %v1620
      %v1795 = vpop.f32.mrb[0].mxu0
      %v1796 = vadd.f32 %v1654, %v1795
      %v1797 = vpop.f32.mrb[0].mxu0
      %v1798 = vpop.f32.mrb[0].mxu0
      %v1799 = vadd.f32 %v1654, %v1798
      %v1800 = vpop.f32.mrb[0].mxu0
      %1801 = vmatprep.mubr.bf16.mxu0 %v1736
      %1802 = vmatmul.mubr.bf16.gmra.mrb[0].mxu0 %v1622
      %v1803 = vpop.f32.mrb[0].mxu0
      %v1804 = vadd.f32 %v1654, %v1803
      %v1805 = vpop.f32.mrb[0].mxu0
      %v1806 = vpop.f32.mrb[0].mxu0
      %v1807 = vadd.f32 %v1654, %v1806
      %v1808 = vpop.f32.mrb[0].mxu0
      %1809 = vmatprep.mubr.bf16.mxu0 %v1739
      %1810 = vmatmul.mubr.bf16.gmra.mrb[0].mxu0 %v1624
      %v1811 = vpop.f32.mrb[0].mxu0
      %v1812 = vadd.f32 %v1654, %v1811
      %v1813 = vpop.f32.mrb[0].mxu0
      %v1814 = vpop.f32.mrb[0].mxu0
      %v1815 = vadd.f32 %v1654, %v1814
      %v1816 = vpop.f32.mrb[0].mxu0
      %1817 = vdwg.mxu0
      %v1818 = vmax.f32 %v1780, 0.0
      %v1819 = vmax.f32 %v1783, 0.0
      %v1820 = vmax.f32 %v1788, 0.0
      %v1821 = vmax.f32 %v1791, 0.0
      %v1822 = vmax.f32 %v1796, 0.0
      %v1823 = vmax.f32 %v1799, 0.0
      %v1824 = vmax.f32 %v1804, 0.0
      %v1825 = vmax.f32 %v1807, 0.0
      %v1826 = vmax.f32 %v1812, 0.0
      %v1827 = vmax.f32 %v1815, 0.0
      %v1828 = vlaneseq
      %v1829 = vshrl.u32 %v1828, 7
      %v1830 = vadd.s32 %v1829, 8
      %v1831 = vadd.s32 %v1829, 16
      %v1832 = vadd.s32 %v1829, 24
      %v1833 = vadd.s32 %v1829, 32
      %v1834 = vadd.s32 %v1829, 40
      %v1835 = vadd.s32 %v1829, 48
      %v1836 = vadd.s32 %v1829, 56
      %v1837 = vadd.s32 %v1829, 64
      %v1838 = vadd.s32 %v1829, 72
      %vm1839 = vcmp.lt.s32.totalorder %v1829, 0
      %v1840 = vsub.s32 0, %v1829
      %v1841 = vsel %vm1839, %v1840, %v1829
      %v1842 = vmul.u32.u64.compose %v1841, 3435973837
      %v1843 = vextract.low.u32 %v1842
      %v1844 = vextract.high.u32 %v1842
      %v1845 = vshrl.u32 %v1844, 3
      %v1846 = vmul.u32 %v1845, 10
      %v1847 = vsub.s32 %v1841, %v1846
      %v1848 = vsub.s32 0, %v1847
      %v1849 = vsel %vm1839, %v1848, %v1847
      %vm1850 = vcmp.lt.s32.totalorder %v1830, 0
      %v1851 = vsub.s32 0, %v1830
      %v1852 = vsel %vm1850, %v1851, %v1830
      %v1853 = vmul.u32.u64.compose %v1852, 3435973837
      %v1854 = vextract.low.u32 %v1853
      %v1855 = vextract.high.u32 %v1853
      %v1856 = vshrl.u32 %v1855, 3
      %v1857 = vmul.u32 %v1856, 10
      %v1858 = vsub.s32 %v1852, %v1857
      %v1859 = vsub.s32 0, %v1858
      %v1860 = vsel %vm1850, %v1859, %v1858
      %vm1861 = vcmp.lt.s32.totalorder %v1831, 0
      %v1862 = vsub.s32 0, %v1831
      %v1863 = vsel %vm1861, %v1862, %v1831
      %v1864 = vmul.u32.u64.compose %v1863, 3435973837
      %v1865 = vextract.low.u32 %v1864
      %v1866 = vextract.high.u32 %v1864
      %v1867 = vshrl.u32 %v1866, 3
      %v1868 = vmul.u32 %v1867, 10
      %v1869 = vsub.s32 %v1863, %v1868
      %v1870 = vsub.s32 0, %v1869
      %v1871 = vsel %vm1861, %v1870, %v1869
      %vm1872 = vcmp.lt.s32.totalorder %v1832, 0
      %v1873 = vsub.s32 0, %v1832
      %v1874 = vsel %vm1872, %v1873, %v1832
      %v1875 = vmul.u32.u64.compose %v1874, 3435973837
      %v1876 = vextract.low.u32 %v1875
      %v1877 = vextract.high.u32 %v1875
      %v1878 = vshrl.u32 %v1877, 3
      %v1879 = vmul.u32 %v1878, 10
      %v1880 = vsub.s32 %v1874, %v1879
      %v1881 = vsub.s32 0, %v1880
      %v1882 = vsel %vm1872, %v1881, %v1880
      %vm1883 = vcmp.lt.s32.totalorder %v1833, 0
      %v1884 = vsub.s32 0, %v1833
      %v1885 = vsel %vm1883, %v1884, %v1833
      %v1886 = vmul.u32.u64.compose %v1885, 3435973837
      %v1887 = vextract.low.u32 %v1886
      %v1888 = vextract.high.u32 %v1886
      %v1889 = vshrl.u32 %v1888, 3
      %v1890 = vmul.u32 %v1889, 10
      %v1891 = vsub.s32 %v1885, %v1890
      %v1892 = vsub.s32 0, %v1891
      %v1893 = vsel %vm1883, %v1892, %v1891
      %vm1894 = vcmp.lt.s32.totalorder %v1834, 0
      %v1895 = vsub.s32 0, %v1834
      %v1896 = vsel %vm1894, %v1895, %v1834
      %v1897 = vmul.u32.u64.compose %v1896, 3435973837
      %v1898 = vextract.low.u32 %v1897
      %v1899 = vextract.high.u32 %v1897
      %v1900 = vshrl.u32 %v1899, 3
      %v1901 = vmul.u32 %v1900, 10
      %v1902 = vsub.s32 %v1896, %v1901
      %v1903 = vsub.s32 0, %v1902
      %v1904 = vsel %vm1894, %v1903, %v1902
      %vm1905 = vcmp.lt.s32.totalorder %v1835, 0
      %v1906 = vsub.s32 0, %v1835
      %v1907 = vsel %vm1905, %v1906, %v1835
      %v1908 = vmul.u32.u64.compose %v1907, 3435973837
      %v1909 = vextract.low.u32 %v1908
      %v1910 = vextract.high.u32 %v1908
      %v1911 = vshrl.u32 %v1910, 3
      %v1912 = vmul.u32 %v1911, 10
      %v1913 = vsub.s32 %v1907, %v1912
      %v1914 = vsub.s32 0, %v1913
      %v1915 = vsel %vm1905, %v1914, %v1913
      %vm1916 = vcmp.lt.s32.totalorder %v1836, 0
      %v1917 = vsub.s32 0, %v1836
      %v1918 = vsel %vm1916, %v1917, %v1836
      %v1919 = vmul.u32.u64.compose %v1918, 3435973837
      %v1920 = vextract.low.u32 %v1919
      %v1921 = vextract.high.u32 %v1919
      %v1922 = vshrl.u32 %v1921, 3
      %v1923 = vmul.u32 %v1922, 10
      %v1924 = vsub.s32 %v1918, %v1923
      %v1925 = vsub.s32 0, %v1924
      %v1926 = vsel %vm1916, %v1925, %v1924
      %vm1927 = vcmp.lt.s32.totalorder %v1837, 0
      %v1928 = vsub.s32 0, %v1837
      %v1929 = vsel %vm1927, %v1928, %v1837
      %v1930 = vmul.u32.u64.compose %v1929, 3435973837
      %v1931 = vextract.low.u32 %v1930
      %v1932 = vextract.high.u32 %v1930
      %v1933 = vshrl.u32 %v1932, 3
      %v1934 = vmul.u32 %v1933, 10
      %v1935 = vsub.s32 %v1929, %v1934
      %v1936 = vsub.s32 0, %v1935
      %v1937 = vsel %vm1927, %v1936, %v1935
      %vm1938 = vcmp.lt.s32.totalorder %v1838, 0
      %v1939 = vsub.s32 0, %v1838
      %v1940 = vsel %vm1938, %v1939, %v1838
      %v1941 = vmul.u32.u64.compose %v1940, 3435973837
      %v1942 = vextract.low.u32 %v1941
      %v1943 = vextract.high.u32 %v1941
      %v1944 = vshrl.u32 %v1943, 3
      %v1945 = vmul.u32 %v1944, 10
      %v1946 = vsub.s32 %v1940, %v1945
      %v1947 = vsub.s32 0, %v1946
      %v1948 = vsel %vm1938, %v1947, %v1946
      %vm1949 = vcmp.ne.s32.totalorder %v1849, 0
      %vm1950 = vcmp.ne.s32.totalorder %v1860, 0
      %vm1951 = vcmp.ne.s32.totalorder %v1871, 0
      %vm1952 = vcmp.ne.s32.totalorder %v1882, 0
      %vm1953 = vcmp.ne.s32.totalorder %v1893, 0
      %vm1954 = vcmp.ne.s32.totalorder %v1904, 0
      %vm1955 = vcmp.ne.s32.totalorder %v1915, 0
      %vm1956 = vcmp.ne.s32.totalorder %v1926, 0
      %vm1957 = vcmp.ne.s32.totalorder %v1937, 0
      %vm1958 = vcmp.ne.s32.totalorder %v1948, 0
      %vm1959 = vcmp.lt.s32.totalorder %v1849, 0
      %vm1960 = vcmp.lt.s32.totalorder %v1860, 0
      %vm1961 = vcmp.lt.s32.totalorder %v1871, 0
      %vm1962 = vcmp.lt.s32.totalorder %v1882, 0
      %vm1963 = vcmp.lt.s32.totalorder %v1893, 0
      %vm1964 = vcmp.lt.s32.totalorder %v1904, 0
      %vm1965 = vcmp.lt.s32.totalorder %v1915, 0
      %vm1966 = vcmp.lt.s32.totalorder %v1926, 0
      %vm1967 = vcmp.lt.s32.totalorder %v1937, 0
      %vm1968 = vcmp.lt.s32.totalorder %v1948, 0
      %vm1969 = vmand %vm1959, %vm1949
      %vm1970 = vmand %vm1960, %vm1950
      %vm1971 = vmand %vm1961, %vm1951
      %vm1972 = vmand %vm1962, %vm1952
      %vm1973 = vmand %vm1963, %vm1953
      %vm1974 = vmand %vm1964, %vm1954
      %vm1975 = vmand %vm1965, %vm1955
      %vm1976 = vmand %vm1966, %vm1956
      %vm1977 = vmand %vm1967, %vm1957
      %vm1978 = vmand %vm1968, %vm1958
      %v1979 = vadd.s32 %v1849, 10
      %v1980 = vadd.s32 %v1860, 10
      %v1981 = vadd.s32 %v1871, 10
      %v1982 = vadd.s32 %v1882, 10
      %v1983 = vadd.s32 %v1893, 10
      %v1984 = vadd.s32 %v1904, 10
      %v1985 = vadd.s32 %v1915, 10
      %v1986 = vadd.s32 %v1926, 10
      %v1987 = vadd.s32 %v1937, 10
      %v1988 = vadd.s32 %v1948, 10
      %v1989 = vsel %vm1969, %v1979, %v1849
      %v1990 = vsel %vm1970, %v1980, %v1860
      %v1991 = vsel %vm1971, %v1981, %v1871
      %v1992 = vsel %vm1972, %v1982, %v1882
      %v1993 = vsel %vm1973, %v1983, %v1893
      %v1994 = vsel %vm1974, %v1984, %v1904
      %v1995 = vsel %vm1975, %v1985, %v1915
      %v1996 = vsel %vm1976, %v1986, %v1926
      %v1997 = vsel %vm1977, %v1987, %v1937
      %v1998 = vsel %vm1978, %v1988, %v1948
      %vm1999 = vcmp.lt.s32.totalorder %v1989, 8
      %vm2000 = vcmp.lt.s32.totalorder %v1990, 8
      %vm2001 = vcmp.lt.s32.totalorder %v1991, 8
      %vm2002 = vcmp.lt.s32.totalorder %v1992, 8
      %vm2003 = vcmp.lt.s32.totalorder %v1993, 8
      %vm2004 = vcmp.lt.s32.totalorder %v1994, 8
      %vm2005 = vcmp.lt.s32.totalorder %v1995, 8
      %vm2006 = vcmp.lt.s32.totalorder %v1996, 8
      %vm2007 = vcmp.lt.s32.totalorder %v1997, 8
      %vm2008 = vcmp.lt.s32.totalorder %v1998, 8
      %v2009 = vsel %vm1999, 1, 0
      %v2010 = vsel %vm2000, 1, 0
      %v2011 = vsel %vm2001, 1, 0
      %v2012 = vsel %vm2002, 1, 0
      %v2013 = vsel %vm2003, 1, 0
      %v2014 = vsel %vm2004, 1, 0
      %v2015 = vsel %vm2005, 1, 0
      %v2016 = vsel %vm2006, 1, 0
      %v2017 = vsel %vm2007, 1, 0
      %v2018 = vsel %vm2008, 1, 0
      %vm2019 = vcmp.eq.s32.totalorder %v2009, 1
      %vm2020 = vcmp.eq.s32.totalorder %v2010, 1
      %vm2021 = vcmp.eq.s32.totalorder %v2011, 1
      %vm2022 = vcmp.eq.s32.totalorder %v2012, 1
      %vm2023 = vcmp.eq.s32.totalorder %v2013, 1
      %vm2024 = vcmp.eq.s32.totalorder %v2014, 1
      %vm2025 = vcmp.eq.s32.totalorder %v2015, 1
      %vm2026 = vcmp.eq.s32.totalorder %v2016, 1
      %vm2027 = vcmp.eq.s32.totalorder %v2017, 1
      %vm2028 = vcmp.eq.s32.totalorder %v2018, 1
      %v2029 = vsel %vm2019, %v1818, 0.0
      %v2030 = vsel %vm2020, %v1819, 0.0
      %v2031 = vsel %vm2021, %v1820, 0.0
      %v2032 = vsel %vm2022, %v1821, 0.0
      %v2033 = vsel %vm2023, %v1822, 0.0
      %v2034 = vsel %vm2024, %v1823, 0.0
      %v2035 = vsel %vm2025, %v1824, 0.0
      %v2036 = vsel %vm2026, %v1825, 0.0
      %v2037 = vsel %vm2027, %v1826, 0.0
      %v2038 = vsel %vm2028, %v1827, 0.0
      %vm2039 = vcmask 64512
      %2040 = vst.msk [vmem:[#allocation4] sm:$0xff] %vm2039, 0.0
      %2041 = vst.msk [vmem:[#allocation4 + $0x8] sm:$0xff] %vm2039, 0.0
      %2042 = vst.msk [vmem:[#allocation4 + $0x10] sm:$0xff] %vm2039, 0.0
      %2043 = vst.msk [vmem:[#allocation4 + $0x18] sm:$0xff] %vm2039, 0.0
      %2044 = vst.msk [vmem:[#allocation4 + $0x20] sm:$0xff] %vm2039, 0.0
      %2045 = vst.msk [vmem:[#allocation4 + $0x28] sm:$0xff] %vm2039, 0.0
      %2046 = vst.msk [vmem:[#allocation4 + $0x30] sm:$0xff] %vm2039, 0.0
      %2047 = vst.msk [vmem:[#allocation4 + $0x38] sm:$0xff] %vm2039, 0.0
      %2048 = vst.msk [vmem:[#allocation4 + $0x40] sm:$0xff] %vm2039, 0.0
      %2049 = vst.msk [vmem:[#allocation4 + $0x48] sm:$0xff] %vm2039, 0.0
      %2050 = vst.msk [vmem:[#allocation4 + $0x50] sm:$0xff] %vm2039, 0.0
      %2051 = vst.msk [vmem:[#allocation4 + $0x58] sm:$0xff] %vm2039, 0.0
      %2052 = vst.msk [vmem:[#allocation4 + $0x60] sm:$0xff] %vm2039, 0.0
      %vm2053 = vcmask 62464
      %2054 = vst.msk [vmem:[#allocation4 + $0x68] sm:$0x3f] %vm2053, 0.0
      %2055 = vst.msk [vmem:[#allocation4 + $0xb] sm:$0xff] %vm2039, %v2029
      %2056 = vst.msk [vmem:[#allocation4 + $0x13] sm:$0xff] %vm2039, %v2030
      %2057 = vst.msk [vmem:[#allocation4 + $0x1b] sm:$0xff] %vm2039, %v2031
      %2058 = vst.msk [vmem:[#allocation4 + $0x23] sm:$0xff] %vm2039, %v2032
      %2059 = vst.msk [vmem:[#allocation4 + $0x2b] sm:$0xff] %vm2039, %v2033
      %2060 = vst.msk [vmem:[#allocation4 + $0x33] sm:$0xff] %vm2039, %v2034
      %2061 = vst.msk [vmem:[#allocation4 + $0x3b] sm:$0xff] %vm2039, %v2035
      %2062 = vst.msk [vmem:[#allocation4 + $0x43] sm:$0xff] %vm2039, %v2036
      %2063 = vst.msk [vmem:[#allocation4 + $0x4b] sm:$0xff] %vm2039, %v2037
      %2064 = vst.msk [vmem:[#allocation4 + $0x53] sm:$0xff] %vm2039, %v2038
      %v2065 = vld [vmem:[#allocation4] sm:$0xff]
      %v2066 = vld [vmem:[#allocation4 + $0x8] sm:$0xff]
      %v2067 = vld [vmem:[#allocation4 + $0x10] sm:$0xff]
      %v2068 = vld [vmem:[#allocation4 + $0x18] sm:$0xff]
      %v2069 = vld [vmem:[#allocation4 + $0x20] sm:$0xff]
      %v2070 = vld [vmem:[#allocation4 + $0x28] sm:$0xff]
      %v2071 = vld [vmem:[#allocation4 + $0x30] sm:$0xff]
      %v2072 = vld [vmem:[#allocation4 + $0x38] sm:$0xff]
      %v2073 = vld [vmem:[#allocation4 + $0x40] sm:$0xff]
      %v2074 = vld [vmem:[#allocation4 + $0x48] sm:$0xff]
      %v2075 = vld [vmem:[#allocation4 + $0x50] sm:$0xff]
      %v2076 = vld [vmem:[#allocation4 + $0x58] sm:$0xff]
      %v2077 = vld [vmem:[#allocation4 + $0x60] sm:$0xff]
      %v2078 = vld [vmem:[#allocation4 + $0x68] sm:$0x3f]
      %v2079 = vsub.f32 0.0, %v2065
      %v2080 = vsub.f32 0.0, %v2066
      %v2081 = vsub.f32 0.0, %v2067
      %v2082 = vsub.f32 0.0, %v2068
      %v2083 = vsub.f32 0.0, %v2069
      %v2084 = vsub.f32 0.0, %v2070
      %v2085 = vsub.f32 0.0, %v2071
      %v2086 = vsub.f32 0.0, %v2072
      %v2087 = vsub.f32 0.0, %v2073
      %v2088 = vsub.f32 0.0, %v2074
      %v2089 = vsub.f32 0.0, %v2075
      %v2090 = vsub.f32 0.0, %v2076
      %v2091 = vsub.f32 0.0, %v2077
      %v2092 = vsub.f32 0.0, %v2078
      %v2093 = vmul.f32 %v2079, 1.442695
      %v2094 = vpow.pop %v2093
      %v2095 = vmul.f32 %v2080, 1.442695
      %v2096 = vpow.pop %v2095
      %v2097 = vmul.f32 %v2081, 1.442695
      %v2098 = vpow.pop %v2097
      %v2099 = vmul.f32 %v2082, 1.442695
      %v2100 = vpow.pop %v2099
      %v2101 = vmul.f32 %v2083, 1.442695
      %v2102 = vpow.pop %v2101
      %v2103 = vmul.f32 %v2084, 1.442695
      %v2104 = vpow.pop %v2103
      %v2105 = vmul.f32 %v2085, 1.442695
      %v2106 = vpow.pop %v2105
      %v2107 = vmul.f32 %v2086, 1.442695
      %v2108 = vpow.pop %v2107
      %v2109 = vmul.f32 %v2087, 1.442695
      %v2110 = vpow.pop %v2109
      %v2111 = vmul.f32 %v2088, 1.442695
      %v2112 = vpow.pop %v2111
      %v2113 = vmul.f32 %v2089, 1.442695
      %v2114 = vpow.pop %v2113
      %v2115 = vmul.f32 %v2090, 1.442695
      %v2116 = vpow.pop %v2115
      %v2117 = vmul.f32 %v2091, 1.442695
      %v2118 = vpow.pop %v2117
      %v2119 = vmul.f32 %v2092, 1.442695
      %v2120 = vpow.pop %v2119
      %v2121 = vadd.f32 %v2094, 1.0
      %v2122 = vadd.f32 %v2096, 1.0
      %v2123 = vadd.f32 %v2098, 1.0
      %v2124 = vadd.f32 %v2100, 1.0
      %v2125 = vadd.f32 %v2102, 1.0
      %v2126 = vadd.f32 %v2104, 1.0
      %v2127 = vadd.f32 %v2106, 1.0
      %v2128 = vadd.f32 %v2108, 1.0
      %v2129 = vadd.f32 %v2110, 1.0
      %v2130 = vadd.f32 %v2112, 1.0
      %v2131 = vadd.f32 %v2114, 1.0
      %v2132 = vadd.f32 %v2116, 1.0
      %v2133 = vadd.f32 %v2118, 1.0
      %v2134 = vadd.f32 %v2120, 1.0
      %v2135 = vrcp.pop %v2121
      %v2136 = vmul.f32 1.0, %v2135
      %v2137 = vrcp.pop %v2122
      %v2138 = vmul.f32 1.0, %v2137
      %v2139 = vrcp.pop %v2123
      %v2140 = vmul.f32 1.0, %v2139
      %v2141 = vrcp.pop %v2124
      %v2142 = vmul.f32 1.0, %v2141
      %v2143 = vrcp.pop %v2125
      %v2144 = vmul.f32 1.0, %v2143
      %v2145 = vrcp.pop %v2126
      %v2146 = vmul.f32 1.0, %v2145
      %v2147 = vrcp.pop %v2127
      %v2148 = vmul.f32 1.0, %v2147
      %v2149 = vrcp.pop %v2128
      %v2150 = vmul.f32 1.0, %v2149
      %v2151 = vrcp.pop %v2129
      %v2152 = vmul.f32 1.0, %v2151
      %v2153 = vrcp.pop %v2130
      %v2154 = vmul.f32 1.0, %v2153
      %v2155 = vrcp.pop %v2131
      %v2156 = vmul.f32 1.0, %v2155
      %v2157 = vrcp.pop %v2132
      %v2158 = vmul.f32 1.0, %v2157
      %v2159 = vrcp.pop %v2133
      %v2160 = vmul.f32 1.0, %v2159
      %v2161 = vrcp.pop %v2134
      %v2162 = vmul.f32 1.0, %v2161
      %v2163 = vmul.f32 %v2065, %v2136
      %v2164 = vmul.f32 %v2066, %v2138
      %v2165 = vmul.f32 %v2067, %v2140
      %v2166 = vmul.f32 %v2068, %v2142
      %v2167 = vmul.f32 %v2069, %v2144
      %v2168 = vmul.f32 %v2070, %v2146
      %v2169 = vmul.f32 %v2071, %v2148
      %v2170 = vmul.f32 %v2072, %v2150
      %v2171 = vmul.f32 %v2073, %v2152
      %v2172 = vmul.f32 %v2074, %v2154
      %v2173 = vmul.f32 %v2075, %v2156
      %v2174 = vmul.f32 %v2076, %v2158
      %v2175 = vmul.f32 %v2077, %v2160
      %v2176 = vmul.f32 %v2078, %v2162
      %2177 = vst.msk [vmem:[#allocation5] sm:$0xff] %vm2039, %v2163
      %2178 = vst.msk [vmem:[#allocation5 + $0x8] sm:$0xff] %vm2039, %v2164
      %2179 = vst.msk [vmem:[#allocation5 + $0x10] sm:$0xff] %vm2039, %v2165
      %2180 = vst.msk [vmem:[#allocation5 + $0x18] sm:$0xff] %vm2039, %v2166
      %2181 = vst.msk [vmem:[#allocation5 + $0x20] sm:$0xff] %vm2039, %v2167
      %2182 = vst.msk [vmem:[#allocation5 + $0x28] sm:$0xff] %vm2039, %v2168
      %2183 = vst.msk [vmem:[#allocation5 + $0x30] sm:$0xff] %vm2039, %v2169
      %2184 = vst.msk [vmem:[#allocation5 + $0x38] sm:$0xff] %vm2039, %v2170
      %2185 = vst.msk [vmem:[#allocation5 + $0x40] sm:$0xff] %vm2039, %v2171
      %2186 = vst.msk [vmem:[#allocation5 + $0x48] sm:$0xff] %vm2039, %v2172
      %2187 = vst.msk [vmem:[#allocation5 + $0x50] sm:$0xff] %vm2039, %v2173
      %2188 = vst.msk [vmem:[#allocation5 + $0x58] sm:$0xff] %vm2039, %v2174
      %2189 = vst.msk [vmem:[#allocation5 + $0x60] sm:$0xff] %vm2039, %v2175
      %2190 = vst.msk [vmem:[#allocation5 + $0x68] sm:$0x3f] %vm2053, %v2176
      %v2191 = vmul.f32 %v2065, 0.75
      %v2192 = vmul.f32 %v2066, 0.75
      %v2193 = vmul.f32 %v2067, 0.75
      %v2194 = vmul.f32 %v2068, 0.75
      %v2195 = vmul.f32 %v2069, 0.75
      %v2196 = vmul.f32 %v2070, 0.75
      %v2197 = vmul.f32 %v2071, 0.75
      %v2198 = vmul.f32 %v2072, 0.75
      %v2199 = vmul.f32 %v2073, 0.75
      %v2200 = vmul.f32 %v2074, 0.75
      %v2201 = vmul.f32 %v2075, 0.75
      %v2202 = vmul.f32 %v2076, 0.75
      %v2203 = vmul.f32 %v2077, 0.75
      %v2204 = vmul.f32 %v2078, 0.75
      %v2205 = vsub.f32 %v2191, -1.5
      %v2206 = vsub.f32 %v2192, -1.5
      %v2207 = vsub.f32 %v2193, -1.5
      %v2208 = vsub.f32 %v2194, -1.5
      %v2209 = vsub.f32 %v2195, -1.5
      %v2210 = vsub.f32 %v2196, -1.5
      %v2211 = vsub.f32 %v2197, -1.5
      %v2212 = vsub.f32 %v2198, -1.5
      %v2213 = vsub.f32 %v2199, -1.5
      %v2214 = vsub.f32 %v2200, -1.5
      %v2215 = vsub.f32 %v2201, -1.5
      %v2216 = vsub.f32 %v2202, -1.5
      %v2217 = vsub.f32 %v2203, -1.5
      %v2218 = vsub.f32 %v2204, -1.5
      %v2219 = vmul.f32 %v2205, %v2205
      %v2220 = vmul.f32 %v2206, %v2206
      %v2221 = vmul.f32 %v2207, %v2207
      %v2222 = vmul.f32 %v2208, %v2208
      %v2223 = vmul.f32 %v2209, %v2209
      %v2224 = vmul.f32 %v2210, %v2210
      %v2225 = vmul.f32 %v2211, %v2211
      %v2226 = vmul.f32 %v2212, %v2212
      %v2227 = vmul.f32 %v2213, %v2213
      %v2228 = vmul.f32 %v2214, %v2214
      %v2229 = vmul.f32 %v2215, %v2215
      %v2230 = vmul.f32 %v2216, %v2216
      %v2231 = vmul.f32 %v2217, %v2217
      %v2232 = vmul.f32 %v2218, %v2218
      %v2233 = vsub.f32 0.0, %v2219
      %v2234 = vsub.f32 0.0, %v2220
      %v2235 = vsub.f32 0.0, %v2221
      %v2236 = vsub.f32 0.0, %v2222
      %v2237 = vsub.f32 0.0, %v2223
      %v2238 = vsub.f32 0.0, %v2224
      %v2239 = vsub.f32 0.0, %v2225
      %v2240 = vsub.f32 0.0, %v2226
      %v2241 = vsub.f32 0.0, %v2227
      %v2242 = vsub.f32 0.0, %v2228
      %v2243 = vsub.f32 0.0, %v2229
      %v2244 = vsub.f32 0.0, %v2230
      %v2245 = vsub.f32 0.0, %v2231
      %v2246 = vsub.f32 0.0, %v2232
      %v2247 = vmul.f32 %v2233, 1.442695
      %v2248 = vpow.pop %v2247
      %v2249 = vmul.f32 %v2234, 1.442695
      %v2250 = vpow.pop %v2249
      %v2251 = vmul.f32 %v2235, 1.442695
      %v2252 = vpow.pop %v2251
      %v2253 = vmul.f32 %v2236, 1.442695
      %v2254 = vpow.pop %v2253
      %v2255 = vmul.f32 %v2237, 1.442695
      %v2256 = vpow.pop %v2255
      %v2257 = vmul.f32 %v2238, 1.442695
      %v2258 = vpow.pop %v2257
      %v2259 = vmul.f32 %v2239, 1.442695
      %v2260 = vpow.pop %v2259
      %v2261 = vmul.f32 %v2240, 1.442695
      %v2262 = vpow.pop %v2261
      %v2263 = vmul.f32 %v2241, 1.442695
      %v2264 = vpow.pop %v2263
      %v2265 = vmul.f32 %v2242, 1.442695
      %v2266 = vpow.pop %v2265
      %v2267 = vmul.f32 %v2243, 1.442695
      %v2268 = vpow.pop %v2267
      %v2269 = vmul.f32 %v2244, 1.442695
      %v2270 = vpow.pop %v2269
      %v2271 = vmul.f32 %v2245, 1.442695
      %v2272 = vpow.pop %v2271
      %v2273 = vmul.f32 %v2246, 1.442695
      %v2274 = vpow.pop %v2273
      %2289 = vrot.lane.b32.xlu0 %v2248, 8
      %v2290 = vpop.permute.xlu0 %2289
      %2291 = vrot.lane.b32.xlu0 %v2250, 8
      %v2292 = vpop.permute.xlu0 %2291
      %2293 = vrot.lane.b32.xlu0 %v2252, 8
      %v2294 = vpop.permute.xlu0 %2293
      %2295 = vrot.lane.b32.xlu0 %v2254, 8
      %v2296 = vpop.permute.xlu0 %2295
      %2297 = vrot.lane.b32.xlu0 %v2256, 8
      %v2298 = vpop.permute.xlu0 %2297
      %2299 = vrot.lane.b32.xlu0 %v2258, 8
      %v2300 = vpop.permute.xlu0 %2299
      %2301 = vrot.lane.b32.xlu0 %v2260, 8
      %v2302 = vpop.permute.xlu0 %2301
      %2303 = vrot.lane.b32.xlu0 %v2262, 8
      %v2304 = vpop.permute.xlu0 %2303
      %2305 = vrot.lane.b32.xlu0 %v2264, 8
      %v2306 = vpop.permute.xlu0 %2305
      %2307 = vrot.lane.b32.xlu0 %v2266, 8
      %v2308 = vpop.permute.xlu0 %2307
      %2309 = vrot.lane.b32.xlu0 %v2268, 8
      %v2310 = vpop.permute.xlu0 %2309
      %2311 = vrot.lane.b32.xlu0 %v2270, 8
      %v2312 = vpop.permute.xlu0 %2311
      %2313 = vrot.lane.b32.xlu0 %v2272, 8
      %v2314 = vpop.permute.xlu0 %2313
      %2315 = vrot.lane.b32.xlu0 %v2274, 8
      %v2316 = vpop.permute.xlu0 %2315
      %vm2331 = vcmask 130112
      %2332 = vst.msk [vmem:[#allocation5] sm:$0xff] %vm2331, %v2290
      %2333 = vst.msk [vmem:[#allocation5 + $0x8] sm:$0xff] %vm2331, %v2292
      %2334 = vst.msk [vmem:[#allocation5 + $0x10] sm:$0xff] %vm2331, %v2294
      %2335 = vst.msk [vmem:[#allocation5 + $0x18] sm:$0xff] %vm2331, %v2296
      %2336 = vst.msk [vmem:[#allocation5 + $0x20] sm:$0xff] %vm2331, %v2298
      %2337 = vst.msk [vmem:[#allocation5 + $0x28] sm:$0xff] %vm2331, %v2300
      %2338 = vst.msk [vmem:[#allocation5 + $0x30] sm:$0xff] %vm2331, %v2302
      %2339 = vst.msk [vmem:[#allocation5 + $0x38] sm:$0xff] %vm2331, %v2304
      %2340 = vst.msk [vmem:[#allocation5 + $0x40] sm:$0xff] %vm2331, %v2306
      %2341 = vst.msk [vmem:[#allocation5 + $0x48] sm:$0xff] %vm2331, %v2308
      %2342 = vst.msk [vmem:[#allocation5 + $0x50] sm:$0xff] %vm2331, %v2310
      %2343 = vst.msk [vmem:[#allocation5 + $0x58] sm:$0xff] %vm2331, %v2312
      %2344 = vst.msk [vmem:[#allocation5 + $0x60] sm:$0xff] %vm2331, %v2314
      %vm2345 = vcmask 128064
      %2346 = vst.msk [vmem:[#allocation5 + $0x68] sm:$0x3f] %vm2345, %v2316
      %v2347 = vsub.f32 %v2191, -0.5
      %v2348 = vsub.f32 %v2192, -0.5
      %v2349 = vsub.f32 %v2193, -0.5
      %v2350 = vsub.f32 %v2194, -0.5
      %v2351 = vsub.f32 %v2195, -0.5
      %v2352 = vsub.f32 %v2196, -0.5
      %v2353 = vsub.f32 %v2197, -0.5
      %v2354 = vsub.f32 %v2198, -0.5
      %v2355 = vsub.f32 %v2199, -0.5
      %v2356 = vsub.f32 %v2200, -0.5
      %v2357 = vsub.f32 %v2201, -0.5
      %v2358 = vsub.f32 %v2202, -0.5
      %v2359 = vsub.f32 %v2203, -0.5
      %v2360 = vsub.f32 %v2204, -0.5
      %v2361 = vmul.f32 %v2347, %v2347
      %v2362 = vmul.f32 %v2348, %v2348
      %v2363 = vmul.f32 %v2349, %v2349
      %v2364 = vmul.f32 %v2350, %v2350
      %v2365 = vmul.f32 %v2351, %v2351
      %v2366 = vmul.f32 %v2352, %v2352
      %v2367 = vmul.f32 %v2353, %v2353
      %v2368 = vmul.f32 %v2354, %v2354
      %v2369 = vmul.f32 %v2355, %v2355
      %v2370 = vmul.f32 %v2356, %v2356
      %v2371 = vmul.f32 %v2357, %v2357
      %v2372 = vmul.f32 %v2358, %v2358
      %v2373 = vmul.f32 %v2359, %v2359
      %v2374 = vmul.f32 %v2360, %v2360
      %v2375 = vsub.f32 0.0, %v2361
      %v2376 = vsub.f32 0.0, %v2362
      %v2377 = vsub.f32 0.0, %v2363
      %v2378 = vsub.f32 0.0, %v2364
      %v2379 = vsub.f32 0.0, %v2365
      %v2380 = vsub.f32 0.0, %v2366
      %v2381 = vsub.f32 0.0, %v2367
      %v2382 = vsub.f32 0.0, %v2368
      %v2383 = vsub.f32 0.0, %v2369
      %v2384 = vsub.f32 0.0, %v2370
      %v2385 = vsub.f32 0.0, %v2371
      %v2386 = vsub.f32 0.0, %v2372
      %v2387 = vsub.f32 0.0, %v2373
      %v2388 = vsub.f32 0.0, %v2374
      %v2389 = vmul.f32 %v2375, 1.442695
      %v2390 = vpow.pop %v2389
      %v2391 = vmul.f32 %v2376, 1.442695
      %v2392 = vpow.pop %v2391
      %v2393 = vmul.f32 %v2377, 1.442695
      %v2394 = vpow.pop %v2393
      %v2395 = vmul.f32 %v2378, 1.442695
      %v2396 = vpow.pop %v2395
      %v2397 = vmul.f32 %v2379, 1.442695
      %v2398 = vpow.pop %v2397
      %v2399 = vmul.f32 %v2380, 1.442695
      %v2400 = vpow.pop %v2399
      %v2401 = vmul.f32 %v2381, 1.442695
      %v2402 = vpow.pop %v2401
      %v2403 = vmul.f32 %v2382, 1.442695
      %v2404 = vpow.pop %v2403
      %v2405 = vmul.f32 %v2383, 1.442695
      %v2406 = vpow.pop %v2405
      %v2407 = vmul.f32 %v2384, 1.442695
      %v2408 = vpow.pop %v2407
      %v2409 = vmul.f32 %v2385, 1.442695
      %v2410 = vpow.pop %v2409
      %v2411 = vmul.f32 %v2386, 1.442695
      %v2412 = vpow.pop %v2411
      %v2413 = vmul.f32 %v2387, 1.442695
      %v2414 = vpow.pop %v2413
      %v2415 = vmul.f32 %v2388, 1.442695
      %v2416 = vpow.pop %v2415
      %2431 = vrot.lane.b32.xlu0 %v2390, 16
      %v2432 = vpop.permute.xlu0 %2431
      %2433 = vrot.lane.b32.xlu0 %v2392, 16
      %v2434 = vpop.permute.xlu0 %2433
      %2435 = vrot.lane.b32.xlu0 %v2394, 16
      %v2436 = vpop.permute.xlu0 %2435
      %2437 = vrot.lane.b32.xlu0 %v2396, 16
      %v2438 = vpop.permute.xlu0 %2437
      %2439 = vrot.lane.b32.xlu0 %v2398, 16
      %v2440 = vpop.permute.xlu0 %2439
      %2441 = vrot.lane.b32.xlu0 %v2400, 16
      %v2442 = vpop.permute.xlu0 %2441
      %2443 = vrot.lane.b32.xlu0 %v2402, 16
      %v2444 = vpop.permute.xlu0 %2443
      %2445 = vrot.lane.b32.xlu0 %v2404, 16
      %v2446 = vpop.permute.xlu0 %2445
      %2447 = vrot.lane.b32.xlu0 %v2406, 16
      %v2448 = vpop.permute.xlu0 %2447
      %2449 = vrot.lane.b32.xlu0 %v2408, 16
      %v2450 = vpop.permute.xlu0 %2449
      %2451 = vrot.lane.b32.xlu0 %v2410, 16
      %v2452 = vpop.permute.xlu0 %2451
      %2453 = vrot.lane.b32.xlu0 %v2412, 16
      %v2454 = vpop.permute.xlu0 %2453
      %2455 = vrot.lane.b32.xlu0 %v2414, 16
      %v2456 = vpop.permute.xlu0 %2455
      %2457 = vrot.lane.b32.xlu0 %v2416, 16
      %v2458 = vpop.permute.xlu0 %2457
      %vm2473 = vcmask 195712
      %2474 = vst.msk [vmem:[#allocation5] sm:$0xff] %vm2473, %v2432
      %2475 = vst.msk [vmem:[#allocation5 + $0x8] sm:$0xff] %vm2473, %v2434
      %2476 = vst.msk [vmem:[#allocation5 + $0x10] sm:$0xff] %vm2473, %v2436
      %2477 = vst.msk [vmem:[#allocation5 + $0x18] sm:$0xff] %vm2473, %v2438
      %2478 = vst.msk [vmem:[#allocation5 + $0x20] sm:$0xff] %vm2473, %v2440
      %2479 = vst.msk [vmem:[#allocation5 + $0x28] sm:$0xff] %vm2473, %v2442
      %2480 = vst.msk [vmem:[#allocation5 + $0x30] sm:$0xff] %vm2473, %v2444
      %2481 = vst.msk [vmem:[#allocation5 + $0x38] sm:$0xff] %vm2473, %v2446
      %2482 = vst.msk [vmem:[#allocation5 + $0x40] sm:$0xff] %vm2473, %v2448
      %2483 = vst.msk [vmem:[#allocation5 + $0x48] sm:$0xff] %vm2473, %v2450
      %2484 = vst.msk [vmem:[#allocation5 + $0x50] sm:$0xff] %vm2473, %v2452
      %2485 = vst.msk [vmem:[#allocation5 + $0x58] sm:$0xff] %vm2473, %v2454
      %2486 = vst.msk [vmem:[#allocation5 + $0x60] sm:$0xff] %vm2473, %v2456
      %vm2487 = vcmask 193664
      %2488 = vst.msk [vmem:[#allocation5 + $0x68] sm:$0x3f] %vm2487, %v2458
      %v2489 = vsub.f32 %v2191, 0.5
      %v2490 = vsub.f32 %v2192, 0.5
      %v2491 = vsub.f32 %v2193, 0.5
      %v2492 = vsub.f32 %v2194, 0.5
      %v2493 = vsub.f32 %v2195, 0.5
      %v2494 = vsub.f32 %v2196, 0.5
      %v2495 = vsub.f32 %v2197, 0.5
      %v2496 = vsub.f32 %v2198, 0.5
      %v2497 = vsub.f32 %v2199, 0.5
      %v2498 = vsub.f32 %v2200, 0.5
      %v2499 = vsub.f32 %v2201, 0.5
      %v2500 = vsub.f32 %v2202, 0.5
      %v2501 = vsub.f32 %v2203, 0.5
      %v2502 = vsub.f32 %v2204, 0.5
      %v2503 = vmul.f32 %v2489, %v2489
      %v2504 = vmul.f32 %v2490, %v2490
      %v2505 = vmul.f32 %v2491, %v2491
      %v2506 = vmul.f32 %v2492, %v2492
      %v2507 = vmul.f32 %v2493, %v2493
      %v2508 = vmul.f32 %v2494, %v2494
      %v2509 = vmul.f32 %v2495, %v2495
      %v2510 = vmul.f32 %v2496, %v2496
      %v2511 = vmul.f32 %v2497, %v2497
      %v2512 = vmul.f32 %v2498, %v2498
      %v2513 = vmul.f32 %v2499, %v2499
      %v2514 = vmul.f32 %v2500, %v2500
      %v2515 = vmul.f32 %v2501, %v2501
      %v2516 = vmul.f32 %v2502, %v2502
      %v2517 = vsub.f32 0.0, %v2503
      %v2518 = vsub.f32 0.0, %v2504
      %v2519 = vsub.f32 0.0, %v2505
      %v2520 = vsub.f32 0.0, %v2506
      %v2521 = vsub.f32 0.0, %v2507
      %v2522 = vsub.f32 0.0, %v2508
      %v2523 = vsub.f32 0.0, %v2509
      %v2524 = vsub.f32 0.0, %v2510
      %v2525 = vsub.f32 0.0, %v2511
      %v2526 = vsub.f32 0.0, %v2512
      %v2527 = vsub.f32 0.0, %v2513
      %v2528 = vsub.f32 0.0, %v2514
      %v2529 = vsub.f32 0.0, %v2515
      %v2530 = vsub.f32 0.0, %v2516
      %v2531 = vmul.f32 %v2517, 1.442695
      %v2532 = vpow.pop %v2531
      %v2533 = vmul.f32 %v2518, 1.442695
      %v2534 = vpow.pop %v2533
      %v2535 = vmul.f32 %v2519, 1.442695
      %v2536 = vpow.pop %v2535
      %v2537 = vmul.f32 %v2520, 1.442695
      %v2538 = vpow.pop %v2537
      %v2539 = vmul.f32 %v2521, 1.442695
      %v2540 = vpow.pop %v2539
      %v2541 = vmul.f32 %v2522, 1.442695
      %v2542 = vpow.pop %v2541
      %v2543 = vmul.f32 %v2523, 1.442695
      %v2544 = vpow.pop %v2543
      %v2545 = vmul.f32 %v2524, 1.442695
      %v2546 = vpow.pop %v2545
      %v2547 = vmul.f32 %v2525, 1.442695
      %v2548 = vpow.pop %v2547
      %v2549 = vmul.f32 %v2526, 1.442695
      %v2550 = vpow.pop %v2549
      %v2551 = vmul.f32 %v2527, 1.442695
      %v2552 = vpow.pop %v2551
      %v2553 = vmul.f32 %v2528, 1.442695
      %v2554 = vpow.pop %v2553
      %v2555 = vmul.f32 %v2529, 1.442695
      %v2556 = vpow.pop %v2555
      %v2557 = vmul.f32 %v2530, 1.442695
      %v2558 = vpow.pop %v2557
      %2573 = vrot.lane.b32.xlu0 %v2532, 24
      %v2574 = vpop.permute.xlu0 %2573
      %2575 = vrot.lane.b32.xlu0 %v2534, 24
      %v2576 = vpop.permute.xlu0 %2575
      %2577 = vrot.lane.b32.xlu0 %v2536, 24
      %v2578 = vpop.permute.xlu0 %2577
      %2579 = vrot.lane.b32.xlu0 %v2538, 24
      %v2580 = vpop.permute.xlu0 %2579
      %2581 = vrot.lane.b32.xlu0 %v2540, 24
      %v2582 = vpop.permute.xlu0 %2581
      %2583 = vrot.lane.b32.xlu0 %v2542, 24
      %v2584 = vpop.permute.xlu0 %2583
      %2585 = vrot.lane.b32.xlu0 %v2544, 24
      %v2586 = vpop.permute.xlu0 %2585
      %2587 = vrot.lane.b32.xlu0 %v2546, 24
      %v2588 = vpop.permute.xlu0 %2587
      %2589 = vrot.lane.b32.xlu0 %v2548, 24
      %v2590 = vpop.permute.xlu0 %2589
      %2591 = vrot.lane.b32.xlu0 %v2550, 24
      %v2592 = vpop.permute.xlu0 %2591
      %2593 = vrot.lane.b32.xlu0 %v2552, 24
      %v2594 = vpop.permute.xlu0 %2593
      %2595 = vrot.lane.b32.xlu0 %v2554, 24
      %v2596 = vpop.permute.xlu0 %2595
      %2597 = vrot.lane.b32.xlu0 %v2556, 24
      %v2598 = vpop.permute.xlu0 %2597
      %2599 = vrot.lane.b32.xlu0 %v2558, 24
      %v2600 = vpop.permute.xlu0 %2599
      %vm2615 = vcmask 261312
      %2616 = vst.msk [vmem:[#allocation5] sm:$0xff] %vm2615, %v2574
      %2617 = vst.msk [vmem:[#allocation5 + $0x8] sm:$0xff] %vm2615, %v2576
      %2618 = vst.msk [vmem:[#allocation5 + $0x10] sm:$0xff] %vm2615, %v2578
      %2619 = vst.msk [vmem:[#allocation5 + $0x18] sm:$0xff] %vm2615, %v2580
      %2620 = vst.msk [vmem:[#allocation5 + $0x20] sm:$0xff] %vm2615, %v2582
      %2621 = vst.msk [vmem:[#allocation5 + $0x28] sm:$0xff] %vm2615, %v2584
      %2622 = vst.msk [vmem:[#allocation5 + $0x30] sm:$0xff] %vm2615, %v2586
      %2623 = vst.msk [vmem:[#allocation5 + $0x38] sm:$0xff] %vm2615, %v2588
      %2624 = vst.msk [vmem:[#allocation5 + $0x40] sm:$0xff] %vm2615, %v2590
      %2625 = vst.msk [vmem:[#allocation5 + $0x48] sm:$0xff] %vm2615, %v2592
      %2626 = vst.msk [vmem:[#allocation5 + $0x50] sm:$0xff] %vm2615, %v2594
      %2627 = vst.msk [vmem:[#allocation5 + $0x58] sm:$0xff] %vm2615, %v2596
      %2628 = vst.msk [vmem:[#allocation5 + $0x60] sm:$0xff] %vm2615, %v2598
      %vm2629 = vcmask 259264
      %2630 = vst.msk [vmem:[#allocation5 + $0x68] sm:$0x3f] %vm2629, %v2600
      %v2631 = vsub.f32 %v2191, 1.5
      %v2632 = vsub.f32 %v2192, 1.5
      %v2633 = vsub.f32 %v2193, 1.5
      %v2634 = vsub.f32 %v2194, 1.5
      %v2635 = vsub.f32 %v2195, 1.5
      %v2636 = vsub.f32 %v2196, 1.5
      %v2637 = vsub.f32 %v2197, 1.5
      %v2638 = vsub.f32 %v2198, 1.5
      %v2639 = vsub.f32 %v2199, 1.5
      %v2640 = vsub.f32 %v2200, 1.5
      %v2641 = vsub.f32 %v2201, 1.5
      %v2642 = vsub.f32 %v2202, 1.5
      %v2643 = vsub.f32 %v2203, 1.5
      %v2644 = vsub.f32 %v2204, 1.5
      %v2645 = vmul.f32 %v2631, %v2631
      %v2646 = vmul.f32 %v2632, %v2632
      %v2647 = vmul.f32 %v2633, %v2633
      %v2648 = vmul.f32 %v2634, %v2634
      %v2649 = vmul.f32 %v2635, %v2635
      %v2650 = vmul.f32 %v2636, %v2636
      %v2651 = vmul.f32 %v2637, %v2637
      %v2652 = vmul.f32 %v2638, %v2638
      %v2653 = vmul.f32 %v2639, %v2639
      %v2654 = vmul.f32 %v2640, %v2640
      %v2655 = vmul.f32 %v2641, %v2641
      %v2656 = vmul.f32 %v2642, %v2642
      %v2657 = vmul.f32 %v2643, %v2643
      %v2658 = vmul.f32 %v2644, %v2644
      %v2659 = vsub.f32 0.0, %v2645
      %v2660 = vsub.f32 0.0, %v2646
      %v2661 = vsub.f32 0.0, %v2647
      %v2662 = vsub.f32 0.0, %v2648
      %v2663 = vsub.f32 0.0, %v2649
      %v2664 = vsub.f32 0.0, %v2650
      %v2665 = vsub.f32 0.0, %v2651
      %v2666 = vsub.f32 0.0, %v2652
      %v2667 = vsub.f32 0.0, %v2653
      %v2668 = vsub.f32 0.0, %v2654
      %v2669 = vsub.f32 0.0, %v2655
      %v2670 = vsub.f32 0.0, %v2656
      %v2671 = vsub.f32 0.0, %v2657
      %v2672 = vsub.f32 0.0, %v2658
      %v2673 = vmul.f32 %v2659, 1.442695
      %v2674 = vpow.pop %v2673
      %v2675 = vmul.f32 %v2660, 1.442695
      %v2676 = vpow.pop %v2675
      %v2677 = vmul.f32 %v2661, 1.442695
      %v2678 = vpow.pop %v2677
      %v2679 = vmul.f32 %v2662, 1.442695
      %v2680 = vpow.pop %v2679
      %v2681 = vmul.f32 %v2663, 1.442695
      %v2682 = vpow.pop %v2681
      %v2683 = vmul.f32 %v2664, 1.442695
      %v2684 = vpow.pop %v2683
      %v2685 = vmul.f32 %v2665, 1.442695
      %v2686 = vpow.pop %v2685
      %v2687 = vmul.f32 %v2666, 1.442695
      %v2688 = vpow.pop %v2687
      %v2689 = vmul.f32 %v2667, 1.442695
      %v2690 = vpow.pop %v2689
      %v2691 = vmul.f32 %v2668, 1.442695
      %v2692 = vpow.pop %v2691
      %v2693 = vmul.f32 %v2669, 1.442695
      %v2694 = vpow.pop %v2693
      %v2695 = vmul.f32 %v2670, 1.442695
      %v2696 = vpow.pop %v2695
      %v2697 = vmul.f32 %v2671, 1.442695
      %v2698 = vpow.pop %v2697
      %v2699 = vmul.f32 %v2672, 1.442695
      %v2700 = vpow.pop %v2699
      %2715 = vrot.lane.b32.xlu0 %v2674, 32
      %v2716 = vpop.permute.xlu0 %2715
      %2717 = vrot.lane.b32.xlu0 %v2676, 32
      %v2718 = vpop.permute.xlu0 %2717
      %2719 = vrot.lane.b32.xlu0 %v2678, 32
      %v2720 = vpop.permute.xlu0 %2719
      %2721 = vrot.lane.b32.xlu0 %v2680, 32
      %v2722 = vpop.permute.xlu0 %2721
      %2723 = vrot.lane.b32.xlu0 %v2682, 32
      %v2724 = vpop.permute.xlu0 %2723
      %2725 = vrot.lane.b32.xlu0 %v2684, 32
      %v2726 = vpop.permute.xlu0 %2725
      %2727 = vrot.lane.b32.xlu0 %v2686, 32
      %v2728 = vpop.permute.xlu0 %2727
      %2729 = vrot.lane.b32.xlu0 %v2688, 32
      %v2730 = vpop.permute.xlu0 %2729
      %2731 = vrot.lane.b32.xlu0 %v2690, 32
      %v2732 = vpop.permute.xlu0 %2731
      %2733 = vrot.lane.b32.xlu0 %v2692, 32
      %v2734 = vpop.permute.xlu0 %2733
      %2735 = vrot.lane.b32.xlu0 %v2694, 32
      %v2736 = vpop.permute.xlu0 %2735
      %2737 = vrot.lane.b32.xlu0 %v2696, 32
      %v2738 = vpop.permute.xlu0 %2737
      %2739 = vrot.lane.b32.xlu0 %v2698, 32
      %v2740 = vpop.permute.xlu0 %2739
      %2741 = vrot.lane.b32.xlu0 %v2700, 32
      %v2742 = vpop.permute.xlu0 %2741
      %vm2757 = vcmask 326912
      %2758 = vst.msk [vmem:[#allocation5] sm:$0xff] %vm2757, %v2716
      %2759 = vst.msk [vmem:[#allocation5 + $0x8] sm:$0xff] %vm2757, %v2718
      %2760 = vst.msk [vmem:[#allocation5 + $0x10] sm:$0xff] %vm2757, %v2720
      %2761 = vst.msk [vmem:[#allocation5 + $0x18] sm:$0xff] %vm2757, %v2722
      %2762 = vst.msk [vmem:[#allocation5 + $0x20] sm:$0xff] %vm2757, %v2724
      %2763 = vst.msk [vmem:[#allocation5 + $0x28] sm:$0xff] %vm2757, %v2726
      %2764 = vst.msk [vmem:[#allocation5 + $0x30] sm:$0xff] %vm2757, %v2728
      %2765 = vst.msk [vmem:[#allocation5 + $0x38] sm:$0xff] %vm2757, %v2730
      %2766 = vst.msk [vmem:[#allocation5 + $0x40] sm:$0xff] %vm2757, %v2732
      %2767 = vst.msk [vmem:[#allocation5 + $0x48] sm:$0xff] %vm2757, %v2734
      %2768 = vst.msk [vmem:[#allocation5 + $0x50] sm:$0xff] %vm2757, %v2736
      %2769 = vst.msk [vmem:[#allocation5 + $0x58] sm:$0xff] %vm2757, %v2738
      %2770 = vst.msk [vmem:[#allocation5 + $0x60] sm:$0xff] %vm2757, %v2740
      %vm2771 = vcmask 324864
      %2772 = vst.msk [vmem:[#allocation5 + $0x68] sm:$0x3f] %vm2771, %v2742
      %v2773 = vld [vmem:[#allocation5] sm:$0xff]
      %v2774 = vld [vmem:[#allocation5 + $0x8] sm:$0xff]
      %v2775 = vld [vmem:[#allocation5 + $0x10] sm:$0xff]
      %v2776 = vld [vmem:[#allocation5 + $0x18] sm:$0xff]
      %v2777 = vld [vmem:[#allocation5 + $0x20] sm:$0xff]
      %v2778 = vld [vmem:[#allocation5 + $0x28] sm:$0xff]
      %v2779 = vld [vmem:[#allocation5 + $0x30] sm:$0xff]
      %v2780 = vld [vmem:[#allocation5 + $0x38] sm:$0xff]
      %v2781 = vld [vmem:[#allocation5 + $0x40] sm:$0xff]
      %v2782 = vld [vmem:[#allocation5 + $0x48] sm:$0xff]
      %vm2783 = vcmask 326656
      %2784 = vst.msk [vmem:[#allocation6] sm:$0xff] %vm2783, %v2773
      %2785 = vst.msk [vmem:[#allocation6 + $0x18] sm:$0xff] %vm2783, %v2774
      %2786 = vst.msk [vmem:[#allocation6 + $0x30] sm:$0xff] %vm2783, %v2775
      %2787 = vst.msk [vmem:[#allocation6 + $0x48] sm:$0xff] %vm2783, %v2776
      %2788 = vst.msk [vmem:[#allocation6 + $0x60] sm:$0xff] %vm2783, %v2777
      %2789 = vst.msk [vmem:[#allocation6 + $0x78] sm:$0xff] %vm2783, %v2778
      %2790 = vst.msk [vmem:[#allocation6 + $0x90] sm:$0xff] %vm2783, %v2779
      %2791 = vst.msk [vmem:[#allocation6 + $0xa8] sm:$0xff] %vm2783, %v2780
      %2792 = vst.msk [vmem:[#allocation6 + $0xc0] sm:$0xff] %vm2783, %v2781
      %2793 = vst.msk [vmem:[#allocation6 + $0xd8] sm:$0xff] %vm2783, %v2782
      %v2794 = vld [vmem:[#allocation5 + $0x1] sm:$0xff]
      %v2795 = vld [vmem:[#allocation5 + $0x9] sm:$0xff]
      %v2796 = vld [vmem:[#allocation5 + $0x11] sm:$0xff]
      %v2797 = vld [vmem:[#allocation5 + $0x19] sm:$0xff]
      %v2798 = vld [vmem:[#allocation5 + $0x21] sm:$0xff]
      %v2799 = vld [vmem:[#allocation5 + $0x29] sm:$0xff]
      %v2800 = vld [vmem:[#allocation5 + $0x31] sm:$0xff]
      %v2801 = vld [vmem:[#allocation5 + $0x39] sm:$0xff]
      %v2802 = vld [vmem:[#allocation5 + $0x41] sm:$0xff]
      %v2803 = vld [vmem:[#allocation5 + $0x49] sm:$0xff]
      %2814 = vrot.lane.b32.xlu0 %v2794, 40
      %v2815 = vpop.permute.xlu0 %2814
      %2816 = vrot.lane.b32.xlu0 %v2795, 40
      %v2817 = vpop.permute.xlu0 %2816
      %2818 = vrot.lane.b32.xlu0 %v2796, 40
      %v2819 = vpop.permute.xlu0 %2818
      %2820 = vrot.lane.b32.xlu0 %v2797, 40
      %v2821 = vpop.permute.xlu0 %2820
      %2822 = vrot.lane.b32.xlu0 %v2798, 40
      %v2823 = vpop.permute.xlu0 %2822
      %2824 = vrot.lane.b32.xlu0 %v2799, 40
      %v2825 = vpop.permute.xlu0 %2824
      %2826 = vrot.lane.b32.xlu0 %v2800, 40
      %v2827 = vpop.permute.xlu0 %2826
      %2828 = vrot.lane.b32.xlu0 %v2801, 40
      %v2829 = vpop.permute.xlu0 %2828
      %2830 = vrot.lane.b32.xlu0 %v2802, 40
      %v2831 = vpop.permute.xlu0 %2830
      %2832 = vrot.lane.b32.xlu0 %v2803, 40
      %v2833 = vpop.permute.xlu0 %2832
      %vm2844 = vcmask 654656
      %2845 = vst.msk [vmem:[#allocation6] sm:$0xff] %vm2844, %v2815
      %2846 = vst.msk [vmem:[#allocation6 + $0x18] sm:$0xff] %vm2844, %v2817
      %2847 = vst.msk [vmem:[#allocation6 + $0x30] sm:$0xff] %vm2844, %v2819
      %2848 = vst.msk [vmem:[#allocation6 + $0x48] sm:$0xff] %vm2844, %v2821
      %2849 = vst.msk [vmem:[#allocation6 + $0x60] sm:$0xff] %vm2844, %v2823
      %2850 = vst.msk [vmem:[#allocation6 + $0x78] sm:$0xff] %vm2844, %v2825
      %2851 = vst.msk [vmem:[#allocation6 + $0x90] sm:$0xff] %vm2844, %v2827
      %2852 = vst.msk [vmem:[#allocation6 + $0xa8] sm:$0xff] %vm2844, %v2829
      %2853 = vst.msk [vmem:[#allocation6 + $0xc0] sm:$0xff] %vm2844, %v2831
      %2854 = vst.msk [vmem:[#allocation6 + $0xd8] sm:$0xff] %vm2844, %v2833
      %v2855 = vld [vmem:[#allocation5 + $0x2] sm:$0xff]
      %v2856 = vld [vmem:[#allocation5 + $0xa] sm:$0xff]
      %v2857 = vld [vmem:[#allocation5 + $0x12] sm:$0xff]
      %v2858 = vld [vmem:[#allocation5 + $0x1a] sm:$0xff]
      %v2859 = vld [vmem:[#allocation5 + $0x22] sm:$0xff]
      %v2860 = vld [vmem:[#allocation5 + $0x2a] sm:$0xff]
      %v2861 = vld [vmem:[#allocation5 + $0x32] sm:$0xff]
      %v2862 = vld [vmem:[#allocation5 + $0x3a] sm:$0xff]
      %v2863 = vld [vmem:[#allocation5 + $0x42] sm:$0xff]
      %v2864 = vld [vmem:[#allocation5 + $0x4a] sm:$0xff]
      %2875 = vrot.lane.b32.xlu0 %v2855, 80
      %v2876 = vpop.permute.xlu0 %2875
      %2877 = vrot.lane.b32.xlu0 %v2856, 80
      %v2878 = vpop.permute.xlu0 %2877
      %2879 = vrot.lane.b32.xlu0 %v2857, 80
      %v2880 = vpop.permute.xlu0 %2879
      %2881 = vrot.lane.b32.xlu0 %v2858, 80
      %v2882 = vpop.permute.xlu0 %2881
      %2883 = vrot.lane.b32.xlu0 %v2859, 80
      %v2884 = vpop.permute.xlu0 %2883
      %2885 = vrot.lane.b32.xlu0 %v2860, 80
      %v2886 = vpop.permute.xlu0 %2885
      %2887 = vrot.lane.b32.xlu0 %v2861, 80
      %v2888 = vpop.permute.xlu0 %2887
      %2889 = vrot.lane.b32.xlu0 %v2862, 80
      %v2890 = vpop.permute.xlu0 %2889
      %2891 = vrot.lane.b32.xlu0 %v2863, 80
      %v2892 = vpop.permute.xlu0 %2891
      %2893 = vrot.lane.b32.xlu0 %v2864, 80
      %v2894 = vpop.permute.xlu0 %2893
      %vm2905 = vcmask 982656
      %2906 = vst.msk [vmem:[#allocation6] sm:$0xff] %vm2905, %v2876
      %2907 = vst.msk [vmem:[#allocation6 + $0x18] sm:$0xff] %vm2905, %v2878
      %2908 = vst.msk [vmem:[#allocation6 + $0x30] sm:$0xff] %vm2905, %v2880
      %2909 = vst.msk [vmem:[#allocation6 + $0x48] sm:$0xff] %vm2905, %v2882
      %2910 = vst.msk [vmem:[#allocation6 + $0x60] sm:$0xff] %vm2905, %v2884
      %2911 = vst.msk [vmem:[#allocation6 + $0x78] sm:$0xff] %vm2905, %v2886
      %2912 = vst.msk [vmem:[#allocation6 + $0x90] sm:$0xff] %vm2905, %v2888
      %2913 = vst.msk [vmem:[#allocation6 + $0xa8] sm:$0xff] %vm2905, %v2890
      %2914 = vst.msk [vmem:[#allocation6 + $0xc0] sm:$0xff] %vm2905, %v2892
      %2915 = vst.msk [vmem:[#allocation6 + $0xd8] sm:$0xff] %vm2905, %v2894
      %v2916 = vld [vmem:[#allocation5 + $0xa] sm:$0xff]
      %v2917 = vld [vmem:[#allocation5 + $0x12] sm:$0xff]
      %v2918 = vld [vmem:[#allocation5 + $0x1a] sm:$0xff]
      %v2919 = vld [vmem:[#allocation5 + $0x22] sm:$0xff]
      %v2920 = vld [vmem:[#allocation5 + $0x2a] sm:$0xff]
      %v2921 = vld [vmem:[#allocation5 + $0x32] sm:$0xff]
      %v2922 = vld [vmem:[#allocation5 + $0x3a] sm:$0xff]
      %v2923 = vld [vmem:[#allocation5 + $0x42] sm:$0xff]
      %v2924 = vld [vmem:[#allocation5 + $0x4a] sm:$0xff]
      %v2925 = vld [vmem:[#allocation5 + $0x52] sm:$0xff]
      %2936 = vrot.lane.b32.xlu0 %v2916, 120
      %v2937 = vpop.permute.xlu0 %2936
      %2938 = vrot.lane.b32.xlu0 %v2917, 120
      %v2939 = vpop.permute.xlu0 %2938
      %2940 = vrot.lane.b32.xlu0 %v2918, 120
      %v2941 = vpop.permute.xlu0 %2940
      %2942 = vrot.lane.b32.xlu0 %v2919, 120
      %v2943 = vpop.permute.xlu0 %2942
      %2944 = vrot.lane.b32.xlu0 %v2920, 120
      %v2945 = vpop.permute.xlu0 %2944
      %2946 = vrot.lane.b32.xlu0 %v2921, 120
      %v2947 = vpop.permute.xlu0 %2946
      %2948 = vrot.lane.b32.xlu0 %v2922, 120
      %v2949 = vpop.permute.xlu0 %2948
      %2950 = vrot.lane.b32.xlu0 %v2923, 120
      %v2951 = vpop.permute.xlu0 %2950
      %2952 = vrot.lane.b32.xlu0 %v2924, 120
      %v2953 = vpop.permute.xlu0 %2952
      %2954 = vrot.lane.b32.xlu0 %v2925, 120
      %v2955 = vpop.permute.xlu0 %2954
      %2966 = vst.msk [vmem:[#allocation6] sm:$0xff] %vm1452, %v2937
      %vm2967 = vcmask 261120
      %2968 = vst.msk [vmem:[#allocation6 + $0x8] sm:$0xff] %vm2967, %v2937
      %2969 = vst.msk [vmem:[#allocation6 + $0x18] sm:$0xff] %vm1452, %v2939
      %2970 = vst.msk [vmem:[#allocation6 + $0x20] sm:$0xff] %vm2967, %v2939
      %2971 = vst.msk [vmem:[#allocation6 + $0x30] sm:$0xff] %vm1452, %v2941
      %2972 = vst.msk [vmem:[#allocation6 + $0x38] sm:$0xff] %vm2967, %v2941
      %2973 = vst.msk [vmem:[#allocation6 + $0x48] sm:$0xff] %vm1452, %v2943
      %2974 = vst.msk [vmem:[#allocation6 + $0x50] sm:$0xff] %vm2967, %v2943
      %2975 = vst.msk [vmem:[#allocation6 + $0x60] sm:$0xff] %vm1452, %v2945
      %2976 = vst.msk [vmem:[#allocation6 + $0x68] sm:$0xff] %vm2967, %v2945
      %2977 = vst.msk [vmem:[#allocation6 + $0x78] sm:$0xff] %vm1452, %v2947
      %2978 = vst.msk [vmem:[#allocation6 + $0x80] sm:$0xff] %vm2967, %v2947
      %2979 = vst.msk [vmem:[#allocation6 + $0x90] sm:$0xff] %vm1452, %v2949
      %2980 = vst.msk [vmem:[#allocation6 + $0x98] sm:$0xff] %vm2967, %v2949
      %2981 = vst.msk [vmem:[#allocation6 + $0xa8] sm:$0xff] %vm1452, %v2951
      %2982 = vst.msk [vmem:[#allocation6 + $0xb0] sm:$0xff] %vm2967, %v2951
      %2983 = vst.msk [vmem:[#allocation6 + $0xc0] sm:$0xff] %vm1452, %v2953
      %2984 = vst.msk [vmem:[#allocation6 + $0xc8] sm:$0xff] %vm2967, %v2953
      %2985 = vst.msk [vmem:[#allocation6 + $0xd8] sm:$0xff] %vm1452, %v2955
      %2986 = vst.msk [vmem:[#allocation6 + $0xe0] sm:$0xff] %vm2967, %v2955
      %v2987 = vld [vmem:[#allocation5 + $0xb] sm:$0xff]
      %v2988 = vld [vmem:[#allocation5 + $0x13] sm:$0xff]
      %v2989 = vld [vmem:[#allocation5 + $0x1b] sm:$0xff]
      %v2990 = vld [vmem:[#allocation5 + $0x23] sm:$0xff]
      %v2991 = vld [vmem:[#allocation5 + $0x2b] sm:$0xff]
      %v2992 = vld [vmem:[#allocation5 + $0x33] sm:$0xff]
      %v2993 = vld [vmem:[#allocation5 + $0x3b] sm:$0xff]
      %v2994 = vld [vmem:[#allocation5 + $0x43] sm:$0xff]
      %v2995 = vld [vmem:[#allocation5 + $0x4b] sm:$0xff]
      %v2996 = vld [vmem:[#allocation5 + $0x53] sm:$0xff]
      %3007 = vrot.lane.b32.xlu0 %v2987, 32
      %v3008 = vpop.permute.xlu0 %3007
      %3009 = vrot.lane.b32.xlu0 %v2988, 32
      %v3010 = vpop.permute.xlu0 %3009
      %3011 = vrot.lane.b32.xlu0 %v2989, 32
      %v3012 = vpop.permute.xlu0 %3011
      %3013 = vrot.lane.b32.xlu0 %v2990, 32
      %v3014 = vpop.permute.xlu0 %3013
      %3015 = vrot.lane.b32.xlu0 %v2991, 32
      %v3016 = vpop.permute.xlu0 %3015
      %3017 = vrot.lane.b32.xlu0 %v2992, 32
      %v3018 = vpop.permute.xlu0 %3017
      %3019 = vrot.lane.b32.xlu0 %v2993, 32
      %v3020 = vpop.permute.xlu0 %3019
      %3021 = vrot.lane.b32.xlu0 %v2994, 32
      %v3022 = vpop.permute.xlu0 %3021
      %3023 = vrot.lane.b32.xlu0 %v2995, 32
      %v3024 = vpop.permute.xlu0 %3023
      %3025 = vrot.lane.b32.xlu0 %v2996, 32
      %v3026 = vpop.permute.xlu0 %3025
      %vm3037 = vcmask 589056
      %3038 = vst.msk [vmem:[#allocation6 + $0x8] sm:$0xff] %vm3037, %v3008
      %3039 = vst.msk [vmem:[#allocation6 + $0x20] sm:$0xff] %vm3037, %v3010
      %3040 = vst.msk [vmem:[#allocation6 + $0x38] sm:$0xff] %vm3037, %v3012
      %3041 = vst.msk [vmem:[#allocation6 + $0x50] sm:$0xff] %vm3037, %v3014
      %3042 = vst.msk [vmem:[#allocation6 + $0x68] sm:$0xff] %vm3037, %v3016
      %3043 = vst.msk [vmem:[#allocation6 + $0x80] sm:$0xff] %vm3037, %v3018
      %3044 = vst.msk [vmem:[#allocation6 + $0x98] sm:$0xff] %vm3037, %v3020
      %3045 = vst.msk [vmem:[#allocation6 + $0xb0] sm:$0xff] %vm3037, %v3022
      %3046 = vst.msk [vmem:[#allocation6 + $0xc8] sm:$0xff] %vm3037, %v3024
      %3047 = vst.msk [vmem:[#allocation6 + $0xe0] sm:$0xff] %vm3037, %v3026
      %v3048 = vld [vmem:[#allocation5 + $0xc] sm:$0xff]
      %v3049 = vld [vmem:[#allocation5 + $0x14] sm:$0xff]
      %v3050 = vld [vmem:[#allocation5 + $0x1c] sm:$0xff]
      %v3051 = vld [vmem:[#allocation5 + $0x24] sm:$0xff]
      %v3052 = vld [vmem:[#allocation5 + $0x2c] sm:$0xff]
      %v3053 = vld [vmem:[#allocation5 + $0x34] sm:$0xff]
      %v3054 = vld [vmem:[#allocation5 + $0x3c] sm:$0xff]
      %v3055 = vld [vmem:[#allocation5 + $0x44] sm:$0xff]
      %v3056 = vld [vmem:[#allocation5 + $0x4c] sm:$0xff]
      %v3057 = vld [vmem:[#allocation5 + $0x54] sm:$0xff]
      %3068 = vrot.lane.b32.xlu0 %v3048, 72
      %v3069 = vpop.permute.xlu0 %3068
      %3070 = vrot.lane.b32.xlu0 %v3049, 72
      %v3071 = vpop.permute.xlu0 %3070
      %3072 = vrot.lane.b32.xlu0 %v3050, 72
      %v3073 = vpop.permute.xlu0 %3072
      %3074 = vrot.lane.b32.xlu0 %v3051, 72
      %v3075 = vpop.permute.xlu0 %3074
      %3076 = vrot.lane.b32.xlu0 %v3052, 72
      %v3077 = vpop.permute.xlu0 %3076
      %3078 = vrot.lane.b32.xlu0 %v3053, 72
      %v3079 = vpop.permute.xlu0 %3078
      %3080 = vrot.lane.b32.xlu0 %v3054, 72
      %v3081 = vpop.permute.xlu0 %3080
      %3082 = vrot.lane.b32.xlu0 %v3055, 72
      %v3083 = vpop.permute.xlu0 %3082
      %3084 = vrot.lane.b32.xlu0 %v3056, 72
      %v3085 = vpop.permute.xlu0 %3084
      %3086 = vrot.lane.b32.xlu0 %v3057, 72
      %v3087 = vpop.permute.xlu0 %3086
      %vm3098 = vcmask 917056
      %3099 = vst.msk [vmem:[#allocation6 + $0x8] sm:$0xff] %vm3098, %v3069
      %3100 = vst.msk [vmem:[#allocation6 + $0x20] sm:$0xff] %vm3098, %v3071
      %3101 = vst.msk [vmem:[#allocation6 + $0x38] sm:$0xff] %vm3098, %v3073
      %3102 = vst.msk [vmem:[#allocation6 + $0x50] sm:$0xff] %vm3098, %v3075
      %3103 = vst.msk [vmem:[#allocation6 + $0x68] sm:$0xff] %vm3098, %v3077
      %3104 = vst.msk [vmem:[#allocation6 + $0x80] sm:$0xff] %vm3098, %v3079
      %3105 = vst.msk [vmem:[#allocation6 + $0x98] sm:$0xff] %vm3098, %v3081
      %3106 = vst.msk [vmem:[#allocation6 + $0xb0] sm:$0xff] %vm3098, %v3083
      %3107 = vst.msk [vmem:[#allocation6 + $0xc8] sm:$0xff] %vm3098, %v3085
      %3108 = vst.msk [vmem:[#allocation6 + $0xe0] sm:$0xff] %vm3098, %v3087
      %v3109 = vld [vmem:[#allocation5 + $0x14] sm:$0xff]
      %v3110 = vld [vmem:[#allocation5 + $0x1c] sm:$0xff]
      %v3111 = vld [vmem:[#allocation5 + $0x24] sm:$0xff]
      %v3112 = vld [vmem:[#allocation5 + $0x2c] sm:$0xff]
      %v3113 = vld [vmem:[#allocation5 + $0x34] sm:$0xff]
      %v3114 = vld [vmem:[#allocation5 + $0x3c] sm:$0xff]
      %v3115 = vld [vmem:[#allocation5 + $0x44] sm:$0xff]
      %v3116 = vld [vmem:[#allocation5 + $0x4c] sm:$0xff]
      %v3117 = vld [vmem:[#allocation5 + $0x54] sm:$0xff]
      %v3118 = vld [vmem:[#allocation5 + $0x5c] sm:$0xff]
      %3129 = vrot.lane.b32.xlu0 %v3109, 112
      %v3130 = vpop.permute.xlu0 %3129
      %3131 = vrot.lane.b32.xlu0 %v3110, 112
      %v3132 = vpop.permute.xlu0 %3131
      %3133 = vrot.lane.b32.xlu0 %v3111, 112
      %v3134 = vpop.permute.xlu0 %3133
      %3135 = vrot.lane.b32.xlu0 %v3112, 112
      %v3136 = vpop.permute.xlu0 %3135
      %3137 = vrot.lane.b32.xlu0 %v3113, 112
      %v3138 = vpop.permute.xlu0 %3137
      %3139 = vrot.lane.b32.xlu0 %v3114, 112
      %v3140 = vpop.permute.xlu0 %3139
      %3141 = vrot.lane.b32.xlu0 %v3115, 112
      %v3142 = vpop.permute.xlu0 %3141
      %3143 = vrot.lane.b32.xlu0 %v3116, 112
      %v3144 = vpop.permute.xlu0 %3143
      %3145 = vrot.lane.b32.xlu0 %v3117, 112
      %v3146 = vpop.permute.xlu0 %3145
      %3147 = vrot.lane.b32.xlu0 %v3118, 112
      %v3148 = vpop.permute.xlu0 %3147
      %vm3159 = vcmask 1048448
      %3160 = vst.msk [vmem:[#allocation6 + $0x8] sm:$0xff] %vm3159, %v3130
      %vm3161 = vcmask 195584
      %3162 = vst.msk [vmem:[#allocation6 + $0x10] sm:$0xff] %vm3161, %v3130
      %3163 = vst.msk [vmem:[#allocation6 + $0x20] sm:$0xff] %vm3159, %v3132
      %3164 = vst.msk [vmem:[#allocation6 + $0x28] sm:$0xff] %vm3161, %v3132
      %3165 = vst.msk [vmem:[#allocation6 + $0x38] sm:$0xff] %vm3159, %v3134
      %3166 = vst.msk [vmem:[#allocation6 + $0x40] sm:$0xff] %vm3161, %v3134
      %3167 = vst.msk [vmem:[#allocation6 + $0x50] sm:$0xff] %vm3159, %v3136
      %3168 = vst.msk [vmem:[#allocation6 + $0x58] sm:$0xff] %vm3161, %v3136
      %3169 = vst.msk [vmem:[#allocation6 + $0x68] sm:$0xff] %vm3159, %v3138
      %3170 = vst.msk [vmem:[#allocation6 + $0x70] sm:$0xff] %vm3161, %v3138
      %3171 = vst.msk [vmem:[#allocation6 + $0x80] sm:$0xff] %vm3159, %v3140
      %3172 = vst.msk [vmem:[#allocation6 + $0x88] sm:$0xff] %vm3161, %v3140
      %3173 = vst.msk [vmem:[#allocation6 + $0x98] sm:$0xff] %vm3159, %v3142
      %3174 = vst.msk [vmem:[#allocation6 + $0xa0] sm:$0xff] %vm3161, %v3142
      %3175 = vst.msk [vmem:[#allocation6 + $0xb0] sm:$0xff] %vm3159, %v3144
      %3176 = vst.msk [vmem:[#allocation6 + $0xb8] sm:$0xff] %vm3161, %v3144
      %3177 = vst.msk [vmem:[#allocation6 + $0xc8] sm:$0xff] %vm3159, %v3146
      %3178 = vst.msk [vmem:[#allocation6 + $0xd0] sm:$0xff] %vm3161, %v3146
      %3179 = vst.msk [vmem:[#allocation6 + $0xe0] sm:$0xff] %vm3159, %v3148
      %3180 = vst.msk [vmem:[#allocation6 + $0xe8] sm:$0xff] %vm3161, %v3148
      %v3181 = vld [vmem:[#allocation5 + $0x15] sm:$0xff]
      %v3182 = vld [vmem:[#allocation5 + $0x1d] sm:$0xff]
      %v3183 = vld [vmem:[#allocation5 + $0x25] sm:$0xff]
      %v3184 = vld [vmem:[#allocation5 + $0x2d] sm:$0xff]
      %v3185 = vld [vmem:[#allocation5 + $0x35] sm:$0xff]
      %v3186 = vld [vmem:[#allocation5 + $0x3d] sm:$0xff]
      %v3187 = vld [vmem:[#allocation5 + $0x45] sm:$0xff]
      %v3188 = vld [vmem:[#allocation5 + $0x4d] sm:$0xff]
      %v3189 = vld [vmem:[#allocation5 + $0x55] sm:$0xff]
      %v3190 = vld [vmem:[#allocation5 + $0x5d] sm:$0xff]
      %3201 = vrot.lane.b32.xlu0 %v3181, 24
      %v3202 = vpop.permute.xlu0 %3201
      %3203 = vrot.lane.b32.xlu0 %v3182, 24
      %v3204 = vpop.permute.xlu0 %3203
      %3205 = vrot.lane.b32.xlu0 %v3183, 24
      %v3206 = vpop.permute.xlu0 %3205
      %3207 = vrot.lane.b32.xlu0 %v3184, 24
      %v3208 = vpop.permute.xlu0 %3207
      %3209 = vrot.lane.b32.xlu0 %v3185, 24
      %v3210 = vpop.permute.xlu0 %3209
      %3211 = vrot.lane.b32.xlu0 %v3186, 24
      %v3212 = vpop.permute.xlu0 %3211
      %3213 = vrot.lane.b32.xlu0 %v3187, 24
      %v3214 = vpop.permute.xlu0 %3213
      %3215 = vrot.lane.b32.xlu0 %v3188, 24
      %v3216 = vpop.permute.xlu0 %3215
      %3217 = vrot.lane.b32.xlu0 %v3189, 24
      %v3218 = vpop.permute.xlu0 %3217
      %3219 = vrot.lane.b32.xlu0 %v3190, 24
      %v3220 = vpop.permute.xlu0 %3219
      %vm3231 = vcmask 523456
      %3232 = vst.msk [vmem:[#allocation6 + $0x10] sm:$0xff] %vm3231, %v3202
      %3233 = vst.msk [vmem:[#allocation6 + $0x28] sm:$0xff] %vm3231, %v3204
      %3234 = vst.msk [vmem:[#allocation6 + $0x40] sm:$0xff] %vm3231, %v3206
      %3235 = vst.msk [vmem:[#allocation6 + $0x58] sm:$0xff] %vm3231, %v3208
      %3236 = vst.msk [vmem:[#allocation6 + $0x70] sm:$0xff] %vm3231, %v3210
      %3237 = vst.msk [vmem:[#allocation6 + $0x88] sm:$0xff] %vm3231, %v3212
      %3238 = vst.msk [vmem:[#allocation6 + $0xa0] sm:$0xff] %vm3231, %v3214
      %3239 = vst.msk [vmem:[#allocation6 + $0xb8] sm:$0xff] %vm3231, %v3216
      %3240 = vst.msk [vmem:[#allocation6 + $0xd0] sm:$0xff] %vm3231, %v3218
      %3241 = vst.msk [vmem:[#allocation6 + $0xe8] sm:$0xff] %vm3231, %v3220
      %v3242 = vld [vmem:[#allocation5 + $0x16] sm:$0xff]
      %v3243 = vld [vmem:[#allocation5 + $0x1e] sm:$0xff]
      %v3244 = vld [vmem:[#allocation5 + $0x26] sm:$0xff]
      %v3245 = vld [vmem:[#allocation5 + $0x2e] sm:$0xff]
      %v3246 = vld [vmem:[#allocation5 + $0x36] sm:$0xff]
      %v3247 = vld [vmem:[#allocation5 + $0x3e] sm:$0xff]
      %v3248 = vld [vmem:[#allocation5 + $0x46] sm:$0xff]
      %v3249 = vld [vmem:[#allocation5 + $0x4e] sm:$0xff]
      %v3250 = vld [vmem:[#allocation5 + $0x56] sm:$0xff]
      %v3251 = vld [vmem:[#allocation5 + $0x5e] sm:$0xff]
      %3262 = vrot.lane.b32.xlu0 %v3242, 64
      %v3263 = vpop.permute.xlu0 %3262
      %3264 = vrot.lane.b32.xlu0 %v3243, 64
      %v3265 = vpop.permute.xlu0 %3264
      %3266 = vrot.lane.b32.xlu0 %v3244, 64
      %v3267 = vpop.permute.xlu0 %3266
      %3268 = vrot.lane.b32.xlu0 %v3245, 64
      %v3269 = vpop.permute.xlu0 %3268
      %3270 = vrot.lane.b32.xlu0 %v3246, 64
      %v3271 = vpop.permute.xlu0 %3270
      %3272 = vrot.lane.b32.xlu0 %v3247, 64
      %v3273 = vpop.permute.xlu0 %3272
      %3274 = vrot.lane.b32.xlu0 %v3248, 64
      %v3275 = vpop.permute.xlu0 %3274
      %3276 = vrot.lane.b32.xlu0 %v3249, 64
      %v3277 = vpop.permute.xlu0 %3276
      %3278 = vrot.lane.b32.xlu0 %v3250, 64
      %v3279 = vpop.permute.xlu0 %3278
      %3280 = vrot.lane.b32.xlu0 %v3251, 64
      %v3281 = vpop.permute.xlu0 %3280
      %vm3292 = vcmask 851456
      %3293 = vst.msk [vmem:[#allocation6 + $0x10] sm:$0xff] %vm3292, %v3263
      %3294 = vst.msk [vmem:[#allocation6 + $0x28] sm:$0xff] %vm3292, %v3265
      %3295 = vst.msk [vmem:[#allocation6 + $0x40] sm:$0xff] %vm3292, %v3267
      %3296 = vst.msk [vmem:[#allocation6 + $0x58] sm:$0xff] %vm3292, %v3269
      %3297 = vst.msk [vmem:[#allocation6 + $0x70] sm:$0xff] %vm3292, %v3271
      %3298 = vst.msk [vmem:[#allocation6 + $0x88] sm:$0xff] %vm3292, %v3273
      %3299 = vst.msk [vmem:[#allocation6 + $0xa0] sm:$0xff] %vm3292, %v3275
      %3300 = vst.msk [vmem:[#allocation6 + $0xb8] sm:$0xff] %vm3292, %v3277
      %3301 = vst.msk [vmem:[#allocation6 + $0xd0] sm:$0xff] %vm3292, %v3279
      %3302 = vst.msk [vmem:[#allocation6 + $0xe8] sm:$0xff] %vm3292, %v3281
      %v3303 = vld [vmem:[#allocation6] sm:$0xff]
      %v3304 = vld [vmem:[#allocation6 + $0x8] sm:$0xff]
      %v3305 = vld [vmem:[#allocation6 + $0x10] sm:$0xff]
      %v3306 = vld [vmem:[#allocation6 + $0x18] sm:$0xff]
      %v3307 = vld [vmem:[#allocation6 + $0x20] sm:$0xff]
      %v3308 = vld [vmem:[#allocation6 + $0x28] sm:$0xff]
      %v3309 = vld [vmem:[#allocation6 + $0x30] sm:$0xff]
      %v3310 = vld [vmem:[#allocation6 + $0x38] sm:$0xff]
      %v3311 = vld [vmem:[#allocation6 + $0x40] sm:$0xff]
      %v3312 = vld [vmem:[#allocation6 + $0x48] sm:$0xff]
      %v3313 = vld [vmem:[#allocation6 + $0x50] sm:$0xff]
      %v3314 = vld [vmem:[#allocation6 + $0x58] sm:$0xff]
      %v3315 = vld [vmem:[#allocation6 + $0x60] sm:$0xff]
      %v3316 = vld [vmem:[#allocation6 + $0x68] sm:$0xff]
      %v3317 = vld [vmem:[#allocation6 + $0x70] sm:$0xff]
      %v3318 = vld [vmem:[#allocation6 + $0x78] sm:$0xff]
      %v3319 = vld [vmem:[#allocation6 + $0x80] sm:$0xff]
      %v3320 = vld [vmem:[#allocation6 + $0x88] sm:$0xff]
      %v3321 = vld [vmem:[#allocation6 + $0x90] sm:$0xff]
      %v3322 = vld [vmem:[#allocation6 + $0x98] sm:$0xff]
      %v3323 = vld [vmem:[#allocation6 + $0xa0] sm:$0xff]
      %v3324 = vld [vmem:[#allocation6 + $0xa8] sm:$0xff]
      %v3325 = vld [vmem:[#allocation6 + $0xb0] sm:$0xff]
      %v3326 = vld [vmem:[#allocation6 + $0xb8] sm:$0xff]
      %v3327 = vld [vmem:[#allocation6 + $0xc0] sm:$0xff]
      %v3328 = vld [vmem:[#allocation6 + $0xc8] sm:$0xff]
      %v3329 = vld [vmem:[#allocation6 + $0xd0] sm:$0xff]
      %v3330 = vld [vmem:[#allocation6 + $0xd8] sm:$0xff]
      %v3331 = vld [vmem:[#allocation6 + $0xe0] sm:$0xff]
      %v3332 = vld [vmem:[#allocation6 + $0xe8] sm:$0xff]
      %v3333 = vpack.c.bf16 %v3306, %v3303
      %v3334 = vpack.c.bf16 %v3307, %v3304
      %v3335 = vpack.c.bf16 %v3308, %v3305
      %v3336 = vpack.c.bf16 %v3312, %v3309
      %v3337 = vpack.c.bf16 %v3313, %v3310
      %v3338 = vpack.c.bf16 %v3314, %v3311
      %v3339 = vpack.c.bf16 %v3318, %v3315
      %v3340 = vpack.c.bf16 %v3319, %v3316
      %v3341 = vpack.c.bf16 %v3320, %v3317
      %v3342 = vpack.c.bf16 %v3324, %v3321
      %v3343 = vpack.c.bf16 %v3325, %v3322
      %v3344 = vpack.c.bf16 %v3326, %v3323
      %v3345 = vpack.c.bf16 %v3330, %v3327
      %v3346 = vpack.c.bf16 %v3331, %v3328
      %v3347 = vpack.c.bf16 %v3332, %v3329
      %v3348 = vld [vmem:[%s3] sm:$0xf]
      %v3349 = vld [vmem:[%s3 + $0x4] sm:$0xf]
      %v3350 = vld [vmem:[%s3 + $0x8] sm:$0xf]
      %v3351 = vld [vmem:[%s3 + $0xc] sm:$0xf]
      %v3352 = vld [vmem:[%s3 + $0x10] sm:$0xf]
      %v3353 = vld [vmem:[%s3 + $0x14] sm:$0xf]
      %v3354 = vld [vmem:[%s3 + $0x18] sm:$0xf]
      %v3355 = vld [vmem:[%s3 + $0x1c] sm:$0xf]
      %v3356 = vld [vmem:[%s3 + $0x20] sm:$0xf]
      %v3357 = vld [vmem:[%s3 + $0x24] sm:$0xf]
      %v3358 = vld [vmem:[%s3 + $0x28] sm:$0xf]
      %v3359 = vld [vmem:[%s3 + $0x2c] sm:$0xf]
      %v3360 = vld [vmem:[%s3 + $0x30] sm:$0xf]
      %v3361 = vld [vmem:[%s3 + $0x34] sm:$0xf]
      %v3362 = vld [vmem:[%s3 + $0x38] sm:$0xf]
      %v3363 = vld [vmem:[%s3 + $0x3c] sm:$0xf]
      %v3364 = vld [vmem:[%s3 + $0x40] sm:$0xf]
      %v3365 = vld [vmem:[%s3 + $0x44] sm:$0xf]
      %v3366 = vld [vmem:[%s3 + $0x48] sm:$0xf]
      %v3367 = vld [vmem:[%s3 + $0x4c] sm:$0xf]
      %v3368 = vld [vmem:[%s3 + $0x50] sm:$0xf]
      %v3369 = vld [vmem:[%s3 + $0x54] sm:$0xf]
      %v3370 = vld [vmem:[%s3 + $0x58] sm:$0xf]
      %v3371 = vld [vmem:[%s3 + $0x5c] sm:$0xf]
      %v3372 = vld [vmem:[%s3 + $0x60] sm:$0xf]
      %v3373 = vld [vmem:[%s3 + $0x64] sm:$0xf]
      %v3374 = vld [vmem:[%s3 + $0x68] sm:$0xf]
      %v3375 = vld [vmem:[%s3 + $0x6c] sm:$0xf]
      %v3376 = vld [vmem:[%s3 + $0x70] sm:$0xf]
      %v3377 = vld [vmem:[%s3 + $0x74] sm:$0xf]
      %v3378 = vld [vmem:[%s3 + $0x78] sm:$0xf]
      %v3379 = vld [vmem:[%s3 + $0x7c] sm:$0xf]
      %v3380 = vld [vmem:[%s3 + $0x80] sm:$0xf]
      %v3381 = vld [vmem:[%s3 + $0x84] sm:$0xf]
      %v3382 = vld [vmem:[%s3 + $0x88] sm:$0xf]
      %v3383 = vld [vmem:[%s3 + $0x8c] sm:$0xf]
      %v3384 = vld [vmem:[%s3 + $0x90] sm:$0xf]
      %v3385 = vld [vmem:[%s3 + $0x94] sm:$0xf]
      %v3386 = vld [vmem:[%s3 + $0x98] sm:$0xf]
      %v3387 = vld [vmem:[%s3 + $0x9c] sm:$0xf]
      %v3388 = vld [vmem:[%s3 + $0xa0] sm:$0xf]
      %v3389 = vld [vmem:[%s3 + $0xa4] sm:$0xf]
      %v3390 = vld [vmem:[%s3 + $0xa8] sm:$0xf]
      %v3391 = vld [vmem:[%s3 + $0xac] sm:$0xf]
      %v3392 = vld [vmem:[%s3 + $0xb0] sm:$0xf]
      %v3393 = vld [vmem:[%s4] sm:$0x1]
      %v3395 = vlaneseq
      %v3396 = vshrl.u32 %v3395, 7
      %v3397 = vsub.s32 0, %v3396
      %v3398 = vrot.slane %v3393, %v3397
      %v3445 = vunpack.c.l.b16 %v3348
      %v3446 = vunpack.c.l.b16 %v3349
      %v3447 = vunpack.c.l.b16 %v3350
      %v3448 = vunpack.c.l.b16 %v3351
      %v3449 = vunpack.c.l.b16 %v3352
      %v3450 = vunpack.c.l.b16 %v3353
      %v3451 = vunpack.c.l.b16 %v3354
      %v3452 = vunpack.c.l.b16 %v3355
      %v3453 = vunpack.c.l.b16 %v3356
      %v3454 = vunpack.c.l.b16 %v3357
      %v3455 = vunpack.c.l.b16 %v3358
      %v3456 = vunpack.c.l.b16 %v3359
      %v3457 = vunpack.c.l.b16 %v3360
      %v3458 = vunpack.c.l.b16 %v3361
      %v3459 = vunpack.c.l.b16 %v3362
      %v3460 = vunpack.c.l.b16 %v3363
      %v3461 = vunpack.c.l.b16 %v3364
      %v3462 = vunpack.c.l.b16 %v3365
      %v3463 = vunpack.c.l.b16 %v3366
      %v3464 = vunpack.c.l.b16 %v3367
      %v3465 = vunpack.c.l.b16 %v3368
      %v3466 = vunpack.c.l.b16 %v3369
      %v3467 = vunpack.c.l.b16 %v3370
      %v3468 = vunpack.c.l.b16 %v3371
      %v3469 = vunpack.c.l.b16 %v3372
      %v3470 = vunpack.c.l.b16 %v3373
      %v3471 = vunpack.c.l.b16 %v3374
      %v3472 = vunpack.c.l.b16 %v3375
      %v3473 = vunpack.c.l.b16 %v3376
      %v3474 = vunpack.c.l.b16 %v3377
      %v3475 = vunpack.c.l.b16 %v3378
      %v3476 = vunpack.c.l.b16 %v3379
      %v3477 = vunpack.c.l.b16 %v3380
      %v3478 = vunpack.c.l.b16 %v3381
      %v3479 = vunpack.c.l.b16 %v3382
      %v3480 = vunpack.c.l.b16 %v3383
      %v3481 = vunpack.c.l.b16 %v3384
      %v3482 = vunpack.c.l.b16 %v3385
      %v3483 = vunpack.c.l.b16 %v3386
      %v3484 = vunpack.c.l.b16 %v3387
      %v3485 = vunpack.c.l.b16 %v3388
      %v3486 = vunpack.c.l.b16 %v3389
      %v3487 = vunpack.c.l.b16 %v3390
      %v3488 = vunpack.c.l.b16 %v3391
      %v3489 = vunpack.c.l.b16 %v3392
      %v3490 = vpack.c.b16 %v3446, %v3445
      %v3491 = vpack.c.b16 %v3448, %v3447
      %v3492 = vpack.c.b16 %v3450, %v3449
      %v3493 = vpack.c.b16 %v3452, %v3451
      %v3494 = vpack.c.b16 %v3454, %v3453
      %v3495 = vpack.c.b16 %v3456, %v3455
      %v3496 = vpack.c.b16 %v3458, %v3457
      %v3497 = vpack.c.b16 %v3460, %v3459
      %v3498 = vpack.c.b16 %v3462, %v3461
      %v3499 = vpack.c.b16 %v3464, %v3463
      %v3500 = vpack.c.b16 %v3466, %v3465
      %v3501 = vpack.c.b16 %v3468, %v3467
      %v3502 = vpack.c.b16 %v3470, %v3469
      %v3503 = vpack.c.b16 %v3472, %v3471
      %v3504 = vpack.c.b16 %v3474, %v3473
      %v3505 = vpack.c.b16 %v3476, %v3475
      %v3506 = vpack.c.b16 %v3478, %v3477
      %v3507 = vpack.c.b16 %v3480, %v3479
      %v3508 = vpack.c.b16 %v3482, %v3481
      %v3509 = vpack.c.b16 %v3484, %v3483
      %v3510 = vpack.c.b16 %v3486, %v3485
      %v3511 = vpack.c.b16 %v3488, %v3487
      %v3512 = vpack.c.b16 %v3489, %v3489
      %vm3535 = vcmask 850944
      %v3537 = vsel %vm3535, %v3335, 0
      %v3540 = vsel %vm3535, %v3338, 0
      %v3543 = vsel %vm3535, %v3341, 0
      %v3546 = vsel %vm3535, %v3344, 0
      %v3549 = vsel %vm3535, %v3347, 0
      %vm3551 = vcmask 1043456
      %v3553 = vsel %vm3551, %v3512, 0
      %3555 = vmatprep.subr.bf16.mxu0 0
      %3556 = vmatpush1.bf16.msra.mxu0 %v3490
      %3557 = vmatprep.subr.bf16.mxu0 0
      %3558 = vmatpush1.bf16.msra.mxu0 %v3491
      %3559 = vmatprep.subr.bf16.mxu0 0
      %3560 = vmatpush1.bf16.msra.mxu0 %v3492
      %3561 = vmatprep.subr.bf16.mxu0 0
      %3562 = vmatpush1.bf16.msra.mxu0 %v3493
      %3563 = vmatprep.subr.bf16.mxu0 0
      %3564 = vmatpush1.bf16.msra.mxu0 %v3494
      %3565 = vmatprep.subr.bf16.mxu0 0
      %3566 = vmatpush1.bf16.msra.mxu0 %v3495
      %3567 = vmatprep.subr.bf16.mxu0 0
      %3568 = vmatpush1.bf16.msra.mxu0 %v3496
      %3569 = vmatprep.subr.bf16.mxu0 0
      %3570 = vmatpush1.bf16.msra.mxu0 %v3497
      %3571 = vmatprep.subr.bf16.mxu0 0
      %3572 = vmatpush1.bf16.msra.mxu0 %v3498
      %3573 = vmatprep.subr.bf16.mxu0 0
      %3574 = vmatpush1.bf16.msra.mxu0 %v3499
      %3575 = vmatprep.subr.bf16.mxu0 0
      %3576 = vmatpush1.bf16.msra.mxu0 %v3500
      %3577 = vmatprep.subr.bf16.mxu0 0
      %3578 = vmatpush1.bf16.msra.mxu0 %v3501
      %3579 = vmatprep.subr.bf16.mxu0 0
      %3580 = vmatpush1.bf16.msra.mxu0 %v3502
      %3581 = vmatprep.subr.bf16.mxu0 0
      %3582 = vmatpush1.bf16.msra.mxu0 %v3503
      %3583 = vmatprep.subr.bf16.mxu0 0
      %3584 = vmatpush1.bf16.msra.mxu0 %v3504
      %3585 = vmatprep.subr.bf16.mxu0 0
      %3586 = vmatpush1.bf16.msra.mxu0 %v3505
      %3587 = vmatprep.mubr.bf16.mxu0 %v3334
      %3588 = vmatmul.mubr.bf16.gmra.mrb[0].mxu0 %v3333
      %v3589 = vpop.f32.mrb[0].mxu0
      %v3590 = vadd.f32 %v3398, %v3589
      %v3591 = vpop.f32.mrb[0].mxu0
      %v3592 = vpop.f32.mrb[0].mxu0
      %v3593 = vadd.f32 %v3398, %v3592
      %v3594 = vpop.f32.mrb[0].mxu0
      %3595 = vmatprep.mubr.bf16.mxu0 %v3337
      %3596 = vmatmul.mubr.bf16.gmra.mrb[0].mxu0 %v3336
      %v3597 = vpop.f32.mrb[0].mxu0
      %v3598 = vadd.f32 %v3398, %v3597
      %v3599 = vpop.f32.mrb[0].mxu0
      %v3600 = vpop.f32.mrb[0].mxu0
      %v3601 = vadd.f32 %v3398, %v3600
      %v3602 = vpop.f32.mrb[0].mxu0
      %3603 = vmatprep.mubr.bf16.mxu0 %v3340
      %3604 = vmatmul.mubr.bf16.gmra.mrb[0].mxu0 %v3339
      %v3605 = vpop.f32.mrb[0].mxu0
      %v3606 = vadd.f32 %v3398, %v3605
      %v3607 = vpop.f32.mrb[0].mxu0
      %v3608 = vpop.f32.mrb[0].mxu0
      %v3609 = vadd.f32 %v3398, %v3608
      %v3610 = vpop.f32.mrb[0].mxu0
      %3611 = vmatprep.mubr.bf16.mxu0 %v3343
      %3612 = vmatmul.mubr.bf16.gmra.mrb[0].mxu0 %v3342
      %v3613 = vpop.f32.mrb[0].mxu0
      %v3614 = vadd.f32 %v3398, %v3613
      %v3615 = vpop.f32.mrb[0].mxu0
      %v3616 = vpop.f32.mrb[0].mxu0
      %v3617 = vadd.f32 %v3398, %v3616
      %v3618 = vpop.f32.mrb[0].mxu0
      %3619 = vmatprep.mubr.bf16.mxu0 %v3346
      %3620 = vmatmul.mubr.bf16.gmra.mrb[0].mxu0 %v3345
      %v3621 = vpop.f32.mrb[0].mxu0
      %v3622 = vadd.f32 %v3398, %v3621
      %v3623 = vpop.f32.mrb[0].mxu0
      %v3624 = vpop.f32.mrb[0].mxu0
      %v3625 = vadd.f32 %v3398, %v3624
      %v3626 = vpop.f32.mrb[0].mxu0
      %3627 = vdwg.mxu0
      %3628 = vmatprep.subr.bf16.mxu0 0
      %3629 = vmatpush1.bf16.msra.mxu0 %v3506
      %3630 = vmatprep.subr.bf16.mxu0 0
      %3631 = vmatpush1.bf16.msra.mxu0 %v3507
      %3632 = vmatprep.subr.bf16.mxu0 0
      %3633 = vmatpush1.bf16.msra.mxu0 %v3508
      %3634 = vmatprep.subr.bf16.mxu0 0
      %3635 = vmatpush1.bf16.msra.mxu0 %v3509
      %3636 = vmatprep.subr.bf16.mxu0 0
      %3637 = vmatpush1.bf16.msra.mxu0 %v3510
      %3638 = vmatprep.subr.bf16.mxu0 0
      %3639 = vmatpush1.bf16.msra.mxu0 %v3511
      %3640 = vmatprep.subr.bf16.mxu0 0
      %3641 = vmatpush1.bf16.msra.mxu0 %v3553
      %3642 = vmatprep.subr.bf16.mxu0 0
      %3643 = vmatpush1.bf16.msra.mxu0 0
      %3644 = vmatprep.subr.bf16.mxu0 0
      %3645 = vmatpush1.bf16.msra.mxu0 0
      %3646 = vmatprep.subr.bf16.mxu0 0
      %3647 = vmatpush1.bf16.msra.mxu0 0
      %3648 = vmatprep.subr.bf16.mxu0 0
      %3649 = vmatpush1.bf16.msra.mxu0 0
      %3650 = vmatprep.subr.bf16.mxu0 0
      %3651 = vmatpush1.bf16.msra.mxu0 0
      %3652 = vmatprep.subr.bf16.mxu0 0
      %3653 = vmatpush1.bf16.msra.mxu0 0
      %3654 = vmatprep.subr.bf16.mxu0 0
      %3655 = vmatpush1.bf16.msra.mxu0 0
      %3656 = vmatprep.subr.bf16.mxu0 0
      %3657 = vmatpush1.bf16.msra.mxu0 0
      %3658 = vmatprep.subr.bf16.mxu0 0
      %3659 = vmatpush1.bf16.msra.mxu0 0
      %3660 = vmatprep.mubr.bf16.mxu0 0
      %3661 = vmatmul.mubr.bf16.gmra.mrb[0].mxu0 %v3537
      %v3662 = vpop.f32.mrb[0].mxu0
      %v3663 = vadd.f32 %v3590, %v3662
      %v3664 = vpop.f32.mrb[0].mxu0
      %v3665 = vpop.f32.mrb[0].mxu0
      %v3666 = vadd.f32 %v3593, %v3665
      %v3667 = vpop.f32.mrb[0].mxu0
      %3668 = vmatprep.mubr.bf16.mxu0 0
      %3669 = vmatmul.mubr.bf16.gmra.mrb[0].mxu0 %v3540
      %v3670 = vpop.f32.mrb[0].mxu0
      %v3671 = vadd.f32 %v3598, %v3670
      %v3672 = vpop.f32.mrb[0].mxu0
      %v3673 = vpop.f32.mrb[0].mxu0
      %v3674 = vadd.f32 %v3601, %v3673
      %v3675 = vpop.f32.mrb[0].mxu0
      %3676 = vmatprep.mubr.bf16.mxu0 0
      %3677 = vmatmul.mubr.bf16.gmra.mrb[0].mxu0 %v3543
      %v3678 = vpop.f32.mrb[0].mxu0
      %v3679 = vadd.f32 %v3606, %v3678
      %v3680 = vpop.f32.mrb[0].mxu0
      %v3681 = vpop.f32.mrb[0].mxu0
      %v3682 = vadd.f32 %v3609, %v3681
      %v3683 = vpop.f32.mrb[0].mxu0
      %3684 = vmatprep.mubr.bf16.mxu0 0
      %3685 = vmatmul.mubr.bf16.gmra.mrb[0].mxu0 %v3546
      %v3686 = vpop.f32.mrb[0].mxu0
      %v3687 = vadd.f32 %v3614, %v3686
      %v3688 = vpop.f32.mrb[0].mxu0
      %v3689 = vpop.f32.mrb[0].mxu0
      %v3690 = vadd.f32 %v3617, %v3689
      %v3691 = vpop.f32.mrb[0].mxu0
      %3692 = vmatprep.mubr.bf16.mxu0 0
      %3693 = vmatmul.mubr.bf16.gmra.mrb[0].mxu0 %v3549
      %v3694 = vpop.f32.mrb[0].mxu0
      %v3695 = vadd.f32 %v3622, %v3694
      %v3696 = vpop.f32.mrb[0].mxu0
      %v3697 = vpop.f32.mrb[0].mxu0
      %v3698 = vadd.f32 %v3625, %v3697
      %v3699 = vpop.f32.mrb[0].mxu0
      %3700 = vdwg.mxu0
      %v3701 = vmax.f32 %v3663, 0.0
      %v3702 = vmax.f32 %v3666, 0.0
      %v3703 = vmax.f32 %v3671, 0.0
      %v3704 = vmax.f32 %v3674, 0.0
      %v3705 = vmax.f32 %v3679, 0.0
      %v3706 = vmax.f32 %v3682, 0.0
      %v3707 = vmax.f32 %v3687, 0.0
      %v3708 = vmax.f32 %v3690, 0.0
      %v3709 = vmax.f32 %v3695, 0.0
      %v3710 = vmax.f32 %v3698, 0.0
      %vm3722 = vcmask 1044480
      %v3723 = vrot.slane %v296, 3
      %v3724 = vrot.slane %v303, 3
      %v3725 = vsel %vm3722, %v3723, %v3724
      %v3726 = vrot.slane %v310, 3
      %v3727 = vsel %vm3722, %v3724, %v3726
      %v3728 = vrot.slane %v317, 3
      %v3729 = vsel %vm3722, %v3726, %v3728
      %v3730 = vrot.slane %v324, 3
      %v3731 = vsel %vm3722, %v3728, %v3730
      %v3732 = vrot.slane %v331, 3
      %v3733 = vsel %vm3722, %v3730, %v3732
      %v3734 = vrot.slane %v338, 3
      %v3735 = vsel %vm3722, %v3732, %v3734
      %v3736 = vrot.slane %v345, 3
      %v3737 = vsel %vm3722, %v3734, %v3736
      %v3738 = vrot.slane %v352, 3
      %v3739 = vsel %vm3722, %v3736, %v3738
      %v3740 = vrot.slane %v359, 3
      %v3741 = vsel %vm3722, %v3738, %v3740
      %v3742 = vrot.slane %v366, 3
      %v3743 = vsel %vm3722, %v3740, %v3742
      %v3754 = vadd.f32 %v3701, %v3725
      %v3755 = vadd.f32 %v3702, %v3727
      %v3756 = vadd.f32 %v3703, %v3729
      %v3757 = vadd.f32 %v3704, %v3731
      %v3758 = vadd.f32 %v3705, %v3733
      %v3759 = vadd.f32 %v3706, %v3735
      %v3760 = vadd.f32 %v3707, %v3737
      %v3761 = vadd.f32 %v3708, %v3739
      %v3762 = vadd.f32 %v3709, %v3741
      %v3763 = vadd.f32 %v3710, %v3743
      %3764 = vst.msk [vmem:[%s224] sm:$0xff] %vm282, %v3754
      %3765 = vst.msk [vmem:[%s224 + $0x8] sm:$0xff] %vm282, %v3755
      %3766 = vst.msk [vmem:[%s224 + $0x10] sm:$0xff] %vm282, %v3756
      %3767 = vst.msk [vmem:[%s224 + $0x18] sm:$0xff] %vm282, %v3757
      %3768 = vst.msk [vmem:[%s224 + $0x20] sm:$0xff] %vm282, %v3758
      %3769 = vst.msk [vmem:[%s224 + $0x28] sm:$0xff] %vm282, %v3759
      %3770 = vst.msk [vmem:[%s224 + $0x30] sm:$0xff] %vm282, %v3760
      %3771 = vst.msk [vmem:[%s224 + $0x38] sm:$0xff] %vm282, %v3761
      %3772 = vst.msk [vmem:[%s224 + $0x40] sm:$0xff] %vm282, %v3762
      %3773 = vst.msk [vmem:[%s224 + $0x48] sm:$0xff] %vm282, %v3763
      %p3774 = scmp.lt.s32.totalorder %s16, 1
      %s3775 = scalar_select %p3774, %s16, 1
      %s3776 = smul.addr %s3775, 10
      %s3777 = smul.addr %s3776, 8
      %s3778 = scalar_lea.vmem %s5, %s3777
      // Predicated region
      $region41: #{down_block_forward.1} parent=39 // pred_check
        %p3779 = pneg %p144
      $region42: #{down_block_forward.1} parent=39 // pred_check_branch
        %3781 = sbr.rel (%p3779) target = $region44
      $region43: #{down_block_forward.1} parent=39 // pred_region
        _
      $region44: #{down_block_forward.1} parent=39 // pred_fallthru
        _
    $region40: #{down_block_forward.1} parent=5 // pred_fallthru
      _
    %p3782 = scmp.le.s32.totalorder 2, %s11
    // Predicated region
    $region45: #{down_block_forward.1} parent=5 // pred_check
      %p3783 = pneg %p3782
    $region46: #{down_block_forward.1} parent=5 // pred_check_branch
      %3785 = sbr.rel (%p3783) target = $region48
    $region47: #{down_block_forward.1} parent=5 // pred_region
      %s3786 = ssub.s32 %s11, 2
      // Predicated region
      $region49: #{down_block_forward.1} parent=47 // pred_check
        %p3787 = pneg %p150
      $region50: #{down_block_forward.1} parent=47 // pred_check_branch
        %3789 = sbr.rel (%p3787) target = $region52
      $region51: #{down_block_forward.1} parent=47 // pred_region
        %p3790 = scmp.lt.s32.totalorder %s17, 1
        %s3791 = scalar_select %p3790, %s17, 1
        %s3792 = smul.addr %s3791, 10
        %s3793 = smul.addr %s3792, 8
        %s3794 = scalar_lea.vmem %s5, %s3793
      $region52: #{down_block_forward.1} parent=47 // pred_fallthru
        _
    $region48: #{down_block_forward.1} parent=5 // pred_fallthru
      _
  $region6: #{down_block_forward.1} parent=0 // loop_footer
    %s15 = sadd.s32 1, %s11
  $region7: #{down_block_forward.1} parent=0 // loop_footer_branch
    %10 = sbr.rel target = $region3
  $region8: #{down_block_forward.1} parent=0 // loop_exit
    _

</llo_original>
